<compile_context>
chip_gen: v7x
topology: tpu7x:2x2x1
jax: 0.10.0
libtpu: 0.0.40
codegen_flags: <defaults>
</compile_context>

<pallas_src>
import jax
import jax.numpy as jnp
from jax.experimental import pallas as pl
from jax.experimental.pallas import tpu as pltpu

LANES = 128  # lane width; every channel-ish dim is padded to this once at init


# --------------------------------------------------------------------------
# Pallas kernels
# --------------------------------------------------------------------------
def _conv_relu_pool_kernel(p00_ref, p01_ref, p10_ref, p11_ref, w_ref, b_ref, o_ref):
    """Fused conv (im2col matmul) + bias + ReLU + 2x2 max-pool epilogue.

    The four patch blocks are the im2col rows of the conv evaluated at the
    four 2x2-pool offsets of the stride-2 (pooled) output grid, so
        pool(relu(conv + b)) == relu(max_k(patches_k @ W) + b).
    """
    w = w_ref[...]

    def mm(p_ref):
        return jnp.dot(p_ref[...], w, preferred_element_type=jnp.float32)

    m = jnp.maximum(jnp.maximum(mm(p00_ref), mm(p01_ref)),
                    jnp.maximum(mm(p10_ref), mm(p11_ref)))
    o_ref[...] = jnp.maximum(m + b_ref[...], 0.0)


def _fc_stack_kernel(x_ref, w1_ref, b1_ref, w2_ref, b2_ref, w3_ref, b3_ref, o_ref):
    """fc1+ReLU -> fc2+ReLU -> fc3 chained in one kernel (weights VMEM-resident)."""
    h = jnp.dot(x_ref[...], w1_ref[...], preferred_element_type=jnp.float32)
    h = jnp.maximum(h + b1_ref[...], 0.0)
    h = jnp.dot(h, w2_ref[...], preferred_element_type=jnp.float32)
    h = jnp.maximum(h + b2_ref[...], 0.0)
    h = jnp.dot(h, w3_ref[...], preferred_element_type=jnp.float32)
    o_ref[...] = h + b3_ref[...]


# --------------------------------------------------------------------------
# Wrappers
# --------------------------------------------------------------------------
def _row_tiling(m, max_tile):
    """Pad the matmul row count and pick a row tile (both multiples of 8)."""
    mp = -(-m // 8) * 8
    if mp <= max_tile:
        return mp, mp
    mp = -(-m // max_tile) * max_tile
    return mp, max_tile


def _pooled_patches(x_nhwc, kh, kw):
    """im2col at the four 2x2-pool offsets of the (stride-1) conv output grid.

    x_nhwc: (N, H, W, C).  Returns ([4 x (N*PH*PW, C*kh*kw)], (N, PH, PW)).
    Rows ordered (N, PH, PW); columns ordered (C, kh, kw), matching the OIHW
    weight flatten.  PH = (H-kh+1)//2, PW = (W-kw+1)//2.
    """
    patches = []
    for di in (0, 1):
        for dj in (0, 1):
            p = jax.lax.conv_general_dilated_patches(
                x_nhwc[:, di:, dj:, :],
                filter_shape=(kh, kw),
                window_strides=(2, 2),
                padding="VALID",
                dimension_numbers=("NHWC", "HWIO", "NHWC"),
                precision=jax.lax.Precision.HIGHEST,  # exact, gather-style extract
            )
            patches.append(p)
    n, ph, pw, ckk = patches[0].shape
    return [p.reshape(n * ph * pw, ckk) for p in patches], (n, ph, pw)


def pallas_conv_relu_pool(x_nhwc, w_mat, b_row, kh, kw, oc):
    """x_nhwc: (N,H,W,C); w_mat: (C*kh*kw, OCp); b_row: (1, OCp).

    Returns relu(maxpool2x2(conv(x) + b)) in NHWC layout: (N, PH, PW, oc).
    """
    patches, (n, ph, pw) = _pooled_patches(x_nhwc, kh, kw)
    m = n * ph * pw
    ckk = patches[0].shape[1]
    ocp = w_mat.shape[1]
    mp, tile = _row_tiling(m, max_tile=256)
    if mp != m:
        patches = [jnp.pad(p, ((0, mp - m), (0, 0))) for p in patches]

    out = pl.pallas_call(
        _conv_relu_pool_kernel,
        out_shape=jax.ShapeDtypeStruct((mp, ocp), jnp.float32),
        grid=(mp // tile,),
        in_specs=[pl.BlockSpec((tile, ckk), lambda i: (i, 0)) for _ in range(4)]
        + [
            pl.BlockSpec((ckk, ocp), lambda i: (0, 0)),
            pl.BlockSpec((1, ocp), lambda i: (0, 0)),
        ],
        out_specs=pl.BlockSpec((tile, ocp), lambda i: (i, 0)),
        compiler_params=pltpu.CompilerParams(dimension_semantics=("parallel",)),
    )(*patches, w_mat, b_row)
    return out[:m, :oc].reshape(n, ph, pw, oc)


def pallas_fc_stack(x, p):
    """x: (N, 400) NHWC-flattened activations.  Returns logits (N, 10)."""
    m, k = x.shape
    mp, tile = _row_tiling(m, max_tile=128)
    xp = jnp.pad(x, ((0, mp - m), (0, 0))) if mp != m else x

    out = pl.pallas_call(
        _fc_stack_kernel,
        out_shape=jax.ShapeDtypeStruct((mp, LANES), jnp.float32),
        grid=(mp // tile,),
        in_specs=[
            pl.BlockSpec((tile, k), lambda i: (i, 0)),
            pl.BlockSpec((k, LANES), lambda i: (0, 0)),
            pl.BlockSpec((1, LANES), lambda i: (0, 0)),
            pl.BlockSpec((LANES, LANES), lambda i: (0, 0)),
            pl.BlockSpec((1, LANES), lambda i: (0, 0)),
            pl.BlockSpec((LANES, LANES), lambda i: (0, 0)),
            pl.BlockSpec((1, LANES), lambda i: (0, 0)),
        ],
        out_specs=pl.BlockSpec((tile, LANES), lambda i: (i, 0)),
        compiler_params=pltpu.CompilerParams(dimension_semantics=("parallel",)),
    )(xp, p["fc1_w"], p["fc1_b"], p["fc2_w"], p["fc2_b"], p["fc3_w"], p["fc3_b"])
    return out[:m, :10]


# --------------------------------------------------------------------------
# Net: parameters, one-time weight prep, forward pass
# --------------------------------------------------------------------------
def init_params(key):
    """PyTorch-layout parameters (nn.Conv2d / nn.Linear style init)."""
    def uniform(k, shape, fan_in):
        bound = 1.0 / float(fan_in) ** 0.5
        return jax.random.uniform(k, shape, jnp.float32, -bound, bound)

    ks = jax.random.split(key, 10)
    return {
        "conv1_w": uniform(ks[0], (6, 3, 5, 5), 3 * 5 * 5),
        "conv1_b": uniform(ks[1], (6,), 3 * 5 * 5),
        "conv2_w": uniform(ks[2], (16, 6, 5, 5), 6 * 5 * 5),
        "conv2_b": uniform(ks[3], (16,), 6 * 5 * 5),
        "fc1_w": uniform(ks[4], (120, 16 * 5 * 5), 16 * 5 * 5),
        "fc1_b": uniform(ks[5], (120,), 16 * 5 * 5),
        "fc2_w": uniform(ks[6], (84, 120), 120),
        "fc2_b": uniform(ks[7], (84,), 120),
        "fc3_w": uniform(ks[8], (10, 84), 84),
        "fc3_b": uniform(ks[9], (10,), 84),
    }


def prepare_params(params):
    """One-time weight prep: reshape/transpose/zero-pad to lane-dense layouts."""
    def pad_to(a, rows, cols):
        r, c = a.shape
        return jnp.pad(a, ((0, rows - r), (0, cols - c)))

    prep = {}
    # Conv weights: OIHW -> (C*KH*KW, OC), OC zero-padded to 128 lanes.
    for name in ("conv1", "conv2"):
        w = params[name + "_w"]
        wm = w.reshape(w.shape[0], -1).T                       # (C*KH*KW, OC)
        prep[name + "_w"] = pad_to(wm, wm.shape[0], LANES)
        prep[name + "_b"] = pad_to(params[name + "_b"].reshape(1, -1), 1, LANES)
    # fc1: permute input columns from the NCHW flatten (c,h,w) used by PyTorch
    # to the NHWC flatten (h,w,c) produced by the Pallas conv pipeline.
    w1 = params["fc1_w"].reshape(120, 16, 5, 5).transpose(0, 2, 3, 1).reshape(120, 400)
    prep["fc1_w"] = pad_to(w1.T, 400, LANES)                   # (400, 128)
    prep["fc1_b"] = pad_to(params["fc1_b"].reshape(1, -1), 1, LANES)
    prep["fc2_w"] = pad_to(params["fc2_w"].T, LANES, LANES)    # (128, 128), zero pads
    prep["fc2_b"] = pad_to(params["fc2_b"].reshape(1, -1), 1, LANES)
    prep["fc3_w"] = pad_to(params["fc3_w"].T, LANES, LANES)
    prep["fc3_b"] = pad_to(params["fc3_b"].reshape(1, -1), 1, LANES)
    return prep


def net_forward(prep, x_nchw):
    x = jnp.transpose(x_nchw, (0, 2, 3, 1))                    # NHWC, once
    x = pallas_conv_relu_pool(x, prep["conv1_w"], prep["conv1_b"], 5, 5, 6)
    x = pallas_conv_relu_pool(x, prep["conv2_w"], prep["conv2_b"], 5, 5, 16)
    x = x.reshape(x.shape[0], -1)                              # (N, 5*5*16), (h,w,c) order
    return pallas_fc_stack(x, prep)


def reference_forward(params, x):
    def conv(t, w, b):
        y = jax.lax.conv_general_dilated(
            t, w, (1, 1), "VALID",
            dimension_numbers=("NCHW", "OIHW", "NCHW"),
            precision=jax.lax.Precision.HIGHEST,
        )
        return jax.nn.relu(y + b.reshape(1, -1, 1, 1))

    def pool(t):
        return jax.lax.reduce_window(
            t, -jnp.inf, jax.lax.max, (1, 1, 2, 2), (1, 1, 2, 2), "VALID"
        )

    def dense(t, w, b):
        return jnp.dot(t, w.T, precision=jax.lax.Precision.HIGHEST) + b

    x = pool(conv(x, params["conv1_w"], params["conv1_b"]))
    x = pool(conv(x, params["conv2_w"], params["conv2_b"]))
    x = x.reshape(-1, 16 * 5 * 5)
    x = jax.nn.relu(dense(x, params["fc1_w"], params["fc1_b"]))
    x = jax.nn.relu(dense(x, params["fc2_w"], params["fc2_b"]))
    return dense(x, params["fc3_w"], params["fc3_b"])


if __name__ == "__main__":
    key = jax.random.PRNGKey(0)
    k_params, k_x = jax.random.split(key)
    params = init_params(k_params)
    prep = prepare_params(params)
    # Input must be (N, 3, 32, 32) for the 16*5*5 flatten to hold.
    x = jax.random.normal(k_x, (2, 3, 32, 32), dtype=jnp.float32)

    fwd = jax.jit(net_forward)
    out = jax.block_until_ready(fwd(prep, x))
    ref = jax.block_until_ready(reference_forward(params, x))

    assert out.shape == (2, 10), out.shape
    max_err = float(jnp.max(jnp.abs(out - ref)))
    # Default MXU precision (bf16-pass) vs HIGHEST-precision reference.
    assert jnp.allclose(out, ref, rtol=2e-2, atol=2e-2), max_err
    print("KERNEL_OK")
</pallas_src>

<mosaic_0001>
module attributes {stable_mosaic.version = 11 : i64} {
  func.func @_conv_relu_pool_kernel(%arg0: i32, %arg1: memref<256x75xf32, #tpu.memory_space<vmem>>, %arg2: memref<256x75xf32, #tpu.memory_space<vmem>>, %arg3: memref<256x75xf32, #tpu.memory_space<vmem>>, %arg4: memref<256x75xf32, #tpu.memory_space<vmem>>, %arg5: memref<75x128xf32, #tpu.memory_space<vmem>>, %arg6: memref<1x128xf32, #tpu.memory_space<vmem>>, %arg7: memref<256x128xf32, #tpu.memory_space<vmem>>) attributes {dimension_semantics = [#tpu.dimension_semantics<parallel>], iteration_bounds = array<i64: 2>, scalar_prefetch = 0 : i64, scratch_operands = 0 : i64, tpu.core_type = #tpu.core_type<tc>, window_params = [{transform_indices = @transform_0, window_bounds = array<i64: 256, 75>}, {transform_indices = @transform_1, window_bounds = array<i64: 256, 75>}, {transform_indices = @transform_2, window_bounds = array<i64: 256, 75>}, {transform_indices = @transform_3, window_bounds = array<i64: 256, 75>}, {pipeline_mode = #tpu.pipeline_mode<synchronous>, transform_indices = @transform_4, window_bounds = array<i64: 75, 128>}, {pipeline_mode = #tpu.pipeline_mode<synchronous>, transform_indices = @transform_5, window_bounds = array<i64: 1, 128>}, {transform_indices = @transform_6, window_bounds = array<i64: 256, 128>}]} {
    %c0 = arith.constant 0 : index
    %c0_0 = arith.constant 0 : index
    %0 = vector.load %arg5[%c0, %c0_0] : memref<75x128xf32, #tpu.memory_space<vmem>>, vector<75x128xf32>
    %c0_1 = arith.constant 0 : index
    %c0_2 = arith.constant 0 : index
    %1 = vector.load %arg1[%c0_1, %c0_2] : memref<256x75xf32, #tpu.memory_space<vmem>>, vector<256x75xf32>
    %cst = arith.constant dense<0.000000e+00> : vector<256x128xf32>
    %2 = tpu.matmul %1, %0, %cst {dimension_numbers = #tpu.dot_dimension_numbers<[1], [0], [0], [1], [0, 0, 1, 1], [], []>} : vector<256x75xf32>, vector<75x128xf32>, vector<256x128xf32> -> vector<256x128xf32>
    %c0_3 = arith.constant 0 : index
    %c0_4 = arith.constant 0 : index
    %3 = vector.load %arg2[%c0_3, %c0_4] : memref<256x75xf32, #tpu.memory_space<vmem>>, vector<256x75xf32>
    %cst_5 = arith.constant dense<0.000000e+00> : vector<256x128xf32>
    %4 = tpu.matmul %3, %0, %cst_5 {dimension_numbers = #tpu.dot_dimension_numbers<[1], [0], [0], [1], [0, 0, 1, 1], [], []>} : vector<256x75xf32>, vector<75x128xf32>, vector<256x128xf32> -> vector<256x128xf32>
    %5 = arith.maximumf %2, %4 : vector<256x128xf32>
    %c0_6 = arith.constant 0 : index
    %c0_7 = arith.constant 0 : index
    %6 = vector.load %arg3[%c0_6, %c0_7] : memref<256x75xf32, #tpu.memory_space<vmem>>, vector<256x75xf32>
    %cst_8 = arith.constant dense<0.000000e+00> : vector<256x128xf32>
    %7 = tpu.matmul %6, %0, %cst_8 {dimension_numbers = #tpu.dot_dimension_numbers<[1], [0], [0], [1], [0, 0, 1, 1], [], []>} : vector<256x75xf32>, vector<75x128xf32>, vector<256x128xf32> -> vector<256x128xf32>
    %c0_9 = arith.constant 0 : index
    %c0_10 = arith.constant 0 : index
    %8 = vector.load %arg4[%c0_9, %c0_10] : memref<256x75xf32, #tpu.memory_space<vmem>>, vector<256x75xf32>
    %cst_11 = arith.constant dense<0.000000e+00> : vector<256x128xf32>
    %9 = tpu.matmul %8, %0, %cst_11 {dimension_numbers = #tpu.dot_dimension_numbers<[1], [0], [0], [1], [0, 0, 1, 1], [], []>} : vector<256x75xf32>, vector<75x128xf32>, vector<256x128xf32> -> vector<256x128xf32>
    %10 = arith.maximumf %7, %9 : vector<256x128xf32>
    %11 = arith.maximumf %5, %10 : vector<256x128xf32>
    %c0_12 = arith.constant 0 : index
    %c0_13 = arith.constant 0 : index
    %12 = vector.load %arg6[%c0_12, %c0_13] : memref<1x128xf32, #tpu.memory_space<vmem>>, vector<1x128xf32>
    %13 = vector.broadcast %12 : vector<1x128xf32> to vector<256x128xf32>
    %14 = arith.addf %11, %13 : vector<256x128xf32>
    %cst_14 = arith.constant 0.000000e+00 : f32
    %15 = vector.broadcast %cst_14 : f32 to vector<256x128xf32>
    %16 = arith.maximumf %14, %15 : vector<256x128xf32>
    %c0_15 = arith.constant 0 : index
    %c0_16 = arith.constant 0 : index
    %17 = vector.load %arg7[%c0_15, %c0_16] : memref<256x128xf32, #tpu.memory_space<vmem>>, vector<256x128xf32>
    tpu.vector_store %arg7[%c0_15, %c0_16], %16 {strides = array<i32>} : memref<256x128xf32, #tpu.memory_space<vmem>>, vector<256x128xf32>,
    return
  }
  func.func @transform_0(%arg0: i32) -> (i32, i32) {
    %c0_i32 = arith.constant 0 : i32
    %c0_i32_0 = arith.constant 0 : i32
    return %arg0, %c0_i32 : i32, i32
  }
  func.func @transform_1(%arg0: i32) -> (i32, i32) {
    %c0_i32 = arith.constant 0 : i32
    %c0_i32_0 = arith.constant 0 : i32
    return %arg0, %c0_i32 : i32, i32
  }
  func.func @transform_2(%arg0: i32) -> (i32, i32) {
    %c0_i32 = arith.constant 0 : i32
    %c0_i32_0 = arith.constant 0 : i32
    return %arg0, %c0_i32 : i32, i32
  }
  func.func @transform_3(%arg0: i32) -> (i32, i32) {
    %c0_i32 = arith.constant 0 : i32
    %c0_i32_0 = arith.constant 0 : i32
    return %arg0, %c0_i32 : i32, i32
  }
  func.func @transform_4(%arg0: i32) -> (i32, i32) {
    %c0_i32 = arith.constant 0 : i32
    %c0_i32_0 = arith.constant 0 : i32
    %c0_i32_1 = arith.constant 0 : i32
    return %c0_i32, %c0_i32_0 : i32, i32
  }
  func.func @transform_5(%arg0: i32) -> (i32, i32) {
    %c0_i32 = arith.constant 0 : i32
    %c0_i32_0 = arith.constant 0 : i32
    %c0_i32_1 = arith.constant 0 : i32
    return %c0_i32, %c0_i32_0 : i32, i32
  }
  func.func @transform_6(%arg0: i32) -> (i32, i32) {
    %c0_i32 = arith.constant 0 : i32
    %c0_i32_0 = arith.constant 0 : i32
    return %arg0, %c0_i32 : i32, i32
  }
}

module attributes {stable_mosaic.version = 11 : i64} {
  func.func @_conv_relu_pool_kernel(%arg0: i32, %arg1: memref<56x150xf32, #tpu.memory_space<vmem>>, %arg2: memref<56x150xf32, #tpu.memory_space<vmem>>, %arg3: memref<56x150xf32, #tpu.memory_space<vmem>>, %arg4: memref<56x150xf32, #tpu.memory_space<vmem>>, %arg5: memref<150x128xf32, #tpu.memory_space<vmem>>, %arg6: memref<1x128xf32, #tpu.memory_space<vmem>>, %arg7: memref<56x128xf32, #tpu.memory_space<vmem>>) attributes {dimension_semantics = [#tpu.dimension_semantics<parallel>], iteration_bounds = array<i64: 1>, scalar_prefetch = 0 : i64, scratch_operands = 0 : i64, tpu.core_type = #tpu.core_type<tc>, window_params = [{transform_indices = @transform_0, window_bounds = array<i64: 56, 150>}, {transform_indices = @transform_1, window_bounds = array<i64: 56, 150>}, {transform_indices = @transform_2, window_bounds = array<i64: 56, 150>}, {transform_indices = @transform_3, window_bounds = array<i64: 56, 150>}, {pipeline_mode = #tpu.pipeline_mode<synchronous>, transform_indices = @transform_4, window_bounds = array<i64: 150, 128>}, {pipeline_mode = #tpu.pipeline_mode<synchronous>, transform_indices = @transform_5, window_bounds = array<i64: 1, 128>}, {transform_indices = @transform_6, window_bounds = array<i64: 56, 128>}]} {
    %c0 = arith.constant 0 : index
    %c0_0 = arith.constant 0 : index
    %0 = vector.load %arg5[%c0, %c0_0] : memref<150x128xf32, #tpu.memory_space<vmem>>, vector<150x128xf32>
    %c0_1 = arith.constant 0 : index
    %c0_2 = arith.constant 0 : index
    %1 = vector.load %arg1[%c0_1, %c0_2] : memref<56x150xf32, #tpu.memory_space<vmem>>, vector<56x150xf32>
    %cst = arith.constant dense<0.000000e+00> : vector<56x128xf32>
    %2 = tpu.matmul %1, %0, %cst {dimension_numbers = #tpu.dot_dimension_numbers<[1], [0], [0], [1], [0, 0, 1, 1], [], []>} : vector<56x150xf32>, vector<150x128xf32>, vector<56x128xf32> -> vector<56x128xf32>
    %c0_3 = arith.constant 0 : index
    %c0_4 = arith.constant 0 : index
    %3 = vector.load %arg2[%c0_3, %c0_4] : memref<56x150xf32, #tpu.memory_space<vmem>>, vector<56x150xf32>
    %cst_5 = arith.constant dense<0.000000e+00> : vector<56x128xf32>
    %4 = tpu.matmul %3, %0, %cst_5 {dimension_numbers = #tpu.dot_dimension_numbers<[1], [0], [0], [1], [0, 0, 1, 1], [], []>} : vector<56x150xf32>, vector<150x128xf32>, vector<56x128xf32> -> vector<56x128xf32>
    %5 = arith.maximumf %2, %4 : vector<56x128xf32>
    %c0_6 = arith.constant 0 : index
    %c0_7 = arith.constant 0 : index
    %6 = vector.load %arg3[%c0_6, %c0_7] : memref<56x150xf32, #tpu.memory_space<vmem>>, vector<56x150xf32>
    %cst_8 = arith.constant dense<0.000000e+00> : vector<56x128xf32>
    %7 = tpu.matmul %6, %0, %cst_8 {dimension_numbers = #tpu.dot_dimension_numbers<[1], [0], [0], [1], [0, 0, 1, 1], [], []>} : vector<56x150xf32>, vector<150x128xf32>, vector<56x128xf32> -> vector<56x128xf32>
    %c0_9 = arith.constant 0 : index
    %c0_10 = arith.constant 0 : index
    %8 = vector.load %arg4[%c0_9, %c0_10] : memref<56x150xf32, #tpu.memory_space<vmem>>, vector<56x150xf32>
    %cst_11 = arith.constant dense<0.000000e+00> : vector<56x128xf32>
    %9 = tpu.matmul %8, %0, %cst_11 {dimension_numbers = #tpu.dot_dimension_numbers<[1], [0], [0], [1], [0, 0, 1, 1], [], []>} : vector<56x150xf32>, vector<150x128xf32>, vector<56x128xf32> -> vector<56x128xf32>
    %10 = arith.maximumf %7, %9 : vector<56x128xf32>
    %11 = arith.maximumf %5, %10 : vector<56x128xf32>
    %c0_12 = arith.constant 0 : index
    %c0_13 = arith.constant 0 : index
    %12 = vector.load %arg6[%c0_12, %c0_13] : memref<1x128xf32, #tpu.memory_space<vmem>>, vector<1x128xf32>
    %13 = vector.broadcast %12 : vector<1x128xf32> to vector<56x128xf32>
    %14 = arith.addf %11, %13 : vector<56x128xf32>
    %cst_14 = arith.constant 0.000000e+00 : f32
    %15 = vector.broadcast %cst_14 : f32 to vector<56x128xf32>
    %16 = arith.maximumf %14, %15 : vector<56x128xf32>
    %c0_15 = arith.constant 0 : index
    %c0_16 = arith.constant 0 : index
    %17 = vector.load %arg7[%c0_15, %c0_16] : memref<56x128xf32, #tpu.memory_space<vmem>>, vector<56x128xf32>
    tpu.vector_store %arg7[%c0_15, %c0_16], %16 {strides = array<i32>} : memref<56x128xf32, #tpu.memory_space<vmem>>, vector<56x128xf32>,
    return
  }
  func.func @transform_0(%arg0: i32) -> (i32, i32) {
    %c0_i32 = arith.constant 0 : i32
    %c0_i32_0 = arith.constant 0 : i32
    return %arg0, %c0_i32 : i32, i32
  }
  func.func @transform_1(%arg0: i32) -> (i32, i32) {
    %c0_i32 = arith.constant 0 : i32
    %c0_i32_0 = arith.constant 0 : i32
    return %arg0, %c0_i32 : i32, i32
  }
  func.func @transform_2(%arg0: i32) -> (i32, i32) {
    %c0_i32 = arith.constant 0 : i32
    %c0_i32_0 = arith.constant 0 : i32
    return %arg0, %c0_i32 : i32, i32
  }
  func.func @transform_3(%arg0: i32) -> (i32, i32) {
    %c0_i32 = arith.constant 0 : i32
    %c0_i32_0 = arith.constant 0 : i32
    return %arg0, %c0_i32 : i32, i32
  }
  func.func @transform_4(%arg0: i32) -> (i32, i32) {
    %c0_i32 = arith.constant 0 : i32
    %c0_i32_0 = arith.constant 0 : i32
    %c0_i32_1 = arith.constant 0 : i32
    return %c0_i32, %c0_i32_0 : i32, i32
  }
  func.func @transform_5(%arg0: i32) -> (i32, i32) {
    %c0_i32 = arith.constant 0 : i32
    %c0_i32_0 = arith.constant 0 : i32
    %c0_i32_1 = arith.constant 0 : i32
    return %c0_i32, %c0_i32_0 : i32, i32
  }
  func.func @transform_6(%arg0: i32) -> (i32, i32) {
    %c0_i32 = arith.constant 0 : i32
    %c0_i32_0 = arith.constant 0 : i32
    return %arg0, %c0_i32 : i32, i32
  }
}

module attributes {stable_mosaic.version = 11 : i64} {
  func.func @_fc_stack_kernel(%arg0: i32, %arg1: memref<8x400xf32, #tpu.memory_space<vmem>>, %arg2: memref<400x128xf32, #tpu.memory_space<vmem>>, %arg3: memref<1x128xf32, #tpu.memory_space<vmem>>, %arg4: memref<128x128xf32, #tpu.memory_space<vmem>>, %arg5: memref<1x128xf32, #tpu.memory_space<vmem>>, %arg6: memref<128x128xf32, #tpu.memory_space<vmem>>, %arg7: memref<1x128xf32, #tpu.memory_space<vmem>>, %arg8: memref<8x128xf32, #tpu.memory_space<vmem>>) attributes {dimension_semantics = [#tpu.dimension_semantics<parallel>], iteration_bounds = array<i64: 1>, scalar_prefetch = 0 : i64, scratch_operands = 0 : i64, tpu.core_type = #tpu.core_type<tc>, window_params = [{transform_indices = @transform_0, window_bounds = array<i64: 8, 400>}, {pipeline_mode = #tpu.pipeline_mode<synchronous>, transform_indices = @transform_1, window_bounds = array<i64: 400, 128>}, {pipeline_mode = #tpu.pipeline_mode<synchronous>, transform_indices = @transform_2, window_bounds = array<i64: 1, 128>}, {pipeline_mode = #tpu.pipeline_mode<synchronous>, transform_indices = @transform_3, window_bounds = array<i64: 128, 128>}, {pipeline_mode = #tpu.pipeline_mode<synchronous>, transform_indices = @transform_4, window_bounds = array<i64: 1, 128>}, {pipeline_mode = #tpu.pipeline_mode<synchronous>, transform_indices = @transform_5, window_bounds = array<i64: 128, 128>}, {pipeline_mode = #tpu.pipeline_mode<synchronous>, transform_indices = @transform_6, window_bounds = array<i64: 1, 128>}, {transform_indices = @transform_7, window_bounds = array<i64: 8, 128>}]} {
    %c0 = arith.constant 0 : index
    %c0_0 = arith.constant 0 : index
    %0 = vector.load %arg1[%c0, %c0_0] : memref<8x400xf32, #tpu.memory_space<vmem>>, vector<8x400xf32>
    %c0_1 = arith.constant 0 : index
    %c0_2 = arith.constant 0 : index
    %1 = vector.load %arg2[%c0_1, %c0_2] : memref<400x128xf32, #tpu.memory_space<vmem>>, vector<400x128xf32>
    %cst = arith.constant dense<0.000000e+00> : vector<8x128xf32>
    %2 = tpu.matmul %0, %1, %cst {dimension_numbers = #tpu.dot_dimension_numbers<[1], [0], [0], [1], [0, 0, 1, 1], [], []>} : vector<8x400xf32>, vector<400x128xf32>, vector<8x128xf32> -> vector<8x128xf32>
    %c0_3 = arith.constant 0 : index
    %c0_4 = arith.constant 0 : index
    %3 = vector.load %arg3[%c0_3, %c0_4] : memref<1x128xf32, #tpu.memory_space<vmem>>, vector<1x128xf32>
    %4 = vector.broadcast %3 : vector<1x128xf32> to vector<8x128xf32>
    %5 = arith.addf %2, %4 : vector<8x128xf32>
    %cst_5 = arith.constant 0.000000e+00 : f32
    %6 = vector.broadcast %cst_5 : f32 to vector<8x128xf32>
    %7 = arith.maximumf %5, %6 : vector<8x128xf32>
    %c0_6 = arith.constant 0 : index
    %c0_7 = arith.constant 0 : index
    %8 = vector.load %arg4[%c0_6, %c0_7] : memref<128x128xf32, #tpu.memory_space<vmem>>, vector<128x128xf32>
    %cst_8 = arith.constant dense<0.000000e+00> : vector<8x128xf32>
    %9 = tpu.matmul %7, %8, %cst_8 {dimension_numbers = #tpu.dot_dimension_numbers<[1], [0], [0], [1], [0, 0, 1, 1], [], []>} : vector<8x128xf32>, vector<128x128xf32>, vector<8x128xf32> -> vector<8x128xf32>
    %c0_9 = arith.constant 0 : index
    %c0_10 = arith.constant 0 : index
    %10 = vector.load %arg5[%c0_9, %c0_10] : memref<1x128xf32, #tpu.memory_space<vmem>>, vector<1x128xf32>
    %11 = vector.broadcast %10 : vector<1x128xf32> to vector<8x128xf32>
    %12 = arith.addf %9, %11 : vector<8x128xf32>
    %cst_11 = arith.constant 0.000000e+00 : f32
    %13 = vector.broadcast %cst_11 : f32 to vector<8x128xf32>
    %14 = arith.maximumf %12, %13 : vector<8x128xf32>
    %c0_12 = arith.constant 0 : index
    %c0_13 = arith.constant 0 : index
    %15 = vector.load %arg6[%c0_12, %c0_13] : memref<128x128xf32, #tpu.memory_space<vmem>>, vector<128x128xf32>
    %cst_14 = arith.constant dense<0.000000e+00> : vector<8x128xf32>
    %16 = tpu.matmul %14, %15, %cst_14 {dimension_numbers = #tpu.dot_dimension_numbers<[1], [0], [0], [1], [0, 0, 1, 1], [], []>} : vector<8x128xf32>, vector<128x128xf32>, vector<8x128xf32> -> vector<8x128xf32>
    %c0_15 = arith.constant 0 : index
    %c0_16 = arith.constant 0 : index
    %17 = vector.load %arg7[%c0_15, %c0_16] : memref<1x128xf32, #tpu.memory_space<vmem>>, vector<1x128xf32>
    %18 = vector.broadcast %17 : vector<1x128xf32> to vector<8x128xf32>
    %19 = arith.addf %16, %18 : vector<8x128xf32>
    %c0_17 = arith.constant 0 : index
    %c0_18 = arith.constant 0 : index
    %20 = vector.load %arg8[%c0_17, %c0_18] : memref<8x128xf32, #tpu.memory_space<vmem>>, vector<8x128xf32>
    tpu.vector_store %arg8[%c0_17, %c0_18], %19 {strides = array<i32>} : memref<8x128xf32, #tpu.memory_space<vmem>>, vector<8x128xf32>,
    return
  }
  func.func @transform_0(%arg0: i32) -> (i32, i32) {
    %c0_i32 = arith.constant 0 : i32
    %c0_i32_0 = arith.constant 0 : i32
    return %arg0, %c0_i32 : i32, i32
  }
  func.func @transform_1(%arg0: i32) -> (i32, i32) {
    %c0_i32 = arith.constant 0 : i32
    %c0_i32_0 = arith.constant 0 : i32
    %c0_i32_1 = arith.constant 0 : i32
    return %c0_i32, %c0_i32_0 : i32, i32
  }
  func.func @transform_2(%arg0: i32) -> (i32, i32) {
    %c0_i32 = arith.constant 0 : i32
    %c0_i32_0 = arith.constant 0 : i32
    %c0_i32_1 = arith.constant 0 : i32
    return %c0_i32, %c0_i32_0 : i32, i32
  }
  func.func @transform_3(%arg0: i32) -> (i32, i32) {
    %c0_i32 = arith.constant 0 : i32
    %c0_i32_0 = arith.constant 0 : i32
    %c0_i32_1 = arith.constant 0 : i32
    return %c0_i32, %c0_i32_0 : i32, i32
  }
  func.func @transform_4(%arg0: i32) -> (i32, i32) {
    %c0_i32 = arith.constant 0 : i32
    %c0_i32_0 = arith.constant 0 : i32
    %c0_i32_1 = arith.constant 0 : i32
    return %c0_i32, %c0_i32_0 : i32, i32
  }
  func.func @transform_5(%arg0: i32) -> (i32, i32) {
    %c0_i32 = arith.constant 0 : i32
    %c0_i32_0 = arith.constant 0 : i32
    %c0_i32_1 = arith.constant 0 : i32
    return %c0_i32, %c0_i32_0 : i32, i32
  }
  func.func @transform_6(%arg0: i32) -> (i32, i32) {
    %c0_i32 = arith.constant 0 : i32
    %c0_i32_0 = arith.constant 0 : i32
    %c0_i32_1 = arith.constant 0 : i32
    return %c0_i32, %c0_i32_0 : i32, i32
  }
  func.func @transform_7(%arg0: i32) -> (i32, i32) {
    %c0_i32 = arith.constant 0 : i32
    %c0_i32_0 = arith.constant 0 : i32
    return %arg0, %c0_i32 : i32, i32
  }
}

</mosaic_0001>

<llo_original>
// kernel: net_forward.3
$region0: #{net_forward.3}
  #allocation0 [shape = 'u32[]', space=smem, size = 0x4, offset = 0x4, fixed_abs, tag = 'smem constant byte address 0x4 - core index']
  #allocation1 [shape = 'u32[144,128]{1,0:T(1,128)}', space=vmem, size = 0x12000, scoped, tag = 'internal scratch']
  %s0 = inlined_call_operand.vmem [shape: f32[512,75], index: 0, kind: input, shape index: {}]
  %s1 = inlined_call_operand.vmem [shape: f32[512,75], index: 1, kind: input, shape index: {}]
  %s2 = inlined_call_operand.vmem [shape: f32[512,75], index: 2, kind: input, shape index: {}]
  %s3 = inlined_call_operand.vmem [shape: f32[512,75], index: 3, kind: input, shape index: {}]
  %s4 = inlined_call_operand.vmem [shape: f32[75,128], index: 4, kind: input, shape index: {}]
  %s5 = inlined_call_operand.vmem [shape: f32[1,128], index: 5, kind: input, shape index: {}]
  %s6 = inlined_call_operand.vmem [shape: f32[512,128], index: 6, kind: output, shape index: {}]
  %s7 = sld [smem:[#allocation0]]
  $region57: #{net_forward.3} parent=0
    _
  %s9 = ssub.s32 1, %s7
  %s10 = scalar_select 0, %s9, %s7
  loop: start=0, step=1, limit=4
  $region2: #{net_forward.3} parent=0 // loop_pre_header
    _
  $region3: #{net_forward.3} parent=0 // loop_header
    %s12 = sphi 0, %s16
    %p13 = scmp.ge.s32.totalorder %s12, 4
    %s22 = sphi 0, %s24
    %s25 = sphi 0, %s22
    %s26 = sphi 0, %s25
    %s42 = sphi 0, %s26
    %s48 = sphi 0, %s50
    %s51 = sphi 0, %s48
    %s52 = sphi 0, %s51
    %s68 = sphi 0, %s52
    %s74 = sphi 0, %s76
    %s77 = sphi 0, %s74
    %s78 = sphi 0, %s77
    %s94 = sphi 0, %s78
    %s100 = sphi 0, %s102
    %s103 = sphi 0, %s100
    %s104 = sphi 0, %s103
    %s120 = sphi 0, %s104
    %s124 = sphi 0, %s124
    %s126 = sphi 0, %s124
    %s127 = sphi 0, %s126
    %s141 = sphi 0, %s127
    %s145 = sphi 0, %s145
    %s147 = sphi 0, %s145
    %s148 = sphi 0, %s147
    %s162 = sphi 0, %s148
    %s168 = sphi 0, %s170
    %s171 = sphi 0, %s168
    %s172 = sphi 0, %s171
    %s188 = sphi 0, %s172
  $region4: #{net_forward.3} parent=0 // loop_header_branch
    %15 = sbr.rel (%p13) target = $region8
  $region5: #{net_forward.3} parent=0 // loop_body
    %s17 = ssub.s32 %s12, 1
    %s18 = ssub.s32 %s12, 2
    %s19 = sadd.s32 %s12, 1
    %s20 = ssub.s32 %s12, %s19
    %p21 = scmp.eq.s32.totalorder %s20, 0
    %s23 = sadd.s32 %s22, 1
    %s24 = scalar_select %p21, %s22, %s23
    %p27 = pneg %p21
    %p28 = scmp.eq.s32.totalorder %s12, 1
    %p29 = por %p27, %p28
    %p30 = scmp.ne.s32.totalorder %s22, %s25
    %p31 = scmp.eq.s32.totalorder %s12, 0
    %p32 = por %p30, %p31
    %p33 = scmp.ne.s32.totalorder %s22, %s25
    %p34 = scmp.eq.s32.totalorder %s17, 1
    %p35 = por %p33, %p34
    %p36 = scmp.ne.s32.totalorder %s25, %s26
    %p37 = scmp.eq.s32.totalorder %s17, 0
    %p38 = por %p36, %p37
    %p39 = scmp.ne.s32.totalorder %s25, %s26
    %p40 = scmp.eq.s32.totalorder %s18, 1
    %p41 = por %p39, %p40
    %p43 = scmp.ne.s32.totalorder %s26, %s42
    %p44 = scmp.eq.s32.totalorder %s18, 0
    %p45 = por %p43, %p44
    %s46 = ssub.s32 %s12, %s19
    %p47 = scmp.eq.s32.totalorder %s46, 0
    %s49 = sadd.s32 %s48, 1
    %s50 = scalar_select %p47, %s48, %s49
    %p53 = pneg %p47
    %p54 = scmp.eq.s32.totalorder %s12, 1
    %p55 = por %p53, %p54
    %p56 = scmp.ne.s32.totalorder %s48, %s51
    %p57 = scmp.eq.s32.totalorder %s12, 0
    %p58 = por %p56, %p57
    %p59 = scmp.ne.s32.totalorder %s48, %s51
    %p60 = scmp.eq.s32.totalorder %s17, 1
    %p61 = por %p59, %p60
    %p62 = scmp.ne.s32.totalorder %s51, %s52
    %p63 = scmp.eq.s32.totalorder %s17, 0
    %p64 = por %p62, %p63
    %p65 = scmp.ne.s32.totalorder %s51, %s52
    %p66 = scmp.eq.s32.totalorder %s18, 1
    %p67 = por %p65, %p66
    %p69 = scmp.ne.s32.totalorder %s52, %s68
    %p70 = scmp.eq.s32.totalorder %s18, 0
    %p71 = por %p69, %p70
    %s72 = ssub.s32 %s12, %s19
    %p73 = scmp.eq.s32.totalorder %s72, 0
    %s75 = sadd.s32 %s74, 1
    %s76 = scalar_select %p73, %s74, %s75
    %p79 = pneg %p73
    %p80 = scmp.eq.s32.totalorder %s12, 1
    %p81 = por %p79, %p80
    %p82 = scmp.ne.s32.totalorder %s74, %s77
    %p83 = scmp.eq.s32.totalorder %s12, 0
    %p84 = por %p82, %p83
    %p85 = scmp.ne.s32.totalorder %s74, %s77
    %p86 = scmp.eq.s32.totalorder %s17, 1
    %p87 = por %p85, %p86
    %p88 = scmp.ne.s32.totalorder %s77, %s78
    %p89 = scmp.eq.s32.totalorder %s17, 0
    %p90 = por %p88, %p89
    %p91 = scmp.ne.s32.totalorder %s77, %s78
    %p92 = scmp.eq.s32.totalorder %s18, 1
    %p93 = por %p91, %p92
    %p95 = scmp.ne.s32.totalorder %s78, %s94
    %p96 = scmp.eq.s32.totalorder %s18, 0
    %p97 = por %p95, %p96
    %s98 = ssub.s32 %s12, %s19
    %p99 = scmp.eq.s32.totalorder %s98, 0
    %s101 = sadd.s32 %s100, 1
    %s102 = scalar_select %p99, %s100, %s101
    %p105 = pneg %p99
    %p106 = scmp.eq.s32.totalorder %s12, 1
    %p107 = por %p105, %p106
    %p108 = scmp.ne.s32.totalorder %s100, %s103
    %p109 = scmp.eq.s32.totalorder %s12, 0
    %p110 = por %p108, %p109
    %p111 = scmp.ne.s32.totalorder %s100, %s103
    %p112 = scmp.eq.s32.totalorder %s17, 1
    %p113 = por %p111, %p112
    %p114 = scmp.ne.s32.totalorder %s103, %s104
    %p115 = scmp.eq.s32.totalorder %s17, 0
    %p116 = por %p114, %p115
    %p117 = scmp.ne.s32.totalorder %s103, %s104
    %p118 = scmp.eq.s32.totalorder %s18, 1
    %p119 = por %p117, %p118
    %p121 = scmp.ne.s32.totalorder %s104, %s120
    %p122 = scmp.eq.s32.totalorder %s18, 0
    %p123 = por %p121, %p122
    %s125 = sadd.s32 %s124, 1
    %p128 = scmp.eq.s32.totalorder %s12, 1
    %p129 = scmp.ne.s32.totalorder %s124, %s126
    %p130 = scmp.eq.s32.totalorder %s12, 0
    %p131 = por %p129, %p130
    %p132 = scmp.ne.s32.totalorder %s124, %s126
    %p133 = scmp.eq.s32.totalorder %s17, 1
    %p134 = por %p132, %p133
    %p135 = scmp.ne.s32.totalorder %s126, %s127
    %p136 = scmp.eq.s32.totalorder %s17, 0
    %p137 = por %p135, %p136
    %p138 = scmp.ne.s32.totalorder %s126, %s127
    %p139 = scmp.eq.s32.totalorder %s18, 1
    %p140 = por %p138, %p139
    %p142 = scmp.ne.s32.totalorder %s127, %s141
    %p143 = scmp.eq.s32.totalorder %s18, 0
    %p144 = por %p142, %p143
    %s146 = sadd.s32 %s145, 1
    %p149 = scmp.eq.s32.totalorder %s12, 1
    %p150 = scmp.ne.s32.totalorder %s145, %s147
    %p151 = scmp.eq.s32.totalorder %s12, 0
    %p152 = por %p150, %p151
    %p153 = scmp.ne.s32.totalorder %s145, %s147
    %p154 = scmp.eq.s32.totalorder %s17, 1
    %p155 = por %p153, %p154
    %p156 = scmp.ne.s32.totalorder %s147, %s148
    %p157 = scmp.eq.s32.totalorder %s17, 0
    %p158 = por %p156, %p157
    %p159 = scmp.ne.s32.totalorder %s147, %s148
    %p160 = scmp.eq.s32.totalorder %s18, 1
    %p161 = por %p159, %p160
    %p163 = scmp.ne.s32.totalorder %s148, %s162
    %p164 = scmp.eq.s32.totalorder %s18, 0
    %p165 = por %p163, %p164
    %s166 = ssub.s32 %s12, %s19
    %p167 = scmp.eq.s32.totalorder %s166, 0
    %s169 = sadd.s32 %s168, 1
    %s170 = scalar_select %p167, %s168, %s169
    %p173 = pneg %p167
    %p174 = scmp.eq.s32.totalorder %s12, 1
    %p175 = por %p173, %p174
    %p176 = scmp.ne.s32.totalorder %s168, %s171
    %p177 = scmp.eq.s32.totalorder %s12, 0
    %p178 = por %p176, %p177
    %p179 = scmp.ne.s32.totalorder %s168, %s171
    %p180 = scmp.eq.s32.totalorder %s17, 1
    %p181 = por %p179, %p180
    %p182 = scmp.ne.s32.totalorder %s171, %s172
    %p183 = scmp.eq.s32.totalorder %s17, 0
    %p184 = por %p182, %p183
    %p185 = scmp.ne.s32.totalorder %s171, %s172
    %p186 = scmp.eq.s32.totalorder %s18, 1
    %p187 = por %p185, %p186
    %p189 = scmp.ne.s32.totalorder %s172, %s188
    %p190 = scmp.eq.s32.totalorder %s18, 0
    %p191 = por %p189, %p190
    %p192 = scmp.le.s32.totalorder 1, %s12
    %p193 = scmp.lt.s32.totalorder %s12, 3
    %p194 = pnand %p192, %p193
    %p195 = pneg %p194
    // Predicated region
    $region9: #{net_forward.3} parent=5 // pred_check
      _
    $region10: #{net_forward.3} parent=5 // pred_check_branch
      %197 = sbr.rel (%p194) target = $region12
    $region11: #{net_forward.3} parent=5 // pred_region
      %s198 = ssub.s32 %s12, 1
      // Predicated region
      $region13: #{net_forward.3} parent=11 // pred_check
        %p199 = pneg %p137
      $region14: #{net_forward.3} parent=11 // pred_check_branch
        %201 = sbr.rel (%p199) target = $region16
      $region15: #{net_forward.3} parent=11 // pred_region
        _
      $region16: #{net_forward.3} parent=11 // pred_fallthru
        _
      // Predicated region
      $region17: #{net_forward.3} parent=11 // pred_check
        %p202 = pneg %p158
      $region18: #{net_forward.3} parent=11 // pred_check_branch
        %204 = sbr.rel (%p202) target = $region20
      $region19: #{net_forward.3} parent=11 // pred_region
        _
      $region20: #{net_forward.3} parent=11 // pred_fallthru
        _
    $region12: #{net_forward.3} parent=5 // pred_fallthru
      _
    %p205 = scmp.lt.s32.totalorder %s12, 2
    // Predicated region
    $region21: #{net_forward.3} parent=5 // pred_check
      %p206 = pneg %p205
    $region22: #{net_forward.3} parent=5 // pred_check_branch
      %208 = sbr.rel (%p206) target = $region24
    $region23: #{net_forward.3} parent=5 // pred_region
      // Predicated region
      $region25: #{net_forward.3} parent=23 // pred_check
        %p209 = pneg %p32
      $region26: #{net_forward.3} parent=23 // pred_check_branch
        %211 = sbr.rel (%p209) target = $region28
      $region27: #{net_forward.3} parent=23 // pred_region
        %s212 = smul.u32 32, %s12
        %p213 = scmp.lt.s32.totalorder %s212, 63
        %s214 = scalar_select %p213, %s212, 63
        %s215 = smul.addr %s214, 8
        %s216 = scalar_lea.vmem %s0, %s215
        %s217 = smul.u32 32, %s12
      $region28: #{net_forward.3} parent=23 // pred_fallthru
        _
      // Predicated region
      $region29: #{net_forward.3} parent=23 // pred_check
        %p218 = pneg %p58
      $region30: #{net_forward.3} parent=23 // pred_check_branch
        %220 = sbr.rel (%p218) target = $region32
      $region31: #{net_forward.3} parent=23 // pred_region
        %s221 = smul.u32 32, %s12
        %p222 = scmp.lt.s32.totalorder %s221, 63
        %s223 = scalar_select %p222, %s221, 63
        %s224 = smul.addr %s223, 8
        %s225 = scalar_lea.vmem %s1, %s224
        %s226 = smul.u32 32, %s12
      $region32: #{net_forward.3} parent=23 // pred_fallthru
        _
      // Predicated region
      $region33: #{net_forward.3} parent=23 // pred_check
        %p227 = pneg %p84
      $region34: #{net_forward.3} parent=23 // pred_check_branch
        %229 = sbr.rel (%p227) target = $region36
      $region35: #{net_forward.3} parent=23 // pred_region
        %s230 = smul.u32 32, %s12
        %p231 = scmp.lt.s32.totalorder %s230, 63
        %s232 = scalar_select %p231, %s230, 63
        %s233 = smul.addr %s232, 8
        %s234 = scalar_lea.vmem %s2, %s233
        %s235 = smul.u32 32, %s12
      $region36: #{net_forward.3} parent=23 // pred_fallthru
        _
      // Predicated region
      $region37: #{net_forward.3} parent=23 // pred_check
        %p236 = pneg %p110
      $region38: #{net_forward.3} parent=23 // pred_check_branch
        %238 = sbr.rel (%p236) target = $region40
      $region39: #{net_forward.3} parent=23 // pred_region
        %s239 = smul.u32 32, %s12
        %p240 = scmp.lt.s32.totalorder %s239, 63
        %s241 = scalar_select %p240, %s239, 63
        %s242 = smul.addr %s241, 8
        %s243 = scalar_lea.vmem %s3, %s242
        %s244 = smul.u32 32, %s12
      $region40: #{net_forward.3} parent=23 // pred_fallthru
        _
    $region24: #{net_forward.3} parent=5 // pred_fallthru
      _
    %p245 = scmp.le.s32.totalorder 1, %s12
    %p246 = scmp.lt.s32.totalorder %s12, 3
    %p247 = pnand %p245, %p246
    %p248 = pneg %p247
    // Predicated region
    $region41: #{net_forward.3} parent=5 // pred_check
      _
    $region42: #{net_forward.3} parent=5 // pred_check_branch
      %250 = sbr.rel (%p247) target = $region44
    $region43: #{net_forward.3} parent=5 // pred_region
      %s251 = ssub.s32 %s12, 1
      %s252 = smul.u32 32, %s17
      %p253 = scmp.lt.s32.totalorder %s252, 63
      %s254 = scalar_select %p253, %s252, 63
      %s255 = smul.addr %s254, 8
      %s256 = scalar_lea.vmem %s0, %s255
      %p257 = pneg %p38
      %p258 = pneg %p35
      %s259 = smul.u32 32, %s17
      %p260 = scmp.lt.s32.totalorder %s259, 63
      %s261 = scalar_select %p260, %s259, 63
      %s262 = smul.addr %s261, 8
      %s263 = scalar_lea.vmem %s1, %s262
      %p264 = pneg %p64
      %p265 = pneg %p61
      %s266 = smul.u32 32, %s17
      %p267 = scmp.lt.s32.totalorder %s266, 63
      %s268 = scalar_select %p267, %s266, 63
      %s269 = smul.addr %s268, 8
      %s270 = scalar_lea.vmem %s2, %s269
      %p271 = pneg %p90
      %p272 = pneg %p87
      %s273 = smul.u32 32, %s17
      %p274 = scmp.lt.s32.totalorder %s273, 63
      %s275 = scalar_select %p274, %s273, 63
      %s276 = smul.addr %s275, 8
      %s277 = scalar_lea.vmem %s3, %s276
      %p278 = pneg %p116
      %p279 = pneg %p113
      %p280 = pneg %p137
      %p281 = pneg %p134
      %p282 = pneg %p158
      %p283 = pneg %p155
      %p284 = pneg %p184
      %p285 = pneg %p181
      %s286 = smul.u32 32, %s17
      %p287 = scmp.lt.s32.totalorder %s286, 63
      %s288 = scalar_select %p287, %s286, 63
      %s289 = smul.addr %s288, 8
      %s290 = scalar_lea.vmem %s6, %s289
      %s291 = smul.u32 32, %s17
      %p292 = scmp.lt.s32.totalorder %s291, 63
      %s293 = scalar_select %p292, %s291, 63
      %s294 = smul.addr %s293, 8
      %s295 = scalar_lea.vmem %s0, %s294
      %s296 = smul.u32 32, %s17
      %s297 = smul.u32 32, %s17
      %p298 = scmp.lt.s32.totalorder %s297, 63
      %s299 = scalar_select %p298, %s297, 63
      %s300 = smul.addr %s299, 8
      %s301 = scalar_lea.vmem %s1, %s300
      %s302 = smul.u32 32, %s17
      %s303 = smul.u32 32, %s17
      %p304 = scmp.lt.s32.totalorder %s303, 63
      %s305 = scalar_select %p304, %s303, 63
      %s306 = smul.addr %s305, 8
      %s307 = scalar_lea.vmem %s2, %s306
      %s308 = smul.u32 32, %s17
      %s309 = smul.u32 32, %s17
      %p310 = scmp.lt.s32.totalorder %s309, 63
      %s311 = scalar_select %p310, %s309, 63
      %s312 = smul.addr %s311, 8
      %s313 = scalar_lea.vmem %s3, %s312
      %s314 = smul.u32 32, %s17
      %s315 = smul.u32 32, %s17
      %p316 = scmp.lt.s32.totalorder %s315, 63
      %s317 = scalar_select %p316, %s315, 63
      %s318 = smul.addr %s317, 8
      %s319 = scalar_lea.vmem %s6, %s318
      %s320 = smul.u32 32, %s17
      %v321 = vld [vmem:[%s4] sm:$0xff]
      %v322 = vld [vmem:[%s4 + $0x8] sm:$0xff]
      %v323 = vld [vmem:[%s4 + $0x10] sm:$0xff]
      %v324 = vld [vmem:[%s4 + $0x18] sm:$0xff]
      %v325 = vld [vmem:[%s4 + $0x20] sm:$0xff]
      %v326 = vld [vmem:[%s4 + $0x28] sm:$0xff]
      %v327 = vld [vmem:[%s4 + $0x30] sm:$0xff]
      %v328 = vld [vmem:[%s4 + $0x38] sm:$0xff]
      %v329 = vld [vmem:[%s4 + $0x40] sm:$0xff]
      %v330 = vld [vmem:[%s4 + $0x48] sm:$0x7]
      %v331 = vld [vmem:[%s295] sm:$0xff]
      %v332 = vld [vmem:[%s295 + $0x8] sm:$0xff]
      %v333 = vld [vmem:[%s295 + $0x10] sm:$0xff]
      %v334 = vld [vmem:[%s295 + $0x18] sm:$0xff]
      %v335 = vld [vmem:[%s295 + $0x20] sm:$0xff]
      %v336 = vld [vmem:[%s295 + $0x28] sm:$0xff]
      %v337 = vld [vmem:[%s295 + $0x30] sm:$0xff]
      %v338 = vld [vmem:[%s295 + $0x38] sm:$0xff]
      %v339 = vld [vmem:[%s295 + $0x40] sm:$0xff]
      %v340 = vld [vmem:[%s295 + $0x48] sm:$0xff]
      %v341 = vld [vmem:[%s295 + $0x50] sm:$0xff]
      %v342 = vld [vmem:[%s295 + $0x58] sm:$0xff]
      %v343 = vld [vmem:[%s295 + $0x60] sm:$0xff]
      %v344 = vld [vmem:[%s295 + $0x68] sm:$0xff]
      %v345 = vld [vmem:[%s295 + $0x70] sm:$0xff]
      %v346 = vld [vmem:[%s295 + $0x78] sm:$0xff]
      %v347 = vld [vmem:[%s295 + $0x80] sm:$0xff]
      %v348 = vld [vmem:[%s295 + $0x88] sm:$0xff]
      %v349 = vld [vmem:[%s295 + $0x90] sm:$0xff]
      %v350 = vld [vmem:[%s295 + $0x98] sm:$0xff]
      %v351 = vld [vmem:[%s295 + $0xa0] sm:$0xff]
      %v352 = vld [vmem:[%s295 + $0xa8] sm:$0xff]
      %v353 = vld [vmem:[%s295 + $0xb0] sm:$0xff]
      %v354 = vld [vmem:[%s295 + $0xb8] sm:$0xff]
      %v355 = vld [vmem:[%s295 + $0xc0] sm:$0xff]
      %v356 = vld [vmem:[%s295 + $0xc8] sm:$0xff]
      %v357 = vld [vmem:[%s295 + $0xd0] sm:$0xff]
      %v358 = vld [vmem:[%s295 + $0xd8] sm:$0xff]
      %v359 = vld [vmem:[%s295 + $0xe0] sm:$0xff]
      %v360 = vld [vmem:[%s295 + $0xe8] sm:$0xff]
      %v361 = vld [vmem:[%s295 + $0xf0] sm:$0xff]
      %v362 = vld [vmem:[%s295 + $0xf8] sm:$0xff]
      %vm363 = vcmask 613376
      %v365 = vsel %vm363, %v331, 0
      %v368 = vsel %vm363, %v332, 0
      %v371 = vsel %vm363, %v333, 0
      %v374 = vsel %vm363, %v334, 0
      %v377 = vsel %vm363, %v335, 0
      %v380 = vsel %vm363, %v336, 0
      %v383 = vsel %vm363, %v337, 0
      %v386 = vsel %vm363, %v338, 0
      %v389 = vsel %vm363, %v339, 0
      %v392 = vsel %vm363, %v340, 0
      %v395 = vsel %vm363, %v341, 0
      %v398 = vsel %vm363, %v342, 0
      %v401 = vsel %vm363, %v343, 0
      %v404 = vsel %vm363, %v344, 0
      %v407 = vsel %vm363, %v345, 0
      %v410 = vsel %vm363, %v346, 0
      %v413 = vsel %vm363, %v347, 0
      %v416 = vsel %vm363, %v348, 0
      %v419 = vsel %vm363, %v349, 0
      %v422 = vsel %vm363, %v350, 0
      %v425 = vsel %vm363, %v351, 0
      %v428 = vsel %vm363, %v352, 0
      %v431 = vsel %vm363, %v353, 0
      %v434 = vsel %vm363, %v354, 0
      %v437 = vsel %vm363, %v355, 0
      %v440 = vsel %vm363, %v356, 0
      %v443 = vsel %vm363, %v357, 0
      %v446 = vsel %vm363, %v358, 0
      %v449 = vsel %vm363, %v359, 0
      %v452 = vsel %vm363, %v360, 0
      %v455 = vsel %vm363, %v361, 0
      %v458 = vsel %vm363, %v362, 0
      %vm460 = vcmask 1042432
      %v462 = vsel %vm460, %v330, 0
      %464 = vmatprep.subr.mxu0 0.0
      %465 = vmatpush1.msra.mxu0 %v321
      %466 = vmatprep.subr.mxu0 0.0
      %467 = vmatpush1.msra.mxu0 %v322
      %468 = vmatprep.subr.mxu0 0.0
      %469 = vmatpush1.msra.mxu0 %v323
      %470 = vmatprep.subr.mxu0 0.0
      %471 = vmatpush1.msra.mxu0 %v324
      %472 = vmatprep.subr.mxu0 0.0
      %473 = vmatpush1.msra.mxu0 %v325
      %474 = vmatprep.subr.mxu0 0.0
      %475 = vmatpush1.msra.mxu0 %v326
      %476 = vmatprep.subr.mxu0 0.0
      %477 = vmatpush1.msra.mxu0 %v327
      %478 = vmatprep.subr.mxu0 0.0
      %479 = vmatpush1.msra.mxu0 %v328
      %480 = vmatprep.subr.mxu0 0.0
      %481 = vmatpush1.msra.mxu0 %v329
      %482 = vmatprep.subr.mxu0 0.0
      %483 = vmatpush1.msra.mxu0 %v462
      %484 = vmatprep.subr.mxu0 0.0
      %485 = vmatpush1.msra.mxu0 0.0
      %486 = vmatprep.subr.mxu0 0.0
      %487 = vmatpush1.msra.mxu0 0.0
      %488 = vmatprep.subr.mxu0 0.0
      %489 = vmatpush1.msra.mxu0 0.0
      %490 = vmatprep.subr.mxu0 0.0
      %491 = vmatpush1.msra.mxu0 0.0
      %492 = vmatprep.subr.mxu0 0.0
      %493 = vmatpush1.msra.mxu0 0.0
      %494 = vmatprep.subr.mxu0 0.0
      %495 = vmatpush1.msra.mxu0 0.0
      %496 = vmatprep.subr.mxu0 0.0
      %497 = vmatpush1.msra.mxu0 0.0
      %498 = vmatprep.subr.mxu0 0.0
      %499 = vmatpush1.msra.mxu0 0.0
      %500 = vmatprep.subr.mxu0 0.0
      %501 = vmatpush1.msra.mxu0 0.0
      %502 = vmatprep.subr.mxu0 0.0
      %503 = vmatpush1.msra.mxu0 0.0
      %504 = vmatprep.subr.mxu0 0.0
      %505 = vmatpush1.msra.mxu0 0.0
      %506 = vmatprep.subr.mxu0 0.0
      %507 = vmatpush1.msra.mxu0 0.0
      %508 = vmatprep.subr.mxu0 0.0
      %509 = vmatpush1.msra.mxu0 0.0
      %510 = vmatprep.subr.mxu0 0.0
      %511 = vmatpush1.msra.mxu0 0.0
      %512 = vmatprep.subr.mxu0 0.0
      %513 = vmatpush1.msra.mxu0 0.0
      %514 = vmatprep.subr.mxu0 0.0
      %515 = vmatpush1.msra.mxu0 0.0
      %516 = vmatprep.subr.mxu0 0.0
      %517 = vmatpush1.msra.mxu0 0.0
      %518 = vmatprep.subr.mxu0 0.0
      %519 = vmatpush1.msra.mxu0 0.0
      %520 = vmatprep.subr.mxu0 0.0
      %521 = vmatpush1.msra.mxu0 0.0
      %522 = vmatprep.subr.mxu0 0.0
      %523 = vmatpush1.msra.mxu0 0.0
      %524 = vmatprep.subr.mxu0 0.0
      %525 = vmatpush1.msra.mxu0 0.0
      %526 = vmatprep.subr.mxu0 0.0
      %527 = vmatpush1.msra.mxu0 0.0
      %528 = vmatprep.mubr.f32.mxu0 0.0
      %529 = vmatmul.mubr.f32.gmra.mrb[0].mxu0 %v365
      %v530 = vpop.f32.mrb[0].mxu0
      %v531 = vadd.f32 0.0, %v530
      %v532 = vpop.f32.mrb[0].mxu0
      %533 = vmatprep.mubr.f32.mxu0 0.0
      %534 = vmatmul.mubr.f32.gmra.mrb[0].mxu0 %v368
      %v535 = vpop.f32.mrb[0].mxu0
      %v536 = vadd.f32 0.0, %v535
      %v537 = vpop.f32.mrb[0].mxu0
      %538 = vmatprep.mubr.f32.mxu0 0.0
      %539 = vmatmul.mubr.f32.gmra.mrb[0].mxu0 %v371
      %v540 = vpop.f32.mrb[0].mxu0
      %v541 = vadd.f32 0.0, %v540
      %v542 = vpop.f32.mrb[0].mxu0
      %543 = vmatprep.mubr.f32.mxu0 0.0
      %544 = vmatmul.mubr.f32.gmra.mrb[0].mxu0 %v374
      %v545 = vpop.f32.mrb[0].mxu0
      %v546 = vadd.f32 0.0, %v545
      %v547 = vpop.f32.mrb[0].mxu0
      %548 = vmatprep.mubr.f32.mxu0 0.0
      %549 = vmatmul.mubr.f32.gmra.mrb[0].mxu0 %v377
      %v550 = vpop.f32.mrb[0].mxu0
      %v551 = vadd.f32 0.0, %v550
      %v552 = vpop.f32.mrb[0].mxu0
      %553 = vmatprep.mubr.f32.mxu0 0.0
      %554 = vmatmul.mubr.f32.gmra.mrb[0].mxu0 %v380
      %v555 = vpop.f32.mrb[0].mxu0
      %v556 = vadd.f32 0.0, %v555
      %v557 = vpop.f32.mrb[0].mxu0
      %558 = vmatprep.mubr.f32.mxu0 0.0
      %559 = vmatmul.mubr.f32.gmra.mrb[0].mxu0 %v383
      %v560 = vpop.f32.mrb[0].mxu0
      %v561 = vadd.f32 0.0, %v560
      %v562 = vpop.f32.mrb[0].mxu0
      %563 = vmatprep.mubr.f32.mxu0 0.0
      %564 = vmatmul.mubr.f32.gmra.mrb[0].mxu0 %v386
      %v565 = vpop.f32.mrb[0].mxu0
      %v566 = vadd.f32 0.0, %v565
      %v567 = vpop.f32.mrb[0].mxu0
      %568 = vmatprep.mubr.f32.mxu0 0.0
      %569 = vmatmul.mubr.f32.gmra.mrb[0].mxu0 %v389
      %v570 = vpop.f32.mrb[0].mxu0
      %v571 = vadd.f32 0.0, %v570
      %v572 = vpop.f32.mrb[0].mxu0
      %573 = vmatprep.mubr.f32.mxu0 0.0
      %574 = vmatmul.mubr.f32.gmra.mrb[0].mxu0 %v392
      %v575 = vpop.f32.mrb[0].mxu0
      %v576 = vadd.f32 0.0, %v575
      %v577 = vpop.f32.mrb[0].mxu0
      %578 = vmatprep.mubr.f32.mxu0 0.0
      %579 = vmatmul.mubr.f32.gmra.mrb[0].mxu0 %v395
      %v580 = vpop.f32.mrb[0].mxu0
      %v581 = vadd.f32 0.0, %v580
      %v582 = vpop.f32.mrb[0].mxu0
      %583 = vmatprep.mubr.f32.mxu0 0.0
      %584 = vmatmul.mubr.f32.gmra.mrb[0].mxu0 %v398
      %v585 = vpop.f32.mrb[0].mxu0
      %v586 = vadd.f32 0.0, %v585
      %v587 = vpop.f32.mrb[0].mxu0
      %588 = vmatprep.mubr.f32.mxu0 0.0
      %589 = vmatmul.mubr.f32.gmra.mrb[0].mxu0 %v401
      %v590 = vpop.f32.mrb[0].mxu0
      %v591 = vadd.f32 0.0, %v590
      %v592 = vpop.f32.mrb[0].mxu0
      %593 = vmatprep.mubr.f32.mxu0 0.0
      %594 = vmatmul.mubr.f32.gmra.mrb[0].mxu0 %v404
      %v595 = vpop.f32.mrb[0].mxu0
      %v596 = vadd.f32 0.0, %v595
      %v597 = vpop.f32.mrb[0].mxu0
      %598 = vmatprep.mubr.f32.mxu0 0.0
      %599 = vmatmul.mubr.f32.gmra.mrb[0].mxu0 %v407
      %v600 = vpop.f32.mrb[0].mxu0
      %v601 = vadd.f32 0.0, %v600
      %v602 = vpop.f32.mrb[0].mxu0
      %603 = vmatprep.mubr.f32.mxu0 0.0
      %604 = vmatmul.mubr.f32.gmra.mrb[0].mxu0 %v410
      %v605 = vpop.f32.mrb[0].mxu0
      %v606 = vadd.f32 0.0, %v605
      %v607 = vpop.f32.mrb[0].mxu0
      %608 = vmatprep.mubr.f32.mxu0 0.0
      %609 = vmatmul.mubr.f32.gmra.mrb[0].mxu0 %v413
      %v610 = vpop.f32.mrb[0].mxu0
      %v611 = vadd.f32 0.0, %v610
      %v612 = vpop.f32.mrb[0].mxu0
      %613 = vmatprep.mubr.f32.mxu0 0.0
      %614 = vmatmul.mubr.f32.gmra.mrb[0].mxu0 %v416
      %v615 = vpop.f32.mrb[0].mxu0
      %v616 = vadd.f32 0.0, %v615
      %v617 = vpop.f32.mrb[0].mxu0
      %618 = vmatprep.mubr.f32.mxu0 0.0
      %619 = vmatmul.mubr.f32.gmra.mrb[0].mxu0 %v419
      %v620 = vpop.f32.mrb[0].mxu0
      %v621 = vadd.f32 0.0, %v620
      %v622 = vpop.f32.mrb[0].mxu0
      %623 = vmatprep.mubr.f32.mxu0 0.0
      %624 = vmatmul.mubr.f32.gmra.mrb[0].mxu0 %v422
      %v625 = vpop.f32.mrb[0].mxu0
      %v626 = vadd.f32 0.0, %v625
      %v627 = vpop.f32.mrb[0].mxu0
      %628 = vmatprep.mubr.f32.mxu0 0.0
      %629 = vmatmul.mubr.f32.gmra.mrb[0].mxu0 %v425
      %v630 = vpop.f32.mrb[0].mxu0
      %v631 = vadd.f32 0.0, %v630
      %v632 = vpop.f32.mrb[0].mxu0
      %633 = vmatprep.mubr.f32.mxu0 0.0
      %634 = vmatmul.mubr.f32.gmra.mrb[0].mxu0 %v428
      %v635 = vpop.f32.mrb[0].mxu0
      %v636 = vadd.f32 0.0, %v635
      %v637 = vpop.f32.mrb[0].mxu0
      %638 = vmatprep.mubr.f32.mxu0 0.0
      %639 = vmatmul.mubr.f32.gmra.mrb[0].mxu0 %v431
      %v640 = vpop.f32.mrb[0].mxu0
      %v641 = vadd.f32 0.0, %v640
      %v642 = vpop.f32.mrb[0].mxu0
      %643 = vmatprep.mubr.f32.mxu0 0.0
      %644 = vmatmul.mubr.f32.gmra.mrb[0].mxu0 %v434
      %v645 = vpop.f32.mrb[0].mxu0
      %v646 = vadd.f32 0.0, %v645
      %v647 = vpop.f32.mrb[0].mxu0
      %648 = vmatprep.mubr.f32.mxu0 0.0
      %649 = vmatmul.mubr.f32.gmra.mrb[0].mxu0 %v437
      %v650 = vpop.f32.mrb[0].mxu0
      %v651 = vadd.f32 0.0, %v650
      %v652 = vpop.f32.mrb[0].mxu0
      %653 = vmatprep.mubr.f32.mxu0 0.0
      %654 = vmatmul.mubr.f32.gmra.mrb[0].mxu0 %v440
      %v655 = vpop.f32.mrb[0].mxu0
      %v656 = vadd.f32 0.0, %v655
      %v657 = vpop.f32.mrb[0].mxu0
      %658 = vmatprep.mubr.f32.mxu0 0.0
      %659 = vmatmul.mubr.f32.gmra.mrb[0].mxu0 %v443
      %v660 = vpop.f32.mrb[0].mxu0
      %v661 = vadd.f32 0.0, %v660
      %v662 = vpop.f32.mrb[0].mxu0
      %663 = vmatprep.mubr.f32.mxu0 0.0
      %664 = vmatmul.mubr.f32.gmra.mrb[0].mxu0 %v446
      %v665 = vpop.f32.mrb[0].mxu0
      %v666 = vadd.f32 0.0, %v665
      %v667 = vpop.f32.mrb[0].mxu0
      %668 = vmatprep.mubr.f32.mxu0 0.0
      %669 = vmatmul.mubr.f32.gmra.mrb[0].mxu0 %v449
      %v670 = vpop.f32.mrb[0].mxu0
      %v671 = vadd.f32 0.0, %v670
      %v672 = vpop.f32.mrb[0].mxu0
      %673 = vmatprep.mubr.f32.mxu0 0.0
      %674 = vmatmul.mubr.f32.gmra.mrb[0].mxu0 %v452
      %v675 = vpop.f32.mrb[0].mxu0
      %v676 = vadd.f32 0.0, %v675
      %v677 = vpop.f32.mrb[0].mxu0
      %678 = vmatprep.mubr.f32.mxu0 0.0
      %679 = vmatmul.mubr.f32.gmra.mrb[0].mxu0 %v455
      %v680 = vpop.f32.mrb[0].mxu0
      %v681 = vadd.f32 0.0, %v680
      %v682 = vpop.f32.mrb[0].mxu0
      %683 = vmatprep.mubr.f32.mxu0 0.0
      %684 = vmatmul.mubr.f32.gmra.mrb[0].mxu0 %v458
      %v685 = vpop.f32.mrb[0].mxu0
      %v686 = vadd.f32 0.0, %v685
      %v687 = vpop.f32.mrb[0].mxu0
      %688 = vdwg.mxu0
      %v689 = vld [vmem:[%s301] sm:$0xff]
      %v690 = vld [vmem:[%s301 + $0x8] sm:$0xff]
      %v691 = vld [vmem:[%s301 + $0x10] sm:$0xff]
      %v692 = vld [vmem:[%s301 + $0x18] sm:$0xff]
      %v693 = vld [vmem:[%s301 + $0x20] sm:$0xff]
      %v694 = vld [vmem:[%s301 + $0x28] sm:$0xff]
      %v695 = vld [vmem:[%s301 + $0x30] sm:$0xff]
      %v696 = vld [vmem:[%s301 + $0x38] sm:$0xff]
      %v697 = vld [vmem:[%s301 + $0x40] sm:$0xff]
      %v698 = vld [vmem:[%s301 + $0x48] sm:$0xff]
      %v699 = vld [vmem:[%s301 + $0x50] sm:$0xff]
      %v700 = vld [vmem:[%s301 + $0x58] sm:$0xff]
      %v701 = vld [vmem:[%s301 + $0x60] sm:$0xff]
      %v702 = vld [vmem:[%s301 + $0x68] sm:$0xff]
      %v703 = vld [vmem:[%s301 + $0x70] sm:$0xff]
      %v704 = vld [vmem:[%s301 + $0x78] sm:$0xff]
      %v705 = vld [vmem:[%s301 + $0x80] sm:$0xff]
      %v706 = vld [vmem:[%s301 + $0x88] sm:$0xff]
      %v707 = vld [vmem:[%s301 + $0x90] sm:$0xff]
      %v708 = vld [vmem:[%s301 + $0x98] sm:$0xff]
      %v709 = vld [vmem:[%s301 + $0xa0] sm:$0xff]
      %v710 = vld [vmem:[%s301 + $0xa8] sm:$0xff]
      %v711 = vld [vmem:[%s301 + $0xb0] sm:$0xff]
      %v712 = vld [vmem:[%s301 + $0xb8] sm:$0xff]
      %v713 = vld [vmem:[%s301 + $0xc0] sm:$0xff]
      %v714 = vld [vmem:[%s301 + $0xc8] sm:$0xff]
      %v715 = vld [vmem:[%s301 + $0xd0] sm:$0xff]
      %v716 = vld [vmem:[%s301 + $0xd8] sm:$0xff]
      %v717 = vld [vmem:[%s301 + $0xe0] sm:$0xff]
      %v718 = vld [vmem:[%s301 + $0xe8] sm:$0xff]
      %v719 = vld [vmem:[%s301 + $0xf0] sm:$0xff]
      %v720 = vld [vmem:[%s301 + $0xf8] sm:$0xff]
      %v722 = vsel %vm363, %v689, 0
      %v725 = vsel %vm363, %v690, 0
      %v728 = vsel %vm363, %v691, 0
      %v731 = vsel %vm363, %v692, 0
      %v734 = vsel %vm363, %v693, 0
      %v737 = vsel %vm363, %v694, 0
      %v740 = vsel %vm363, %v695, 0
      %v743 = vsel %vm363, %v696, 0
      %v746 = vsel %vm363, %v697, 0
      %v749 = vsel %vm363, %v698, 0
      %v752 = vsel %vm363, %v699, 0
      %v755 = vsel %vm363, %v700, 0
      %v758 = vsel %vm363, %v701, 0
      %v761 = vsel %vm363, %v702, 0
      %v764 = vsel %vm363, %v703, 0
      %v767 = vsel %vm363, %v704, 0
      %v770 = vsel %vm363, %v705, 0
      %v773 = vsel %vm363, %v706, 0
      %v776 = vsel %vm363, %v707, 0
      %v779 = vsel %vm363, %v708, 0
      %v782 = vsel %vm363, %v709, 0
      %v785 = vsel %vm363, %v710, 0
      %v788 = vsel %vm363, %v711, 0
      %v791 = vsel %vm363, %v712, 0
      %v794 = vsel %vm363, %v713, 0
      %v797 = vsel %vm363, %v714, 0
      %v800 = vsel %vm363, %v715, 0
      %v803 = vsel %vm363, %v716, 0
      %v806 = vsel %vm363, %v717, 0
      %v809 = vsel %vm363, %v718, 0
      %v812 = vsel %vm363, %v719, 0
      %v815 = vsel %vm363, %v720, 0
      %817 = vmatprep.subr.mxu0 0.0
      %818 = vmatpush1.msra.mxu0 %v321
      %819 = vmatprep.subr.mxu0 0.0
      %820 = vmatpush1.msra.mxu0 %v322
      %821 = vmatprep.subr.mxu0 0.0
      %822 = vmatpush1.msra.mxu0 %v323
      %823 = vmatprep.subr.mxu0 0.0
      %824 = vmatpush1.msra.mxu0 %v324
      %825 = vmatprep.subr.mxu0 0.0
      %826 = vmatpush1.msra.mxu0 %v325
      %827 = vmatprep.subr.mxu0 0.0
      %828 = vmatpush1.msra.mxu0 %v326
      %829 = vmatprep.subr.mxu0 0.0
      %830 = vmatpush1.msra.mxu0 %v327
      %831 = vmatprep.subr.mxu0 0.0
      %832 = vmatpush1.msra.mxu0 %v328
      %833 = vmatprep.subr.mxu0 0.0
      %834 = vmatpush1.msra.mxu0 %v329
      %835 = vmatprep.subr.mxu0 0.0
      %836 = vmatpush1.msra.mxu0 %v462
      %837 = vmatprep.subr.mxu0 0.0
      %838 = vmatpush1.msra.mxu0 0.0
      %839 = vmatprep.subr.mxu0 0.0
      %840 = vmatpush1.msra.mxu0 0.0
      %841 = vmatprep.subr.mxu0 0.0
      %842 = vmatpush1.msra.mxu0 0.0
      %843 = vmatprep.subr.mxu0 0.0
      %844 = vmatpush1.msra.mxu0 0.0
      %845 = vmatprep.subr.mxu0 0.0
      %846 = vmatpush1.msra.mxu0 0.0
      %847 = vmatprep.subr.mxu0 0.0
      %848 = vmatpush1.msra.mxu0 0.0
      %849 = vmatprep.subr.mxu0 0.0
      %850 = vmatpush1.msra.mxu0 0.0
      %851 = vmatprep.subr.mxu0 0.0
      %852 = vmatpush1.msra.mxu0 0.0
      %853 = vmatprep.subr.mxu0 0.0
      %854 = vmatpush1.msra.mxu0 0.0
      %855 = vmatprep.subr.mxu0 0.0
      %856 = vmatpush1.msra.mxu0 0.0
      %857 = vmatprep.subr.mxu0 0.0
      %858 = vmatpush1.msra.mxu0 0.0
      %859 = vmatprep.subr.mxu0 0.0
      %860 = vmatpush1.msra.mxu0 0.0
      %861 = vmatprep.subr.mxu0 0.0
      %862 = vmatpush1.msra.mxu0 0.0
      %863 = vmatprep.subr.mxu0 0.0
      %864 = vmatpush1.msra.mxu0 0.0
      %865 = vmatprep.subr.mxu0 0.0
      %866 = vmatpush1.msra.mxu0 0.0
      %867 = vmatprep.subr.mxu0 0.0
      %868 = vmatpush1.msra.mxu0 0.0
      %869 = vmatprep.subr.mxu0 0.0
      %870 = vmatpush1.msra.mxu0 0.0
      %871 = vmatprep.subr.mxu0 0.0
      %872 = vmatpush1.msra.mxu0 0.0
      %873 = vmatprep.subr.mxu0 0.0
      %874 = vmatpush1.msra.mxu0 0.0
      %875 = vmatprep.subr.mxu0 0.0
      %876 = vmatpush1.msra.mxu0 0.0
      %877 = vmatprep.subr.mxu0 0.0
      %878 = vmatpush1.msra.mxu0 0.0
      %879 = vmatprep.subr.mxu0 0.0
      %880 = vmatpush1.msra.mxu0 0.0
      %881 = vmatprep.mubr.f32.mxu0 0.0
      %882 = vmatmul.mubr.f32.gmra.mrb[0].mxu0 %v722
      %v883 = vpop.f32.mrb[0].mxu0
      %v884 = vadd.f32 0.0, %v883
      %v885 = vpop.f32.mrb[0].mxu0
      %886 = vmatprep.mubr.f32.mxu0 0.0
      %887 = vmatmul.mubr.f32.gmra.mrb[0].mxu0 %v725
      %v888 = vpop.f32.mrb[0].mxu0
      %v889 = vadd.f32 0.0, %v888
      %v890 = vpop.f32.mrb[0].mxu0
      %891 = vmatprep.mubr.f32.mxu0 0.0
      %892 = vmatmul.mubr.f32.gmra.mrb[0].mxu0 %v728
      %v893 = vpop.f32.mrb[0].mxu0
      %v894 = vadd.f32 0.0, %v893
      %v895 = vpop.f32.mrb[0].mxu0
      %896 = vmatprep.mubr.f32.mxu0 0.0
      %897 = vmatmul.mubr.f32.gmra.mrb[0].mxu0 %v731
      %v898 = vpop.f32.mrb[0].mxu0
      %v899 = vadd.f32 0.0, %v898
      %v900 = vpop.f32.mrb[0].mxu0
      %901 = vmatprep.mubr.f32.mxu0 0.0
      %902 = vmatmul.mubr.f32.gmra.mrb[0].mxu0 %v734
      %v903 = vpop.f32.mrb[0].mxu0
      %v904 = vadd.f32 0.0, %v903
      %v905 = vpop.f32.mrb[0].mxu0
      %906 = vmatprep.mubr.f32.mxu0 0.0
      %907 = vmatmul.mubr.f32.gmra.mrb[0].mxu0 %v737
      %v908 = vpop.f32.mrb[0].mxu0
      %v909 = vadd.f32 0.0, %v908
      %v910 = vpop.f32.mrb[0].mxu0
      %911 = vmatprep.mubr.f32.mxu0 0.0
      %912 = vmatmul.mubr.f32.gmra.mrb[0].mxu0 %v740
      %v913 = vpop.f32.mrb[0].mxu0
      %v914 = vadd.f32 0.0, %v913
      %v915 = vpop.f32.mrb[0].mxu0
      %916 = vmatprep.mubr.f32.mxu0 0.0
      %917 = vmatmul.mubr.f32.gmra.mrb[0].mxu0 %v743
      %v918 = vpop.f32.mrb[0].mxu0
      %v919 = vadd.f32 0.0, %v918
      %v920 = vpop.f32.mrb[0].mxu0
      %921 = vmatprep.mubr.f32.mxu0 0.0
      %922 = vmatmul.mubr.f32.gmra.mrb[0].mxu0 %v746
      %v923 = vpop.f32.mrb[0].mxu0
      %v924 = vadd.f32 0.0, %v923
      %v925 = vpop.f32.mrb[0].mxu0
      %926 = vmatprep.mubr.f32.mxu0 0.0
      %927 = vmatmul.mubr.f32.gmra.mrb[0].mxu0 %v749
      %v928 = vpop.f32.mrb[0].mxu0
      %v929 = vadd.f32 0.0, %v928
      %v930 = vpop.f32.mrb[0].mxu0
      %931 = vmatprep.mubr.f32.mxu0 0.0
      %932 = vmatmul.mubr.f32.gmra.mrb[0].mxu0 %v752
      %v933 = vpop.f32.mrb[0].mxu0
      %v934 = vadd.f32 0.0, %v933
      %v935 = vpop.f32.mrb[0].mxu0
      %936 = vmatprep.mubr.f32.mxu0 0.0
      %937 = vmatmul.mubr.f32.gmra.mrb[0].mxu0 %v755
      %v938 = vpop.f32.mrb[0].mxu0
      %v939 = vadd.f32 0.0, %v938
      %v940 = vpop.f32.mrb[0].mxu0
      %941 = vmatprep.mubr.f32.mxu0 0.0
      %942 = vmatmul.mubr.f32.gmra.mrb[0].mxu0 %v758
      %v943 = vpop.f32.mrb[0].mxu0
      %v944 = vadd.f32 0.0, %v943
      %v945 = vpop.f32.mrb[0].mxu0
      %946 = vmatprep.mubr.f32.mxu0 0.0
      %947 = vmatmul.mubr.f32.gmra.mrb[0].mxu0 %v761
      %v948 = vpop.f32.mrb[0].mxu0
      %v949 = vadd.f32 0.0, %v948
      %v950 = vpop.f32.mrb[0].mxu0
      %951 = vmatprep.mubr.f32.mxu0 0.0
      %952 = vmatmul.mubr.f32.gmra.mrb[0].mxu0 %v764
      %v953 = vpop.f32.mrb[0].mxu0
      %v954 = vadd.f32 0.0, %v953
      %v955 = vpop.f32.mrb[0].mxu0
      %956 = vmatprep.mubr.f32.mxu0 0.0
      %957 = vmatmul.mubr.f32.gmra.mrb[0].mxu0 %v767
      %v958 = vpop.f32.mrb[0].mxu0
      %v959 = vadd.f32 0.0, %v958
      %v960 = vpop.f32.mrb[0].mxu0
      %961 = vmatprep.mubr.f32.mxu0 0.0
      %962 = vmatmul.mubr.f32.gmra.mrb[0].mxu0 %v770
      %v963 = vpop.f32.mrb[0].mxu0
      %v964 = vadd.f32 0.0, %v963
      %v965 = vpop.f32.mrb[0].mxu0
      %966 = vmatprep.mubr.f32.mxu0 0.0
      %967 = vmatmul.mubr.f32.gmra.mrb[0].mxu0 %v773
      %v968 = vpop.f32.mrb[0].mxu0
      %v969 = vadd.f32 0.0, %v968
      %v970 = vpop.f32.mrb[0].mxu0
      %971 = vmatprep.mubr.f32.mxu0 0.0
      %972 = vmatmul.mubr.f32.gmra.mrb[0].mxu0 %v776
      %v973 = vpop.f32.mrb[0].mxu0
      %v974 = vadd.f32 0.0, %v973
      %v975 = vpop.f32.mrb[0].mxu0
      %976 = vmatprep.mubr.f32.mxu0 0.0
      %977 = vmatmul.mubr.f32.gmra.mrb[0].mxu0 %v779
      %v978 = vpop.f32.mrb[0].mxu0
      %v979 = vadd.f32 0.0, %v978
      %v980 = vpop.f32.mrb[0].mxu0
      %981 = vmatprep.mubr.f32.mxu0 0.0
      %982 = vmatmul.mubr.f32.gmra.mrb[0].mxu0 %v782
      %v983 = vpop.f32.mrb[0].mxu0
      %v984 = vadd.f32 0.0, %v983
      %v985 = vpop.f32.mrb[0].mxu0
      %986 = vmatprep.mubr.f32.mxu0 0.0
      %987 = vmatmul.mubr.f32.gmra.mrb[0].mxu0 %v785
      %v988 = vpop.f32.mrb[0].mxu0
      %v989 = vadd.f32 0.0, %v988
      %v990 = vpop.f32.mrb[0].mxu0
      %991 = vmatprep.mubr.f32.mxu0 0.0
      %992 = vmatmul.mubr.f32.gmra.mrb[0].mxu0 %v788
      %v993 = vpop.f32.mrb[0].mxu0
      %v994 = vadd.f32 0.0, %v993
      %v995 = vpop.f32.mrb[0].mxu0
      %996 = vmatprep.mubr.f32.mxu0 0.0
      %997 = vmatmul.mubr.f32.gmra.mrb[0].mxu0 %v791
      %v998 = vpop.f32.mrb[0].mxu0
      %v999 = vadd.f32 0.0, %v998
      %v1000 = vpop.f32.mrb[0].mxu0
      %1001 = vmatprep.mubr.f32.mxu0 0.0
      %1002 = vmatmul.mubr.f32.gmra.mrb[0].mxu0 %v794
      %v1003 = vpop.f32.mrb[0].mxu0
      %v1004 = vadd.f32 0.0, %v1003
      %v1005 = vpop.f32.mrb[0].mxu0
      %1006 = vmatprep.mubr.f32.mxu0 0.0
      %1007 = vmatmul.mubr.f32.gmra.mrb[0].mxu0 %v797
      %v1008 = vpop.f32.mrb[0].mxu0
      %v1009 = vadd.f32 0.0, %v1008
      %v1010 = vpop.f32.mrb[0].mxu0
      %1011 = vmatprep.mubr.f32.mxu0 0.0
      %1012 = vmatmul.mubr.f32.gmra.mrb[0].mxu0 %v800
      %v1013 = vpop.f32.mrb[0].mxu0
      %v1014 = vadd.f32 0.0, %v1013
      %v1015 = vpop.f32.mrb[0].mxu0
      %1016 = vmatprep.mubr.f32.mxu0 0.0
      %1017 = vmatmul.mubr.f32.gmra.mrb[0].mxu0 %v803
      %v1018 = vpop.f32.mrb[0].mxu0
      %v1019 = vadd.f32 0.0, %v1018
      %v1020 = vpop.f32.mrb[0].mxu0
      %1021 = vmatprep.mubr.f32.mxu0 0.0
      %1022 = vmatmul.mubr.f32.gmra.mrb[0].mxu0 %v806
      %v1023 = vpop.f32.mrb[0].mxu0
      %v1024 = vadd.f32 0.0, %v1023
      %v1025 = vpop.f32.mrb[0].mxu0
      %1026 = vmatprep.mubr.f32.mxu0 0.0
      %1027 = vmatmul.mubr.f32.gmra.mrb[0].mxu0 %v809
      %v1028 = vpop.f32.mrb[0].mxu0
      %v1029 = vadd.f32 0.0, %v1028
      %v1030 = vpop.f32.mrb[0].mxu0
      %1031 = vmatprep.mubr.f32.mxu0 0.0
      %1032 = vmatmul.mubr.f32.gmra.mrb[0].mxu0 %v812
      %v1033 = vpop.f32.mrb[0].mxu0
      %v1034 = vadd.f32 0.0, %v1033
      %v1035 = vpop.f32.mrb[0].mxu0
      %1036 = vmatprep.mubr.f32.mxu0 0.0
      %1037 = vmatmul.mubr.f32.gmra.mrb[0].mxu0 %v815
      %v1038 = vpop.f32.mrb[0].mxu0
      %v1039 = vadd.f32 0.0, %v1038
      %v1040 = vpop.f32.mrb[0].mxu0
      %1041 = vdwg.mxu0
      %v1042 = vmax.f32 %v531, %v884
      %v1043 = vmax.f32 %v536, %v889
      %v1044 = vmax.f32 %v541, %v894
      %v1045 = vmax.f32 %v546, %v899
      %v1046 = vmax.f32 %v551, %v904
      %v1047 = vmax.f32 %v556, %v909
      %v1048 = vmax.f32 %v561, %v914
      %v1049 = vmax.f32 %v566, %v919
      %v1050 = vmax.f32 %v571, %v924
      %v1051 = vmax.f32 %v576, %v929
      %v1052 = vmax.f32 %v581, %v934
      %v1053 = vmax.f32 %v586, %v939
      %v1054 = vmax.f32 %v591, %v944
      %v1055 = vmax.f32 %v596, %v949
      %v1056 = vmax.f32 %v601, %v954
      %v1057 = vmax.f32 %v606, %v959
      %v1058 = vmax.f32 %v611, %v964
      %v1059 = vmax.f32 %v616, %v969
      %v1060 = vmax.f32 %v621, %v974
      %v1061 = vmax.f32 %v626, %v979
      %v1062 = vmax.f32 %v631, %v984
      %v1063 = vmax.f32 %v636, %v989
      %v1064 = vmax.f32 %v641, %v994
      %v1065 = vmax.f32 %v646, %v999
      %v1066 = vmax.f32 %v651, %v1004
      %v1067 = vmax.f32 %v656, %v1009
      %v1068 = vmax.f32 %v661, %v1014
      %v1069 = vmax.f32 %v666, %v1019
      %v1070 = vmax.f32 %v671, %v1024
      %v1071 = vmax.f32 %v676, %v1029
      %v1072 = vmax.f32 %v681, %v1034
      %v1073 = vmax.f32 %v686, %v1039
      %v1074 = vld [vmem:[%s307] sm:$0xff]
      %v1075 = vld [vmem:[%s307 + $0x8] sm:$0xff]
      %v1076 = vld [vmem:[%s307 + $0x10] sm:$0xff]
      %v1077 = vld [vmem:[%s307 + $0x18] sm:$0xff]
      %v1078 = vld [vmem:[%s307 + $0x20] sm:$0xff]
      %v1079 = vld [vmem:[%s307 + $0x28] sm:$0xff]
      %v1080 = vld [vmem:[%s307 + $0x30] sm:$0xff]
      %v1081 = vld [vmem:[%s307 + $0x38] sm:$0xff]
      %v1082 = vld [vmem:[%s307 + $0x40] sm:$0xff]
      %v1083 = vld [vmem:[%s307 + $0x48] sm:$0xff]
      %v1084 = vld [vmem:[%s307 + $0x50] sm:$0xff]
      %v1085 = vld [vmem:[%s307 + $0x58] sm:$0xff]
      %v1086 = vld [vmem:[%s307 + $0x60] sm:$0xff]
      %v1087 = vld [vmem:[%s307 + $0x68] sm:$0xff]
      %v1088 = vld [vmem:[%s307 + $0x70] sm:$0xff]
      %v1089 = vld [vmem:[%s307 + $0x78] sm:$0xff]
      %v1090 = vld [vmem:[%s307 + $0x80] sm:$0xff]
      %v1091 = vld [vmem:[%s307 + $0x88] sm:$0xff]
      %v1092 = vld [vmem:[%s307 + $0x90] sm:$0xff]
      %v1093 = vld [vmem:[%s307 + $0x98] sm:$0xff]
      %v1094 = vld [vmem:[%s307 + $0xa0] sm:$0xff]
      %v1095 = vld [vmem:[%s307 + $0xa8] sm:$0xff]
      %v1096 = vld [vmem:[%s307 + $0xb0] sm:$0xff]
      %v1097 = vld [vmem:[%s307 + $0xb8] sm:$0xff]
      %v1098 = vld [vmem:[%s307 + $0xc0] sm:$0xff]
      %v1099 = vld [vmem:[%s307 + $0xc8] sm:$0xff]
      %v1100 = vld [vmem:[%s307 + $0xd0] sm:$0xff]
      %v1101 = vld [vmem:[%s307 + $0xd8] sm:$0xff]
      %v1102 = vld [vmem:[%s307 + $0xe0] sm:$0xff]
      %v1103 = vld [vmem:[%s307 + $0xe8] sm:$0xff]
      %v1104 = vld [vmem:[%s307 + $0xf0] sm:$0xff]
      %v1105 = vld [vmem:[%s307 + $0xf8] sm:$0xff]
      %v1107 = vsel %vm363, %v1074, 0
      %v1110 = vsel %vm363, %v1075, 0
      %v1113 = vsel %vm363, %v1076, 0
      %v1116 = vsel %vm363, %v1077, 0
      %v1119 = vsel %vm363, %v1078, 0
      %v1122 = vsel %vm363, %v1079, 0
      %v1125 = vsel %vm363, %v1080, 0
      %v1128 = vsel %vm363, %v1081, 0
      %v1131 = vsel %vm363, %v1082, 0
      %v1134 = vsel %vm363, %v1083, 0
      %v1137 = vsel %vm363, %v1084, 0
      %v1140 = vsel %vm363, %v1085, 0
      %v1143 = vsel %vm363, %v1086, 0
      %v1146 = vsel %vm363, %v1087, 0
      %v1149 = vsel %vm363, %v1088, 0
      %v1152 = vsel %vm363, %v1089, 0
      %v1155 = vsel %vm363, %v1090, 0
      %v1158 = vsel %vm363, %v1091, 0
      %v1161 = vsel %vm363, %v1092, 0
      %v1164 = vsel %vm363, %v1093, 0
      %v1167 = vsel %vm363, %v1094, 0
      %v1170 = vsel %vm363, %v1095, 0
      %v1173 = vsel %vm363, %v1096, 0
      %v1176 = vsel %vm363, %v1097, 0
      %v1179 = vsel %vm363, %v1098, 0
      %v1182 = vsel %vm363, %v1099, 0
      %v1185 = vsel %vm363, %v1100, 0
      %v1188 = vsel %vm363, %v1101, 0
      %v1191 = vsel %vm363, %v1102, 0
      %v1194 = vsel %vm363, %v1103, 0
      %v1197 = vsel %vm363, %v1104, 0
      %v1200 = vsel %vm363, %v1105, 0
      %1202 = vmatprep.subr.mxu0 0.0
      %1203 = vmatpush1.msra.mxu0 %v321
      %1204 = vmatprep.subr.mxu0 0.0
      %1205 = vmatpush1.msra.mxu0 %v322
      %1206 = vmatprep.subr.mxu0 0.0
      %1207 = vmatpush1.msra.mxu0 %v323
      %1208 = vmatprep.subr.mxu0 0.0
      %1209 = vmatpush1.msra.mxu0 %v324
      %1210 = vmatprep.subr.mxu0 0.0
      %1211 = vmatpush1.msra.mxu0 %v325
      %1212 = vmatprep.subr.mxu0 0.0
      %1213 = vmatpush1.msra.mxu0 %v326
      %1214 = vmatprep.subr.mxu0 0.0
      %1215 = vmatpush1.msra.mxu0 %v327
      %1216 = vmatprep.subr.mxu0 0.0
      %1217 = vmatpush1.msra.mxu0 %v328
      %1218 = vmatprep.subr.mxu0 0.0
      %1219 = vmatpush1.msra.mxu0 %v329
      %1220 = vmatprep.subr.mxu0 0.0
      %1221 = vmatpush1.msra.mxu0 %v462
      %1222 = vmatprep.subr.mxu0 0.0
      %1223 = vmatpush1.msra.mxu0 0.0
      %1224 = vmatprep.subr.mxu0 0.0
      %1225 = vmatpush1.msra.mxu0 0.0
      %1226 = vmatprep.subr.mxu0 0.0
      %1227 = vmatpush1.msra.mxu0 0.0
      %1228 = vmatprep.subr.mxu0 0.0
      %1229 = vmatpush1.msra.mxu0 0.0
      %1230 = vmatprep.subr.mxu0 0.0
      %1231 = vmatpush1.msra.mxu0 0.0
      %1232 = vmatprep.subr.mxu0 0.0
      %1233 = vmatpush1.msra.mxu0 0.0
      %1234 = vmatprep.subr.mxu0 0.0
      %1235 = vmatpush1.msra.mxu0 0.0
      %1236 = vmatprep.subr.mxu0 0.0
      %1237 = vmatpush1.msra.mxu0 0.0
      %1238 = vmatprep.subr.mxu0 0.0
      %1239 = vmatpush1.msra.mxu0 0.0
      %1240 = vmatprep.subr.mxu0 0.0
      %1241 = vmatpush1.msra.mxu0 0.0
      %1242 = vmatprep.subr.mxu0 0.0
      %1243 = vmatpush1.msra.mxu0 0.0
      %1244 = vmatprep.subr.mxu0 0.0
      %1245 = vmatpush1.msra.mxu0 0.0
      %1246 = vmatprep.subr.mxu0 0.0
      %1247 = vmatpush1.msra.mxu0 0.0
      %1248 = vmatprep.subr.mxu0 0.0
      %1249 = vmatpush1.msra.mxu0 0.0
      %1250 = vmatprep.subr.mxu0 0.0
      %1251 = vmatpush1.msra.mxu0 0.0
      %1252 = vmatprep.subr.mxu0 0.0
      %1253 = vmatpush1.msra.mxu0 0.0
      %1254 = vmatprep.subr.mxu0 0.0
      %1255 = vmatpush1.msra.mxu0 0.0
      %1256 = vmatprep.subr.mxu0 0.0
      %1257 = vmatpush1.msra.mxu0 0.0
      %1258 = vmatprep.subr.mxu0 0.0
      %1259 = vmatpush1.msra.mxu0 0.0
      %1260 = vmatprep.subr.mxu0 0.0
      %1261 = vmatpush1.msra.mxu0 0.0
      %1262 = vmatprep.subr.mxu0 0.0
      %1263 = vmatpush1.msra.mxu0 0.0
      %1264 = vmatprep.subr.mxu0 0.0
      %1265 = vmatpush1.msra.mxu0 0.0
      %1266 = vmatprep.mubr.f32.mxu0 0.0
      %1267 = vmatmul.mubr.f32.gmra.mrb[0].mxu0 %v1107
      %v1268 = vpop.f32.mrb[0].mxu0
      %v1269 = vadd.f32 0.0, %v1268
      %v1270 = vpop.f32.mrb[0].mxu0
      %1271 = vmatprep.mubr.f32.mxu0 0.0
      %1272 = vmatmul.mubr.f32.gmra.mrb[0].mxu0 %v1110
      %v1273 = vpop.f32.mrb[0].mxu0
      %v1274 = vadd.f32 0.0, %v1273
      %v1275 = vpop.f32.mrb[0].mxu0
      %1276 = vmatprep.mubr.f32.mxu0 0.0
      %1277 = vmatmul.mubr.f32.gmra.mrb[0].mxu0 %v1113
      %v1278 = vpop.f32.mrb[0].mxu0
      %v1279 = vadd.f32 0.0, %v1278
      %v1280 = vpop.f32.mrb[0].mxu0
      %1281 = vmatprep.mubr.f32.mxu0 0.0
      %1282 = vmatmul.mubr.f32.gmra.mrb[0].mxu0 %v1116
      %v1283 = vpop.f32.mrb[0].mxu0
      %v1284 = vadd.f32 0.0, %v1283
      %v1285 = vpop.f32.mrb[0].mxu0
      %1286 = vmatprep.mubr.f32.mxu0 0.0
      %1287 = vmatmul.mubr.f32.gmra.mrb[0].mxu0 %v1119
      %v1288 = vpop.f32.mrb[0].mxu0
      %v1289 = vadd.f32 0.0, %v1288
      %v1290 = vpop.f32.mrb[0].mxu0
      %1291 = vmatprep.mubr.f32.mxu0 0.0
      %1292 = vmatmul.mubr.f32.gmra.mrb[0].mxu0 %v1122
      %v1293 = vpop.f32.mrb[0].mxu0
      %v1294 = vadd.f32 0.0, %v1293
      %v1295 = vpop.f32.mrb[0].mxu0
      %1296 = vmatprep.mubr.f32.mxu0 0.0
      %1297 = vmatmul.mubr.f32.gmra.mrb[0].mxu0 %v1125
      %v1298 = vpop.f32.mrb[0].mxu0
      %v1299 = vadd.f32 0.0, %v1298
      %v1300 = vpop.f32.mrb[0].mxu0
      %1301 = vmatprep.mubr.f32.mxu0 0.0
      %1302 = vmatmul.mubr.f32.gmra.mrb[0].mxu0 %v1128
      %v1303 = vpop.f32.mrb[0].mxu0
      %v1304 = vadd.f32 0.0, %v1303
      %v1305 = vpop.f32.mrb[0].mxu0
      %1306 = vmatprep.mubr.f32.mxu0 0.0
      %1307 = vmatmul.mubr.f32.gmra.mrb[0].mxu0 %v1131
      %v1308 = vpop.f32.mrb[0].mxu0
      %v1309 = vadd.f32 0.0, %v1308
      %v1310 = vpop.f32.mrb[0].mxu0
      %1311 = vmatprep.mubr.f32.mxu0 0.0
      %1312 = vmatmul.mubr.f32.gmra.mrb[0].mxu0 %v1134
      %v1313 = vpop.f32.mrb[0].mxu0
      %v1314 = vadd.f32 0.0, %v1313
      %v1315 = vpop.f32.mrb[0].mxu0
      %1316 = vmatprep.mubr.f32.mxu0 0.0
      %1317 = vmatmul.mubr.f32.gmra.mrb[0].mxu0 %v1137
      %v1318 = vpop.f32.mrb[0].mxu0
      %v1319 = vadd.f32 0.0, %v1318
      %v1320 = vpop.f32.mrb[0].mxu0
      %1321 = vmatprep.mubr.f32.mxu0 0.0
      %1322 = vmatmul.mubr.f32.gmra.mrb[0].mxu0 %v1140
      %v1323 = vpop.f32.mrb[0].mxu0
      %v1324 = vadd.f32 0.0, %v1323
      %v1325 = vpop.f32.mrb[0].mxu0
      %1326 = vmatprep.mubr.f32.mxu0 0.0
      %1327 = vmatmul.mubr.f32.gmra.mrb[0].mxu0 %v1143
      %v1328 = vpop.f32.mrb[0].mxu0
      %v1329 = vadd.f32 0.0, %v1328
      %v1330 = vpop.f32.mrb[0].mxu0
      %1331 = vmatprep.mubr.f32.mxu0 0.0
      %1332 = vmatmul.mubr.f32.gmra.mrb[0].mxu0 %v1146
      %v1333 = vpop.f32.mrb[0].mxu0
      %v1334 = vadd.f32 0.0, %v1333
      %v1335 = vpop.f32.mrb[0].mxu0
      %1336 = vmatprep.mubr.f32.mxu0 0.0
      %1337 = vmatmul.mubr.f32.gmra.mrb[0].mxu0 %v1149
      %v1338 = vpop.f32.mrb[0].mxu0
      %v1339 = vadd.f32 0.0, %v1338
      %v1340 = vpop.f32.mrb[0].mxu0
      %1341 = vmatprep.mubr.f32.mxu0 0.0
      %1342 = vmatmul.mubr.f32.gmra.mrb[0].mxu0 %v1152
      %v1343 = vpop.f32.mrb[0].mxu0
      %v1344 = vadd.f32 0.0, %v1343
      %v1345 = vpop.f32.mrb[0].mxu0
      %1346 = vmatprep.mubr.f32.mxu0 0.0
      %1347 = vmatmul.mubr.f32.gmra.mrb[0].mxu0 %v1155
      %v1348 = vpop.f32.mrb[0].mxu0
      %v1349 = vadd.f32 0.0, %v1348
      %v1350 = vpop.f32.mrb[0].mxu0
      %1351 = vmatprep.mubr.f32.mxu0 0.0
      %1352 = vmatmul.mubr.f32.gmra.mrb[0].mxu0 %v1158
      %v1353 = vpop.f32.mrb[0].mxu0
      %v1354 = vadd.f32 0.0, %v1353
      %v1355 = vpop.f32.mrb[0].mxu0
      %1356 = vmatprep.mubr.f32.mxu0 0.0
      %1357 = vmatmul.mubr.f32.gmra.mrb[0].mxu0 %v1161
      %v1358 = vpop.f32.mrb[0].mxu0
      %v1359 = vadd.f32 0.0, %v1358
      %v1360 = vpop.f32.mrb[0].mxu0
      %1361 = vmatprep.mubr.f32.mxu0 0.0
      %1362 = vmatmul.mubr.f32.gmra.mrb[0].mxu0 %v1164
      %v1363 = vpop.f32.mrb[0].mxu0
      %v1364 = vadd.f32 0.0, %v1363
      %v1365 = vpop.f32.mrb[0].mxu0
      %1366 = vmatprep.mubr.f32.mxu0 0.0
      %1367 = vmatmul.mubr.f32.gmra.mrb[0].mxu0 %v1167
      %v1368 = vpop.f32.mrb[0].mxu0
      %v1369 = vadd.f32 0.0, %v1368
      %v1370 = vpop.f32.mrb[0].mxu0
      %1371 = vmatprep.mubr.f32.mxu0 0.0
      %1372 = vmatmul.mubr.f32.gmra.mrb[0].mxu0 %v1170
      %v1373 = vpop.f32.mrb[0].mxu0
      %v1374 = vadd.f32 0.0, %v1373
      %v1375 = vpop.f32.mrb[0].mxu0
      %1376 = vmatprep.mubr.f32.mxu0 0.0
      %1377 = vmatmul.mubr.f32.gmra.mrb[0].mxu0 %v1173
      %v1378 = vpop.f32.mrb[0].mxu0
      %v1379 = vadd.f32 0.0, %v1378
      %v1380 = vpop.f32.mrb[0].mxu0
      %1381 = vmatprep.mubr.f32.mxu0 0.0
      %1382 = vmatmul.mubr.f32.gmra.mrb[0].mxu0 %v1176
      %v1383 = vpop.f32.mrb[0].mxu0
      %v1384 = vadd.f32 0.0, %v1383
      %v1385 = vpop.f32.mrb[0].mxu0
      %1386 = vmatprep.mubr.f32.mxu0 0.0
      %1387 = vmatmul.mubr.f32.gmra.mrb[0].mxu0 %v1179
      %v1388 = vpop.f32.mrb[0].mxu0
      %v1389 = vadd.f32 0.0, %v1388
      %v1390 = vpop.f32.mrb[0].mxu0
      %1391 = vmatprep.mubr.f32.mxu0 0.0
      %1392 = vmatmul.mubr.f32.gmra.mrb[0].mxu0 %v1182
      %v1393 = vpop.f32.mrb[0].mxu0
      %v1394 = vadd.f32 0.0, %v1393
      %v1395 = vpop.f32.mrb[0].mxu0
      %1396 = vmatprep.mubr.f32.mxu0 0.0
      %1397 = vmatmul.mubr.f32.gmra.mrb[0].mxu0 %v1185
      %v1398 = vpop.f32.mrb[0].mxu0
      %v1399 = vadd.f32 0.0, %v1398
      %v1400 = vpop.f32.mrb[0].mxu0
      %1401 = vmatprep.mubr.f32.mxu0 0.0
      %1402 = vmatmul.mubr.f32.gmra.mrb[0].mxu0 %v1188
      %v1403 = vpop.f32.mrb[0].mxu0
      %v1404 = vadd.f32 0.0, %v1403
      %v1405 = vpop.f32.mrb[0].mxu0
      %1406 = vmatprep.mubr.f32.mxu0 0.0
      %1407 = vmatmul.mubr.f32.gmra.mrb[0].mxu0 %v1191
      %v1408 = vpop.f32.mrb[0].mxu0
      %v1409 = vadd.f32 0.0, %v1408
      %v1410 = vpop.f32.mrb[0].mxu0
      %1411 = vmatprep.mubr.f32.mxu0 0.0
      %1412 = vmatmul.mubr.f32.gmra.mrb[0].mxu0 %v1194
      %v1413 = vpop.f32.mrb[0].mxu0
      %v1414 = vadd.f32 0.0, %v1413
      %v1415 = vpop.f32.mrb[0].mxu0
      %1416 = vmatprep.mubr.f32.mxu0 0.0
      %1417 = vmatmul.mubr.f32.gmra.mrb[0].mxu0 %v1197
      %v1418 = vpop.f32.mrb[0].mxu0
      %v1419 = vadd.f32 0.0, %v1418
      %v1420 = vpop.f32.mrb[0].mxu0
      %1421 = vmatprep.mubr.f32.mxu0 0.0
      %1422 = vmatmul.mubr.f32.gmra.mrb[0].mxu0 %v1200
      %v1423 = vpop.f32.mrb[0].mxu0
      %v1424 = vadd.f32 0.0, %v1423
      %v1425 = vpop.f32.mrb[0].mxu0
      %1426 = vdwg.mxu0
      %v1427 = vld [vmem:[%s313] sm:$0xff]
      %v1428 = vld [vmem:[%s313 + $0x8] sm:$0xff]
      %v1429 = vld [vmem:[%s313 + $0x10] sm:$0xff]
      %v1430 = vld [vmem:[%s313 + $0x18] sm:$0xff]
      %v1431 = vld [vmem:[%s313 + $0x20] sm:$0xff]
      %v1432 = vld [vmem:[%s313 + $0x28] sm:$0xff]
      %v1433 = vld [vmem:[%s313 + $0x30] sm:$0xff]
      %v1434 = vld [vmem:[%s313 + $0x38] sm:$0xff]
      %v1435 = vld [vmem:[%s313 + $0x40] sm:$0xff]
      %v1436 = vld [vmem:[%s313 + $0x48] sm:$0xff]
      %v1437 = vld [vmem:[%s313 + $0x50] sm:$0xff]
      %v1438 = vld [vmem:[%s313 + $0x58] sm:$0xff]
      %v1439 = vld [vmem:[%s313 + $0x60] sm:$0xff]
      %v1440 = vld [vmem:[%s313 + $0x68] sm:$0xff]
      %v1441 = vld [vmem:[%s313 + $0x70] sm:$0xff]
      %v1442 = vld [vmem:[%s313 + $0x78] sm:$0xff]
      %v1443 = vld [vmem:[%s313 + $0x80] sm:$0xff]
      %v1444 = vld [vmem:[%s313 + $0x88] sm:$0xff]
      %v1445 = vld [vmem:[%s313 + $0x90] sm:$0xff]
      %v1446 = vld [vmem:[%s313 + $0x98] sm:$0xff]
      %v1447 = vld [vmem:[%s313 + $0xa0] sm:$0xff]
      %v1448 = vld [vmem:[%s313 + $0xa8] sm:$0xff]
      %v1449 = vld [vmem:[%s313 + $0xb0] sm:$0xff]
      %v1450 = vld [vmem:[%s313 + $0xb8] sm:$0xff]
      %v1451 = vld [vmem:[%s313 + $0xc0] sm:$0xff]
      %v1452 = vld [vmem:[%s313 + $0xc8] sm:$0xff]
      %v1453 = vld [vmem:[%s313 + $0xd0] sm:$0xff]
      %v1454 = vld [vmem:[%s313 + $0xd8] sm:$0xff]
      %v1455 = vld [vmem:[%s313 + $0xe0] sm:$0xff]
      %v1456 = vld [vmem:[%s313 + $0xe8] sm:$0xff]
      %v1457 = vld [vmem:[%s313 + $0xf0] sm:$0xff]
      %v1458 = vld [vmem:[%s313 + $0xf8] sm:$0xff]
      %v1460 = vsel %vm363, %v1427, 0
      %v1463 = vsel %vm363, %v1428, 0
      %v1466 = vsel %vm363, %v1429, 0
      %v1469 = vsel %vm363, %v1430, 0
      %v1472 = vsel %vm363, %v1431, 0
      %v1475 = vsel %vm363, %v1432, 0
      %v1478 = vsel %vm363, %v1433, 0
      %v1481 = vsel %vm363, %v1434, 0
      %v1484 = vsel %vm363, %v1435, 0
      %v1487 = vsel %vm363, %v1436, 0
      %v1490 = vsel %vm363, %v1437, 0
      %v1493 = vsel %vm363, %v1438, 0
      %v1496 = vsel %vm363, %v1439, 0
      %v1499 = vsel %vm363, %v1440, 0
      %v1502 = vsel %vm363, %v1441, 0
      %v1505 = vsel %vm363, %v1442, 0
      %v1508 = vsel %vm363, %v1443, 0
      %v1511 = vsel %vm363, %v1444, 0
      %v1514 = vsel %vm363, %v1445, 0
      %v1517 = vsel %vm363, %v1446, 0
      %v1520 = vsel %vm363, %v1447, 0
      %v1523 = vsel %vm363, %v1448, 0
      %v1526 = vsel %vm363, %v1449, 0
      %v1529 = vsel %vm363, %v1450, 0
      %v1532 = vsel %vm363, %v1451, 0
      %v1535 = vsel %vm363, %v1452, 0
      %v1538 = vsel %vm363, %v1453, 0
      %v1541 = vsel %vm363, %v1454, 0
      %v1544 = vsel %vm363, %v1455, 0
      %v1547 = vsel %vm363, %v1456, 0
      %v1550 = vsel %vm363, %v1457, 0
      %v1553 = vsel %vm363, %v1458, 0
      %1555 = vmatprep.subr.mxu0 0.0
      %1556 = vmatpush1.msra.mxu0 %v321
      %1557 = vmatprep.subr.mxu0 0.0
      %1558 = vmatpush1.msra.mxu0 %v322
      %1559 = vmatprep.subr.mxu0 0.0
      %1560 = vmatpush1.msra.mxu0 %v323
      %1561 = vmatprep.subr.mxu0 0.0
      %1562 = vmatpush1.msra.mxu0 %v324
      %1563 = vmatprep.subr.mxu0 0.0
      %1564 = vmatpush1.msra.mxu0 %v325
      %1565 = vmatprep.subr.mxu0 0.0
      %1566 = vmatpush1.msra.mxu0 %v326
      %1567 = vmatprep.subr.mxu0 0.0
      %1568 = vmatpush1.msra.mxu0 %v327
      %1569 = vmatprep.subr.mxu0 0.0
      %1570 = vmatpush1.msra.mxu0 %v328
      %1571 = vmatprep.subr.mxu0 0.0
      %1572 = vmatpush1.msra.mxu0 %v329
      %1573 = vmatprep.subr.mxu0 0.0
      %1574 = vmatpush1.msra.mxu0 %v462
      %1575 = vmatprep.subr.mxu0 0.0
      %1576 = vmatpush1.msra.mxu0 0.0
      %1577 = vmatprep.subr.mxu0 0.0
      %1578 = vmatpush1.msra.mxu0 0.0
      %1579 = vmatprep.subr.mxu0 0.0
      %1580 = vmatpush1.msra.mxu0 0.0
      %1581 = vmatprep.subr.mxu0 0.0
      %1582 = vmatpush1.msra.mxu0 0.0
      %1583 = vmatprep.subr.mxu0 0.0
      %1584 = vmatpush1.msra.mxu0 0.0
      %1585 = vmatprep.subr.mxu0 0.0
      %1586 = vmatpush1.msra.mxu0 0.0
      %1587 = vmatprep.subr.mxu0 0.0
      %1588 = vmatpush1.msra.mxu0 0.0
      %1589 = vmatprep.subr.mxu0 0.0
      %1590 = vmatpush1.msra.mxu0 0.0
      %1591 = vmatprep.subr.mxu0 0.0
      %1592 = vmatpush1.msra.mxu0 0.0
      %1593 = vmatprep.subr.mxu0 0.0
      %1594 = vmatpush1.msra.mxu0 0.0
      %1595 = vmatprep.subr.mxu0 0.0
      %1596 = vmatpush1.msra.mxu0 0.0
      %1597 = vmatprep.subr.mxu0 0.0
      %1598 = vmatpush1.msra.mxu0 0.0
      %1599 = vmatprep.subr.mxu0 0.0
      %1600 = vmatpush1.msra.mxu0 0.0
      %1601 = vmatprep.subr.mxu0 0.0
      %1602 = vmatpush1.msra.mxu0 0.0
      %1603 = vmatprep.subr.mxu0 0.0
      %1604 = vmatpush1.msra.mxu0 0.0
      %1605 = vmatprep.subr.mxu0 0.0
      %1606 = vmatpush1.msra.mxu0 0.0
      %1607 = vmatprep.subr.mxu0 0.0
      %1608 = vmatpush1.msra.mxu0 0.0
      %1609 = vmatprep.subr.mxu0 0.0
      %1610 = vmatpush1.msra.mxu0 0.0
      %1611 = vmatprep.subr.mxu0 0.0
      %1612 = vmatpush1.msra.mxu0 0.0
      %1613 = vmatprep.subr.mxu0 0.0
      %1614 = vmatpush1.msra.mxu0 0.0
      %1615 = vmatprep.subr.mxu0 0.0
      %1616 = vmatpush1.msra.mxu0 0.0
      %1617 = vmatprep.subr.mxu0 0.0
      %1618 = vmatpush1.msra.mxu0 0.0
      %1619 = vmatprep.mubr.f32.mxu0 0.0
      %1620 = vmatmul.mubr.f32.gmra.mrb[0].mxu0 %v1460
      %v1621 = vpop.f32.mrb[0].mxu0
      %v1622 = vadd.f32 0.0, %v1621
      %v1623 = vpop.f32.mrb[0].mxu0
      %1624 = vmatprep.mubr.f32.mxu0 0.0
      %1625 = vmatmul.mubr.f32.gmra.mrb[0].mxu0 %v1463
      %v1626 = vpop.f32.mrb[0].mxu0
      %v1627 = vadd.f32 0.0, %v1626
      %v1628 = vpop.f32.mrb[0].mxu0
      %1629 = vmatprep.mubr.f32.mxu0 0.0
      %1630 = vmatmul.mubr.f32.gmra.mrb[0].mxu0 %v1466
      %v1631 = vpop.f32.mrb[0].mxu0
      %v1632 = vadd.f32 0.0, %v1631
      %v1633 = vpop.f32.mrb[0].mxu0
      %1634 = vmatprep.mubr.f32.mxu0 0.0
      %1635 = vmatmul.mubr.f32.gmra.mrb[0].mxu0 %v1469
      %v1636 = vpop.f32.mrb[0].mxu0
      %v1637 = vadd.f32 0.0, %v1636
      %v1638 = vpop.f32.mrb[0].mxu0
      %1639 = vmatprep.mubr.f32.mxu0 0.0
      %1640 = vmatmul.mubr.f32.gmra.mrb[0].mxu0 %v1472
      %v1641 = vpop.f32.mrb[0].mxu0
      %v1642 = vadd.f32 0.0, %v1641
      %v1643 = vpop.f32.mrb[0].mxu0
      %1644 = vmatprep.mubr.f32.mxu0 0.0
      %1645 = vmatmul.mubr.f32.gmra.mrb[0].mxu0 %v1475
      %v1646 = vpop.f32.mrb[0].mxu0
      %v1647 = vadd.f32 0.0, %v1646
      %v1648 = vpop.f32.mrb[0].mxu0
      %1649 = vmatprep.mubr.f32.mxu0 0.0
      %1650 = vmatmul.mubr.f32.gmra.mrb[0].mxu0 %v1478
      %v1651 = vpop.f32.mrb[0].mxu0
      %v1652 = vadd.f32 0.0, %v1651
      %v1653 = vpop.f32.mrb[0].mxu0
      %1654 = vmatprep.mubr.f32.mxu0 0.0
      %1655 = vmatmul.mubr.f32.gmra.mrb[0].mxu0 %v1481
      %v1656 = vpop.f32.mrb[0].mxu0
      %v1657 = vadd.f32 0.0, %v1656
      %v1658 = vpop.f32.mrb[0].mxu0
      %1659 = vmatprep.mubr.f32.mxu0 0.0
      %1660 = vmatmul.mubr.f32.gmra.mrb[0].mxu0 %v1484
      %v1661 = vpop.f32.mrb[0].mxu0
      %v1662 = vadd.f32 0.0, %v1661
      %v1663 = vpop.f32.mrb[0].mxu0
      %1664 = vmatprep.mubr.f32.mxu0 0.0
      %1665 = vmatmul.mubr.f32.gmra.mrb[0].mxu0 %v1487
      %v1666 = vpop.f32.mrb[0].mxu0
      %v1667 = vadd.f32 0.0, %v1666
      %v1668 = vpop.f32.mrb[0].mxu0
      %1669 = vmatprep.mubr.f32.mxu0 0.0
      %1670 = vmatmul.mubr.f32.gmra.mrb[0].mxu0 %v1490
      %v1671 = vpop.f32.mrb[0].mxu0
      %v1672 = vadd.f32 0.0, %v1671
      %v1673 = vpop.f32.mrb[0].mxu0
      %1674 = vmatprep.mubr.f32.mxu0 0.0
      %1675 = vmatmul.mubr.f32.gmra.mrb[0].mxu0 %v1493
      %v1676 = vpop.f32.mrb[0].mxu0
      %v1677 = vadd.f32 0.0, %v1676
      %v1678 = vpop.f32.mrb[0].mxu0
      %1679 = vmatprep.mubr.f32.mxu0 0.0
      %1680 = vmatmul.mubr.f32.gmra.mrb[0].mxu0 %v1496
      %v1681 = vpop.f32.mrb[0].mxu0
      %v1682 = vadd.f32 0.0, %v1681
      %v1683 = vpop.f32.mrb[0].mxu0
      %1684 = vmatprep.mubr.f32.mxu0 0.0
      %1685 = vmatmul.mubr.f32.gmra.mrb[0].mxu0 %v1499
      %v1686 = vpop.f32.mrb[0].mxu0
      %v1687 = vadd.f32 0.0, %v1686
      %v1688 = vpop.f32.mrb[0].mxu0
      %1689 = vmatprep.mubr.f32.mxu0 0.0
      %1690 = vmatmul.mubr.f32.gmra.mrb[0].mxu0 %v1502
      %v1691 = vpop.f32.mrb[0].mxu0
      %v1692 = vadd.f32 0.0, %v1691
      %v1693 = vpop.f32.mrb[0].mxu0
      %1694 = vmatprep.mubr.f32.mxu0 0.0
      %1695 = vmatmul.mubr.f32.gmra.mrb[0].mxu0 %v1505
      %v1696 = vpop.f32.mrb[0].mxu0
      %v1697 = vadd.f32 0.0, %v1696
      %v1698 = vpop.f32.mrb[0].mxu0
      %1699 = vmatprep.mubr.f32.mxu0 0.0
      %1700 = vmatmul.mubr.f32.gmra.mrb[0].mxu0 %v1508
      %v1701 = vpop.f32.mrb[0].mxu0
      %v1702 = vadd.f32 0.0, %v1701
      %v1703 = vpop.f32.mrb[0].mxu0
      %1704 = vmatprep.mubr.f32.mxu0 0.0
      %1705 = vmatmul.mubr.f32.gmra.mrb[0].mxu0 %v1511
      %v1706 = vpop.f32.mrb[0].mxu0
      %v1707 = vadd.f32 0.0, %v1706
      %v1708 = vpop.f32.mrb[0].mxu0
      %1709 = vmatprep.mubr.f32.mxu0 0.0
      %1710 = vmatmul.mubr.f32.gmra.mrb[0].mxu0 %v1514
      %v1711 = vpop.f32.mrb[0].mxu0
      %v1712 = vadd.f32 0.0, %v1711
      %v1713 = vpop.f32.mrb[0].mxu0
      %1714 = vmatprep.mubr.f32.mxu0 0.0
      %1715 = vmatmul.mubr.f32.gmra.mrb[0].mxu0 %v1517
      %v1716 = vpop.f32.mrb[0].mxu0
      %v1717 = vadd.f32 0.0, %v1716
      %v1718 = vpop.f32.mrb[0].mxu0
      %1719 = vmatprep.mubr.f32.mxu0 0.0
      %1720 = vmatmul.mubr.f32.gmra.mrb[0].mxu0 %v1520
      %v1721 = vpop.f32.mrb[0].mxu0
      %v1722 = vadd.f32 0.0, %v1721
      %v1723 = vpop.f32.mrb[0].mxu0
      %1724 = vmatprep.mubr.f32.mxu0 0.0
      %1725 = vmatmul.mubr.f32.gmra.mrb[0].mxu0 %v1523
      %v1726 = vpop.f32.mrb[0].mxu0
      %v1727 = vadd.f32 0.0, %v1726
      %v1728 = vpop.f32.mrb[0].mxu0
      %1729 = vmatprep.mubr.f32.mxu0 0.0
      %1730 = vmatmul.mubr.f32.gmra.mrb[0].mxu0 %v1526
      %v1731 = vpop.f32.mrb[0].mxu0
      %v1732 = vadd.f32 0.0, %v1731
      %v1733 = vpop.f32.mrb[0].mxu0
      %1734 = vmatprep.mubr.f32.mxu0 0.0
      %1735 = vmatmul.mubr.f32.gmra.mrb[0].mxu0 %v1529
      %v1736 = vpop.f32.mrb[0].mxu0
      %v1737 = vadd.f32 0.0, %v1736
      %v1738 = vpop.f32.mrb[0].mxu0
      %1739 = vmatprep.mubr.f32.mxu0 0.0
      %1740 = vmatmul.mubr.f32.gmra.mrb[0].mxu0 %v1532
      %v1741 = vpop.f32.mrb[0].mxu0
      %v1742 = vadd.f32 0.0, %v1741
      %v1743 = vpop.f32.mrb[0].mxu0
      %1744 = vmatprep.mubr.f32.mxu0 0.0
      %1745 = vmatmul.mubr.f32.gmra.mrb[0].mxu0 %v1535
      %v1746 = vpop.f32.mrb[0].mxu0
      %v1747 = vadd.f32 0.0, %v1746
      %v1748 = vpop.f32.mrb[0].mxu0
      %1749 = vmatprep.mubr.f32.mxu0 0.0
      %1750 = vmatmul.mubr.f32.gmra.mrb[0].mxu0 %v1538
      %v1751 = vpop.f32.mrb[0].mxu0
      %v1752 = vadd.f32 0.0, %v1751
      %v1753 = vpop.f32.mrb[0].mxu0
      %1754 = vmatprep.mubr.f32.mxu0 0.0
      %1755 = vmatmul.mubr.f32.gmra.mrb[0].mxu0 %v1541
      %v1756 = vpop.f32.mrb[0].mxu0
      %v1757 = vadd.f32 0.0, %v1756
      %v1758 = vpop.f32.mrb[0].mxu0
      %1759 = vmatprep.mubr.f32.mxu0 0.0
      %1760 = vmatmul.mubr.f32.gmra.mrb[0].mxu0 %v1544
      %v1761 = vpop.f32.mrb[0].mxu0
      %v1762 = vadd.f32 0.0, %v1761
      %v1763 = vpop.f32.mrb[0].mxu0
      %1764 = vmatprep.mubr.f32.mxu0 0.0
      %1765 = vmatmul.mubr.f32.gmra.mrb[0].mxu0 %v1547
      %v1766 = vpop.f32.mrb[0].mxu0
      %v1767 = vadd.f32 0.0, %v1766
      %v1768 = vpop.f32.mrb[0].mxu0
      %1769 = vmatprep.mubr.f32.mxu0 0.0
      %1770 = vmatmul.mubr.f32.gmra.mrb[0].mxu0 %v1550
      %v1771 = vpop.f32.mrb[0].mxu0
      %v1772 = vadd.f32 0.0, %v1771
      %v1773 = vpop.f32.mrb[0].mxu0
      %1774 = vmatprep.mubr.f32.mxu0 0.0
      %1775 = vmatmul.mubr.f32.gmra.mrb[0].mxu0 %v1553
      %v1776 = vpop.f32.mrb[0].mxu0
      %v1777 = vadd.f32 0.0, %v1776
      %v1778 = vpop.f32.mrb[0].mxu0
      %1779 = vdwg.mxu0
      %v1780 = vmax.f32 %v1269, %v1622
      %v1781 = vmax.f32 %v1274, %v1627
      %v1782 = vmax.f32 %v1279, %v1632
      %v1783 = vmax.f32 %v1284, %v1637
      %v1784 = vmax.f32 %v1289, %v1642
      %v1785 = vmax.f32 %v1294, %v1647
      %v1786 = vmax.f32 %v1299, %v1652
      %v1787 = vmax.f32 %v1304, %v1657
      %v1788 = vmax.f32 %v1309, %v1662
      %v1789 = vmax.f32 %v1314, %v1667
      %v1790 = vmax.f32 %v1319, %v1672
      %v1791 = vmax.f32 %v1324, %v1677
      %v1792 = vmax.f32 %v1329, %v1682
      %v1793 = vmax.f32 %v1334, %v1687
      %v1794 = vmax.f32 %v1339, %v1692
      %v1795 = vmax.f32 %v1344, %v1697
      %v1796 = vmax.f32 %v1349, %v1702
      %v1797 = vmax.f32 %v1354, %v1707
      %v1798 = vmax.f32 %v1359, %v1712
      %v1799 = vmax.f32 %v1364, %v1717
      %v1800 = vmax.f32 %v1369, %v1722
      %v1801 = vmax.f32 %v1374, %v1727
      %v1802 = vmax.f32 %v1379, %v1732
      %v1803 = vmax.f32 %v1384, %v1737
      %v1804 = vmax.f32 %v1389, %v1742
      %v1805 = vmax.f32 %v1394, %v1747
      %v1806 = vmax.f32 %v1399, %v1752
      %v1807 = vmax.f32 %v1404, %v1757
      %v1808 = vmax.f32 %v1409, %v1762
      %v1809 = vmax.f32 %v1414, %v1767
      %v1810 = vmax.f32 %v1419, %v1772
      %v1811 = vmax.f32 %v1424, %v1777
      %v1812 = vmax.f32 %v1042, %v1780
      %v1813 = vmax.f32 %v1043, %v1781
      %v1814 = vmax.f32 %v1044, %v1782
      %v1815 = vmax.f32 %v1045, %v1783
      %v1816 = vmax.f32 %v1046, %v1784
      %v1817 = vmax.f32 %v1047, %v1785
      %v1818 = vmax.f32 %v1048, %v1786
      %v1819 = vmax.f32 %v1049, %v1787
      %v1820 = vmax.f32 %v1050, %v1788
      %v1821 = vmax.f32 %v1051, %v1789
      %v1822 = vmax.f32 %v1052, %v1790
      %v1823 = vmax.f32 %v1053, %v1791
      %v1824 = vmax.f32 %v1054, %v1792
      %v1825 = vmax.f32 %v1055, %v1793
      %v1826 = vmax.f32 %v1056, %v1794
      %v1827 = vmax.f32 %v1057, %v1795
      %v1828 = vmax.f32 %v1058, %v1796
      %v1829 = vmax.f32 %v1059, %v1797
      %v1830 = vmax.f32 %v1060, %v1798
      %v1831 = vmax.f32 %v1061, %v1799
      %v1832 = vmax.f32 %v1062, %v1800
      %v1833 = vmax.f32 %v1063, %v1801
      %v1834 = vmax.f32 %v1064, %v1802
      %v1835 = vmax.f32 %v1065, %v1803
      %v1836 = vmax.f32 %v1066, %v1804
      %v1837 = vmax.f32 %v1067, %v1805
      %v1838 = vmax.f32 %v1068, %v1806
      %v1839 = vmax.f32 %v1069, %v1807
      %v1840 = vmax.f32 %v1070, %v1808
      %v1841 = vmax.f32 %v1071, %v1809
      %v1842 = vmax.f32 %v1072, %v1810
      %v1843 = vmax.f32 %v1073, %v1811
      %v1844 = vld [vmem:[%s5] sm:$0x1]
      %v1846 = vlaneseq
      %v1847 = vshrl.u32 %v1846, 7
      %v1848 = vsub.s32 0, %v1847
      %v1849 = vrot.slane %v1844, %v1848
      %v1851 = vadd.f32 %v1812, %v1849
      %v1852 = vadd.f32 %v1813, %v1849
      %v1853 = vadd.f32 %v1814, %v1849
      %v1854 = vadd.f32 %v1815, %v1849
      %v1855 = vadd.f32 %v1816, %v1849
      %v1856 = vadd.f32 %v1817, %v1849
      %v1857 = vadd.f32 %v1818, %v1849
      %v1858 = vadd.f32 %v1819, %v1849
      %v1859 = vadd.f32 %v1820, %v1849
      %v1860 = vadd.f32 %v1821, %v1849
      %v1861 = vadd.f32 %v1822, %v1849
      %v1862 = vadd.f32 %v1823, %v1849
      %v1863 = vadd.f32 %v1824, %v1849
      %v1864 = vadd.f32 %v1825, %v1849
      %v1865 = vadd.f32 %v1826, %v1849
      %v1866 = vadd.f32 %v1827, %v1849
      %v1867 = vadd.f32 %v1828, %v1849
      %v1868 = vadd.f32 %v1829, %v1849
      %v1869 = vadd.f32 %v1830, %v1849
      %v1870 = vadd.f32 %v1831, %v1849
      %v1871 = vadd.f32 %v1832, %v1849
      %v1872 = vadd.f32 %v1833, %v1849
      %v1873 = vadd.f32 %v1834, %v1849
      %v1874 = vadd.f32 %v1835, %v1849
      %v1875 = vadd.f32 %v1836, %v1849
      %v1876 = vadd.f32 %v1837, %v1849
      %v1877 = vadd.f32 %v1838, %v1849
      %v1878 = vadd.f32 %v1839, %v1849
      %v1879 = vadd.f32 %v1840, %v1849
      %v1880 = vadd.f32 %v1841, %v1849
      %v1881 = vadd.f32 %v1842, %v1849
      %v1882 = vadd.f32 %v1843, %v1849
      %v1883 = vmax.f32 %v1851, 0.0
      %v1884 = vmax.f32 %v1852, 0.0
      %v1885 = vmax.f32 %v1853, 0.0
      %v1886 = vmax.f32 %v1854, 0.0
      %v1887 = vmax.f32 %v1855, 0.0
      %v1888 = vmax.f32 %v1856, 0.0
      %v1889 = vmax.f32 %v1857, 0.0
      %v1890 = vmax.f32 %v1858, 0.0
      %v1891 = vmax.f32 %v1859, 0.0
      %v1892 = vmax.f32 %v1860, 0.0
      %v1893 = vmax.f32 %v1861, 0.0
      %v1894 = vmax.f32 %v1862, 0.0
      %v1895 = vmax.f32 %v1863, 0.0
      %v1896 = vmax.f32 %v1864, 0.0
      %v1897 = vmax.f32 %v1865, 0.0
      %v1898 = vmax.f32 %v1866, 0.0
      %v1899 = vmax.f32 %v1867, 0.0
      %v1900 = vmax.f32 %v1868, 0.0
      %v1901 = vmax.f32 %v1869, 0.0
      %v1902 = vmax.f32 %v1870, 0.0
      %v1903 = vmax.f32 %v1871, 0.0
      %v1904 = vmax.f32 %v1872, 0.0
      %v1905 = vmax.f32 %v1873, 0.0
      %v1906 = vmax.f32 %v1874, 0.0
      %v1907 = vmax.f32 %v1875, 0.0
      %v1908 = vmax.f32 %v1876, 0.0
      %v1909 = vmax.f32 %v1877, 0.0
      %v1910 = vmax.f32 %v1878, 0.0
      %v1911 = vmax.f32 %v1879, 0.0
      %v1912 = vmax.f32 %v1880, 0.0
      %v1913 = vmax.f32 %v1881, 0.0
      %v1914 = vmax.f32 %v1882, 0.0
      %1915 = vst [vmem:[%s319] sm:$0xff] %v1883
      %1916 = vst [vmem:[%s319 + $0x8] sm:$0xff] %v1884
      %1917 = vst [vmem:[%s319 + $0x10] sm:$0xff] %v1885
      %1918 = vst [vmem:[%s319 + $0x18] sm:$0xff] %v1886
      %1919 = vst [vmem:[%s319 + $0x20] sm:$0xff] %v1887
      %1920 = vst [vmem:[%s319 + $0x28] sm:$0xff] %v1888
      %1921 = vst [vmem:[%s319 + $0x30] sm:$0xff] %v1889
      %1922 = vst [vmem:[%s319 + $0x38] sm:$0xff] %v1890
      %1923 = vst [vmem:[%s319 + $0x40] sm:$0xff] %v1891
      %1924 = vst [vmem:[%s319 + $0x48] sm:$0xff] %v1892
      %1925 = vst [vmem:[%s319 + $0x50] sm:$0xff] %v1893
      %1926 = vst [vmem:[%s319 + $0x58] sm:$0xff] %v1894
      %1927 = vst [vmem:[%s319 + $0x60] sm:$0xff] %v1895
      %1928 = vst [vmem:[%s319 + $0x68] sm:$0xff] %v1896
      %1929 = vst [vmem:[%s319 + $0x70] sm:$0xff] %v1897
      %1930 = vst [vmem:[%s319 + $0x78] sm:$0xff] %v1898
      %1931 = vst [vmem:[%s319 + $0x80] sm:$0xff] %v1899
      %1932 = vst [vmem:[%s319 + $0x88] sm:$0xff] %v1900
      %1933 = vst [vmem:[%s319 + $0x90] sm:$0xff] %v1901
      %1934 = vst [vmem:[%s319 + $0x98] sm:$0xff] %v1902
      %1935 = vst [vmem:[%s319 + $0xa0] sm:$0xff] %v1903
      %1936 = vst [vmem:[%s319 + $0xa8] sm:$0xff] %v1904
      %1937 = vst [vmem:[%s319 + $0xb0] sm:$0xff] %v1905
      %1938 = vst [vmem:[%s319 + $0xb8] sm:$0xff] %v1906
      %1939 = vst [vmem:[%s319 + $0xc0] sm:$0xff] %v1907
      %1940 = vst [vmem:[%s319 + $0xc8] sm:$0xff] %v1908
      %1941 = vst [vmem:[%s319 + $0xd0] sm:$0xff] %v1909
      %1942 = vst [vmem:[%s319 + $0xd8] sm:$0xff] %v1910
      %1943 = vst [vmem:[%s319 + $0xe0] sm:$0xff] %v1911
      %1944 = vst [vmem:[%s319 + $0xe8] sm:$0xff] %v1912
      %1945 = vst [vmem:[%s319 + $0xf0] sm:$0xff] %v1913
      %1946 = vst [vmem:[%s319 + $0xf8] sm:$0xff] %v1914
      %s1947 = smul.u32 32, %s17
      %p1948 = scmp.lt.s32.totalorder %s1947, 63
      %s1949 = scalar_select %p1948, %s1947, 63
      %s1950 = smul.addr %s1949, 8
      %s1951 = scalar_lea.vmem %s6, %s1950
      // Predicated region
      $region45: #{net_forward.3} parent=43 // pred_check
        %p1952 = pneg %p181
      $region46: #{net_forward.3} parent=43 // pred_check_branch
        %1954 = sbr.rel (%p1952) target = $region48
      $region47: #{net_forward.3} parent=43 // pred_region
        %s1955 = smul.u32 32, %s17
      $region48: #{net_forward.3} parent=43 // pred_fallthru
        _
    $region44: #{net_forward.3} parent=5 // pred_fallthru
      _
    %p1956 = scmp.le.s32.totalorder 2, %s12
    // Predicated region
    $region49: #{net_forward.3} parent=5 // pred_check
      %p1957 = pneg %p1956
    $region50: #{net_forward.3} parent=5 // pred_check_branch
      %1959 = sbr.rel (%p1957) target = $region52
    $region51: #{net_forward.3} parent=5 // pred_region
      %s1960 = ssub.s32 %s12, 2
      // Predicated region
      $region53: #{net_forward.3} parent=51 // pred_check
        %p1961 = pneg %p187
      $region54: #{net_forward.3} parent=51 // pred_check_branch
        %1963 = sbr.rel (%p1961) target = $region56
      $region55: #{net_forward.3} parent=51 // pred_region
        %s1964 = smul.u32 32, %s18
        %p1965 = scmp.lt.s32.totalorder %s1964, 63
        %s1966 = scalar_select %p1965, %s1964, 63
        %s1967 = smul.addr %s1966, 8
        %s1968 = scalar_lea.vmem %s6, %s1967
      $region56: #{net_forward.3} parent=51 // pred_fallthru
        _
    $region52: #{net_forward.3} parent=5 // pred_fallthru
      _
  $region6: #{net_forward.3} parent=0 // loop_footer
    %s16 = sadd.s32 1, %s12
  $region7: #{net_forward.3} parent=0 // loop_footer_branch
    %11 = sbr.rel target = $region3
  $region8: #{net_forward.3} parent=0 // loop_exit
    _

// kernel: net_forward.4
$region0: #{net_forward.4}
  #allocation0 [shape = 'u32[]', space=smem, size = 0x4, offset = 0x4, fixed_abs, tag = 'smem constant byte address 0x4 - core index']
  #allocation1 [shape = 'u32[144,128]{1,0:T(1,128)}', space=vmem, size = 0x12000, scoped, tag = 'internal scratch']
  %s0 = inlined_call_operand.vmem [shape: f32[56,150], index: 0, kind: input, shape index: {}]
  %s1 = inlined_call_operand.vmem [shape: f32[56,150], index: 1, kind: input, shape index: {}]
  %s2 = inlined_call_operand.vmem [shape: f32[56,150], index: 2, kind: input, shape index: {}]
  %s3 = inlined_call_operand.vmem [shape: f32[56,150], index: 3, kind: input, shape index: {}]
  %s4 = inlined_call_operand.vmem [shape: f32[150,128], index: 4, kind: input, shape index: {}]
  %s5 = inlined_call_operand.vmem [shape: f32[1,128], index: 5, kind: input, shape index: {}]
  %s6 = inlined_call_operand.vmem [shape: f32[56,128], index: 6, kind: output, shape index: {}]
  %s7 = sld [smem:[#allocation0]]
  $region34: #{net_forward.4} parent=0
    _
  %s9 = ssub.s32 1, %s7
  %s10 = scalar_select 0, %s9, %s7
  // Predicated region
  $region2: #{net_forward.4} parent=0 // pred_check
    _
  $region3: #{net_forward.4} parent=0 // pred_check_branch
    %12 = sbr.rel (0) target = $region5
  $region4: #{net_forward.4} parent=0 // pred_region
    _
  $region5: #{net_forward.4} parent=0 // pred_fallthru
    _
  // Predicated region
  $region6: #{net_forward.4} parent=0 // pred_check
    _
  $region7: #{net_forward.4} parent=0 // pred_check_branch
    %14 = sbr.rel (0) target = $region9
  $region8: #{net_forward.4} parent=0 // pred_region
    _
  $region9: #{net_forward.4} parent=0 // pred_fallthru
    _
  // Predicated region
  $region10: #{net_forward.4} parent=0 // pred_check
    _
  $region11: #{net_forward.4} parent=0 // pred_check_branch
    %16 = sbr.rel (0) target = $region13
  $region12: #{net_forward.4} parent=0 // pred_region
    _
  $region13: #{net_forward.4} parent=0 // pred_fallthru
    _
  // Predicated region
  $region14: #{net_forward.4} parent=0 // pred_check
    _
  $region15: #{net_forward.4} parent=0 // pred_check_branch
    %18 = sbr.rel (0) target = $region17
  $region16: #{net_forward.4} parent=0 // pred_region
    _
  $region17: #{net_forward.4} parent=0 // pred_fallthru
    _
  // Predicated region
  $region18: #{net_forward.4} parent=0 // pred_check
    _
  $region19: #{net_forward.4} parent=0 // pred_check_branch
    %20 = sbr.rel (0) target = $region21
  $region20: #{net_forward.4} parent=0 // pred_region
    _
  $region21: #{net_forward.4} parent=0 // pred_fallthru
    _
  // Predicated region
  $region22: #{net_forward.4} parent=0 // pred_check
    _
  $region23: #{net_forward.4} parent=0 // pred_check_branch
    %22 = sbr.rel (0) target = $region25
  $region24: #{net_forward.4} parent=0 // pred_region
    _
  $region25: #{net_forward.4} parent=0 // pred_fallthru
    _
  %v23 = vld [vmem:[%s4] sm:$0xff]
  %v24 = vld [vmem:[%s4 + $0x8] sm:$0xff]
  %v25 = vld [vmem:[%s4 + $0x10] sm:$0xff]
  %v26 = vld [vmem:[%s4 + $0x18] sm:$0xff]
  %v27 = vld [vmem:[%s4 + $0x20] sm:$0xff]
  %v28 = vld [vmem:[%s4 + $0x28] sm:$0xff]
  %v29 = vld [vmem:[%s4 + $0x30] sm:$0xff]
  %v30 = vld [vmem:[%s4 + $0x38] sm:$0xff]
  %v31 = vld [vmem:[%s4 + $0x40] sm:$0xff]
  %v32 = vld [vmem:[%s4 + $0x48] sm:$0xff]
  %v33 = vld [vmem:[%s4 + $0x50] sm:$0xff]
  %v34 = vld [vmem:[%s4 + $0x58] sm:$0xff]
  %v35 = vld [vmem:[%s4 + $0x60] sm:$0xff]
  %v36 = vld [vmem:[%s4 + $0x68] sm:$0xff]
  %v37 = vld [vmem:[%s4 + $0x70] sm:$0xff]
  %v38 = vld [vmem:[%s4 + $0x78] sm:$0xff]
  %v39 = vld [vmem:[%s4 + $0x80] sm:$0xff]
  %v40 = vld [vmem:[%s4 + $0x88] sm:$0xff]
  %v41 = vld [vmem:[%s4 + $0x90] sm:$0x3f]
  %v42 = vld [vmem:[%s0] sm:$0xff]
  %v43 = vld [vmem:[%s0 + $0x8] sm:$0xff]
  %v44 = vld [vmem:[%s0 + $0x10] sm:$0xff]
  %v45 = vld [vmem:[%s0 + $0x18] sm:$0xff]
  %v46 = vld [vmem:[%s0 + $0x20] sm:$0xff]
  %v47 = vld [vmem:[%s0 + $0x28] sm:$0xff]
  %v48 = vld [vmem:[%s0 + $0x30] sm:$0xff]
  %v49 = vld [vmem:[%s0 + $0x38] sm:$0xff]
  %v50 = vld [vmem:[%s0 + $0x40] sm:$0xff]
  %v51 = vld [vmem:[%s0 + $0x48] sm:$0xff]
  %v52 = vld [vmem:[%s0 + $0x50] sm:$0xff]
  %v53 = vld [vmem:[%s0 + $0x58] sm:$0xff]
  %v54 = vld [vmem:[%s0 + $0x60] sm:$0xff]
  %v55 = vld [vmem:[%s0 + $0x68] sm:$0xff]
  %vm56 = vcmask 179200
  %v58 = vsel %vm56, %v43, 0
  %v61 = vsel %vm56, %v45, 0
  %v64 = vsel %vm56, %v47, 0
  %v67 = vsel %vm56, %v49, 0
  %v70 = vsel %vm56, %v51, 0
  %v73 = vsel %vm56, %v53, 0
  %v76 = vsel %vm56, %v55, 0
  %vm78 = vcmask 1045504
  %v80 = vsel %vm78, %v41, 0
  %82 = vmatprep.subr.mxu0 0.0
  %83 = vmatpush1.msra.mxu0 %v23
  %84 = vmatprep.subr.mxu0 0.0
  %85 = vmatpush1.msra.mxu0 %v24
  %86 = vmatprep.subr.mxu0 0.0
  %87 = vmatpush1.msra.mxu0 %v25
  %88 = vmatprep.subr.mxu0 0.0
  %89 = vmatpush1.msra.mxu0 %v26
  %90 = vmatprep.subr.mxu0 0.0
  %91 = vmatpush1.msra.mxu0 %v27
  %92 = vmatprep.subr.mxu0 0.0
  %93 = vmatpush1.msra.mxu0 %v28
  %94 = vmatprep.subr.mxu0 0.0
  %95 = vmatpush1.msra.mxu0 %v29
  %96 = vmatprep.subr.mxu0 0.0
  %97 = vmatpush1.msra.mxu0 %v30
  %98 = vmatprep.subr.mxu0 0.0
  %99 = vmatpush1.msra.mxu0 %v31
  %100 = vmatprep.subr.mxu0 0.0
  %101 = vmatpush1.msra.mxu0 %v32
  %102 = vmatprep.subr.mxu0 0.0
  %103 = vmatpush1.msra.mxu0 %v33
  %104 = vmatprep.subr.mxu0 0.0
  %105 = vmatpush1.msra.mxu0 %v34
  %106 = vmatprep.subr.mxu0 0.0
  %107 = vmatpush1.msra.mxu0 %v35
  %108 = vmatprep.subr.mxu0 0.0
  %109 = vmatpush1.msra.mxu0 %v36
  %110 = vmatprep.subr.mxu0 0.0
  %111 = vmatpush1.msra.mxu0 %v37
  %112 = vmatprep.subr.mxu0 0.0
  %113 = vmatpush1.msra.mxu0 %v38
  %114 = vmatprep.subr.mxu0 0.0
  %115 = vmatpush1.msra.mxu0 %v39
  %116 = vmatprep.subr.mxu0 0.0
  %117 = vmatpush1.msra.mxu0 %v40
  %118 = vmatprep.subr.mxu0 0.0
  %119 = vmatpush1.msra.mxu0 %v80
  %120 = vmatprep.subr.mxu0 0.0
  %121 = vmatpush1.msra.mxu0 0.0
  %122 = vmatprep.subr.mxu0 0.0
  %123 = vmatpush1.msra.mxu0 0.0
  %124 = vmatprep.subr.mxu0 0.0
  %125 = vmatpush1.msra.mxu0 0.0
  %126 = vmatprep.subr.mxu0 0.0
  %127 = vmatpush1.msra.mxu0 0.0
  %128 = vmatprep.subr.mxu0 0.0
  %129 = vmatpush1.msra.mxu0 0.0
  %130 = vmatprep.subr.mxu0 0.0
  %131 = vmatpush1.msra.mxu0 0.0
  %132 = vmatprep.subr.mxu0 0.0
  %133 = vmatpush1.msra.mxu0 0.0
  %134 = vmatprep.subr.mxu0 0.0
  %135 = vmatpush1.msra.mxu0 0.0
  %136 = vmatprep.subr.mxu0 0.0
  %137 = vmatpush1.msra.mxu0 0.0
  %138 = vmatprep.subr.mxu0 0.0
  %139 = vmatpush1.msra.mxu0 0.0
  %140 = vmatprep.subr.mxu0 0.0
  %141 = vmatpush1.msra.mxu0 0.0
  %142 = vmatprep.subr.mxu0 0.0
  %143 = vmatpush1.msra.mxu0 0.0
  %144 = vmatprep.subr.mxu0 0.0
  %145 = vmatpush1.msra.mxu0 0.0
  %146 = vmatprep.mubr.f32.mxu0 %v58
  %147 = vmatmul.mubr.f32.gmra.mrb[0].mxu0 %v42
  %v148 = vpop.f32.mrb[0].mxu0
  %v149 = vadd.f32 0.0, %v148
  %v150 = vpop.f32.mrb[0].mxu0
  %151 = vmatprep.mubr.f32.mxu0 %v61
  %152 = vmatmul.mubr.f32.gmra.mrb[0].mxu0 %v44
  %v153 = vpop.f32.mrb[0].mxu0
  %v154 = vadd.f32 0.0, %v153
  %v155 = vpop.f32.mrb[0].mxu0
  %156 = vmatprep.mubr.f32.mxu0 %v64
  %157 = vmatmul.mubr.f32.gmra.mrb[0].mxu0 %v46
  %v158 = vpop.f32.mrb[0].mxu0
  %v159 = vadd.f32 0.0, %v158
  %v160 = vpop.f32.mrb[0].mxu0
  %161 = vmatprep.mubr.f32.mxu0 %v67
  %162 = vmatmul.mubr.f32.gmra.mrb[0].mxu0 %v48
  %v163 = vpop.f32.mrb[0].mxu0
  %v164 = vadd.f32 0.0, %v163
  %v165 = vpop.f32.mrb[0].mxu0
  %166 = vmatprep.mubr.f32.mxu0 %v70
  %167 = vmatmul.mubr.f32.gmra.mrb[0].mxu0 %v50
  %v168 = vpop.f32.mrb[0].mxu0
  %v169 = vadd.f32 0.0, %v168
  %v170 = vpop.f32.mrb[0].mxu0
  %171 = vmatprep.mubr.f32.mxu0 %v73
  %172 = vmatmul.mubr.f32.gmra.mrb[0].mxu0 %v52
  %v173 = vpop.f32.mrb[0].mxu0
  %v174 = vadd.f32 0.0, %v173
  %v175 = vpop.f32.mrb[0].mxu0
  %176 = vmatprep.mubr.f32.mxu0 %v76
  %177 = vmatmul.mubr.f32.gmra.mrb[0].mxu0 %v54
  %v178 = vpop.f32.mrb[0].mxu0
  %v179 = vadd.f32 0.0, %v178
  %v180 = vpop.f32.mrb[0].mxu0
  %181 = vdwg.mxu0
  %v182 = vld [vmem:[%s1] sm:$0xff]
  %v183 = vld [vmem:[%s1 + $0x8] sm:$0xff]
  %v184 = vld [vmem:[%s1 + $0x10] sm:$0xff]
  %v185 = vld [vmem:[%s1 + $0x18] sm:$0xff]
  %v186 = vld [vmem:[%s1 + $0x20] sm:$0xff]
  %v187 = vld [vmem:[%s1 + $0x28] sm:$0xff]
  %v188 = vld [vmem:[%s1 + $0x30] sm:$0xff]
  %v189 = vld [vmem:[%s1 + $0x38] sm:$0xff]
  %v190 = vld [vmem:[%s1 + $0x40] sm:$0xff]
  %v191 = vld [vmem:[%s1 + $0x48] sm:$0xff]
  %v192 = vld [vmem:[%s1 + $0x50] sm:$0xff]
  %v193 = vld [vmem:[%s1 + $0x58] sm:$0xff]
  %v194 = vld [vmem:[%s1 + $0x60] sm:$0xff]
  %v195 = vld [vmem:[%s1 + $0x68] sm:$0xff]
  %v197 = vsel %vm56, %v183, 0
  %v200 = vsel %vm56, %v185, 0
  %v203 = vsel %vm56, %v187, 0
  %v206 = vsel %vm56, %v189, 0
  %v209 = vsel %vm56, %v191, 0
  %v212 = vsel %vm56, %v193, 0
  %v215 = vsel %vm56, %v195, 0
  %217 = vmatprep.subr.mxu0 0.0
  %218 = vmatpush1.msra.mxu0 %v23
  %219 = vmatprep.subr.mxu0 0.0
  %220 = vmatpush1.msra.mxu0 %v24
  %221 = vmatprep.subr.mxu0 0.0
  %222 = vmatpush1.msra.mxu0 %v25
  %223 = vmatprep.subr.mxu0 0.0
  %224 = vmatpush1.msra.mxu0 %v26
  %225 = vmatprep.subr.mxu0 0.0
  %226 = vmatpush1.msra.mxu0 %v27
  %227 = vmatprep.subr.mxu0 0.0
  %228 = vmatpush1.msra.mxu0 %v28
  %229 = vmatprep.subr.mxu0 0.0
  %230 = vmatpush1.msra.mxu0 %v29
  %231 = vmatprep.subr.mxu0 0.0
  %232 = vmatpush1.msra.mxu0 %v30
  %233 = vmatprep.subr.mxu0 0.0
  %234 = vmatpush1.msra.mxu0 %v31
  %235 = vmatprep.subr.mxu0 0.0
  %236 = vmatpush1.msra.mxu0 %v32
  %237 = vmatprep.subr.mxu0 0.0
  %238 = vmatpush1.msra.mxu0 %v33
  %239 = vmatprep.subr.mxu0 0.0
  %240 = vmatpush1.msra.mxu0 %v34
  %241 = vmatprep.subr.mxu0 0.0
  %242 = vmatpush1.msra.mxu0 %v35
  %243 = vmatprep.subr.mxu0 0.0
  %244 = vmatpush1.msra.mxu0 %v36
  %245 = vmatprep.subr.mxu0 0.0
  %246 = vmatpush1.msra.mxu0 %v37
  %247 = vmatprep.subr.mxu0 0.0
  %248 = vmatpush1.msra.mxu0 %v38
  %249 = vmatprep.subr.mxu0 0.0
  %250 = vmatpush1.msra.mxu0 %v39
  %251 = vmatprep.subr.mxu0 0.0
  %252 = vmatpush1.msra.mxu0 %v40
  %253 = vmatprep.subr.mxu0 0.0
  %254 = vmatpush1.msra.mxu0 %v80
  %255 = vmatprep.subr.mxu0 0.0
  %256 = vmatpush1.msra.mxu0 0.0
  %257 = vmatprep.subr.mxu0 0.0
  %258 = vmatpush1.msra.mxu0 0.0
  %259 = vmatprep.subr.mxu0 0.0
  %260 = vmatpush1.msra.mxu0 0.0
  %261 = vmatprep.subr.mxu0 0.0
  %262 = vmatpush1.msra.mxu0 0.0
  %263 = vmatprep.subr.mxu0 0.0
  %264 = vmatpush1.msra.mxu0 0.0
  %265 = vmatprep.subr.mxu0 0.0
  %266 = vmatpush1.msra.mxu0 0.0
  %267 = vmatprep.subr.mxu0 0.0
  %268 = vmatpush1.msra.mxu0 0.0
  %269 = vmatprep.subr.mxu0 0.0
  %270 = vmatpush1.msra.mxu0 0.0
  %271 = vmatprep.subr.mxu0 0.0
  %272 = vmatpush1.msra.mxu0 0.0
  %273 = vmatprep.subr.mxu0 0.0
  %274 = vmatpush1.msra.mxu0 0.0
  %275 = vmatprep.subr.mxu0 0.0
  %276 = vmatpush1.msra.mxu0 0.0
  %277 = vmatprep.subr.mxu0 0.0
  %278 = vmatpush1.msra.mxu0 0.0
  %279 = vmatprep.subr.mxu0 0.0
  %280 = vmatpush1.msra.mxu0 0.0
  %281 = vmatprep.mubr.f32.mxu0 %v197
  %282 = vmatmul.mubr.f32.gmra.mrb[0].mxu0 %v182
  %v283 = vpop.f32.mrb[0].mxu0
  %v284 = vadd.f32 0.0, %v283
  %v285 = vpop.f32.mrb[0].mxu0
  %286 = vmatprep.mubr.f32.mxu0 %v200
  %287 = vmatmul.mubr.f32.gmra.mrb[0].mxu0 %v184
  %v288 = vpop.f32.mrb[0].mxu0
  %v289 = vadd.f32 0.0, %v288
  %v290 = vpop.f32.mrb[0].mxu0
  %291 = vmatprep.mubr.f32.mxu0 %v203
  %292 = vmatmul.mubr.f32.gmra.mrb[0].mxu0 %v186
  %v293 = vpop.f32.mrb[0].mxu0
  %v294 = vadd.f32 0.0, %v293
  %v295 = vpop.f32.mrb[0].mxu0
  %296 = vmatprep.mubr.f32.mxu0 %v206
  %297 = vmatmul.mubr.f32.gmra.mrb[0].mxu0 %v188
  %v298 = vpop.f32.mrb[0].mxu0
  %v299 = vadd.f32 0.0, %v298
  %v300 = vpop.f32.mrb[0].mxu0
  %301 = vmatprep.mubr.f32.mxu0 %v209
  %302 = vmatmul.mubr.f32.gmra.mrb[0].mxu0 %v190
  %v303 = vpop.f32.mrb[0].mxu0
  %v304 = vadd.f32 0.0, %v303
  %v305 = vpop.f32.mrb[0].mxu0
  %306 = vmatprep.mubr.f32.mxu0 %v212
  %307 = vmatmul.mubr.f32.gmra.mrb[0].mxu0 %v192
  %v308 = vpop.f32.mrb[0].mxu0
  %v309 = vadd.f32 0.0, %v308
  %v310 = vpop.f32.mrb[0].mxu0
  %311 = vmatprep.mubr.f32.mxu0 %v215
  %312 = vmatmul.mubr.f32.gmra.mrb[0].mxu0 %v194
  %v313 = vpop.f32.mrb[0].mxu0
  %v314 = vadd.f32 0.0, %v313
  %v315 = vpop.f32.mrb[0].mxu0
  %316 = vdwg.mxu0
  %v317 = vmax.f32 %v149, %v284
  %v318 = vmax.f32 %v154, %v289
  %v319 = vmax.f32 %v159, %v294
  %v320 = vmax.f32 %v164, %v299
  %v321 = vmax.f32 %v169, %v304
  %v322 = vmax.f32 %v174, %v309
  %v323 = vmax.f32 %v179, %v314
  %v324 = vld [vmem:[%s2] sm:$0xff]
  %v325 = vld [vmem:[%s2 + $0x8] sm:$0xff]
  %v326 = vld [vmem:[%s2 + $0x10] sm:$0xff]
  %v327 = vld [vmem:[%s2 + $0x18] sm:$0xff]
  %v328 = vld [vmem:[%s2 + $0x20] sm:$0xff]
  %v329 = vld [vmem:[%s2 + $0x28] sm:$0xff]
  %v330 = vld [vmem:[%s2 + $0x30] sm:$0xff]
  %v331 = vld [vmem:[%s2 + $0x38] sm:$0xff]
  %v332 = vld [vmem:[%s2 + $0x40] sm:$0xff]
  %v333 = vld [vmem:[%s2 + $0x48] sm:$0xff]
  %v334 = vld [vmem:[%s2 + $0x50] sm:$0xff]
  %v335 = vld [vmem:[%s2 + $0x58] sm:$0xff]
  %v336 = vld [vmem:[%s2 + $0x60] sm:$0xff]
  %v337 = vld [vmem:[%s2 + $0x68] sm:$0xff]
  %v339 = vsel %vm56, %v325, 0
  %v342 = vsel %vm56, %v327, 0
  %v345 = vsel %vm56, %v329, 0
  %v348 = vsel %vm56, %v331, 0
  %v351 = vsel %vm56, %v333, 0
  %v354 = vsel %vm56, %v335, 0
  %v357 = vsel %vm56, %v337, 0
  %359 = vmatprep.subr.mxu0 0.0
  %360 = vmatpush1.msra.mxu0 %v23
  %361 = vmatprep.subr.mxu0 0.0
  %362 = vmatpush1.msra.mxu0 %v24
  %363 = vmatprep.subr.mxu0 0.0
  %364 = vmatpush1.msra.mxu0 %v25
  %365 = vmatprep.subr.mxu0 0.0
  %366 = vmatpush1.msra.mxu0 %v26
  %367 = vmatprep.subr.mxu0 0.0
  %368 = vmatpush1.msra.mxu0 %v27
  %369 = vmatprep.subr.mxu0 0.0
  %370 = vmatpush1.msra.mxu0 %v28
  %371 = vmatprep.subr.mxu0 0.0
  %372 = vmatpush1.msra.mxu0 %v29
  %373 = vmatprep.subr.mxu0 0.0
  %374 = vmatpush1.msra.mxu0 %v30
  %375 = vmatprep.subr.mxu0 0.0
  %376 = vmatpush1.msra.mxu0 %v31
  %377 = vmatprep.subr.mxu0 0.0
  %378 = vmatpush1.msra.mxu0 %v32
  %379 = vmatprep.subr.mxu0 0.0
  %380 = vmatpush1.msra.mxu0 %v33
  %381 = vmatprep.subr.mxu0 0.0
  %382 = vmatpush1.msra.mxu0 %v34
  %383 = vmatprep.subr.mxu0 0.0
  %384 = vmatpush1.msra.mxu0 %v35
  %385 = vmatprep.subr.mxu0 0.0
  %386 = vmatpush1.msra.mxu0 %v36
  %387 = vmatprep.subr.mxu0 0.0
  %388 = vmatpush1.msra.mxu0 %v37
  %389 = vmatprep.subr.mxu0 0.0
  %390 = vmatpush1.msra.mxu0 %v38
  %391 = vmatprep.subr.mxu0 0.0
  %392 = vmatpush1.msra.mxu0 %v39
  %393 = vmatprep.subr.mxu0 0.0
  %394 = vmatpush1.msra.mxu0 %v40
  %395 = vmatprep.subr.mxu0 0.0
  %396 = vmatpush1.msra.mxu0 %v80
  %397 = vmatprep.subr.mxu0 0.0
  %398 = vmatpush1.msra.mxu0 0.0
  %399 = vmatprep.subr.mxu0 0.0
  %400 = vmatpush1.msra.mxu0 0.0
  %401 = vmatprep.subr.mxu0 0.0
  %402 = vmatpush1.msra.mxu0 0.0
  %403 = vmatprep.subr.mxu0 0.0
  %404 = vmatpush1.msra.mxu0 0.0
  %405 = vmatprep.subr.mxu0 0.0
  %406 = vmatpush1.msra.mxu0 0.0
  %407 = vmatprep.subr.mxu0 0.0
  %408 = vmatpush1.msra.mxu0 0.0
  %409 = vmatprep.subr.mxu0 0.0
  %410 = vmatpush1.msra.mxu0 0.0
  %411 = vmatprep.subr.mxu0 0.0
  %412 = vmatpush1.msra.mxu0 0.0
  %413 = vmatprep.subr.mxu0 0.0
  %414 = vmatpush1.msra.mxu0 0.0
  %415 = vmatprep.subr.mxu0 0.0
  %416 = vmatpush1.msra.mxu0 0.0
  %417 = vmatprep.subr.mxu0 0.0
  %418 = vmatpush1.msra.mxu0 0.0
  %419 = vmatprep.subr.mxu0 0.0
  %420 = vmatpush1.msra.mxu0 0.0
  %421 = vmatprep.subr.mxu0 0.0
  %422 = vmatpush1.msra.mxu0 0.0
  %423 = vmatprep.mubr.f32.mxu0 %v339
  %424 = vmatmul.mubr.f32.gmra.mrb[0].mxu0 %v324
  %v425 = vpop.f32.mrb[0].mxu0
  %v426 = vadd.f32 0.0, %v425
  %v427 = vpop.f32.mrb[0].mxu0
  %428 = vmatprep.mubr.f32.mxu0 %v342
  %429 = vmatmul.mubr.f32.gmra.mrb[0].mxu0 %v326
  %v430 = vpop.f32.mrb[0].mxu0
  %v431 = vadd.f32 0.0, %v430
  %v432 = vpop.f32.mrb[0].mxu0
  %433 = vmatprep.mubr.f32.mxu0 %v345
  %434 = vmatmul.mubr.f32.gmra.mrb[0].mxu0 %v328
  %v435 = vpop.f32.mrb[0].mxu0
  %v436 = vadd.f32 0.0, %v435
  %v437 = vpop.f32.mrb[0].mxu0
  %438 = vmatprep.mubr.f32.mxu0 %v348
  %439 = vmatmul.mubr.f32.gmra.mrb[0].mxu0 %v330
  %v440 = vpop.f32.mrb[0].mxu0
  %v441 = vadd.f32 0.0, %v440
  %v442 = vpop.f32.mrb[0].mxu0
  %443 = vmatprep.mubr.f32.mxu0 %v351
  %444 = vmatmul.mubr.f32.gmra.mrb[0].mxu0 %v332
  %v445 = vpop.f32.mrb[0].mxu0
  %v446 = vadd.f32 0.0, %v445
  %v447 = vpop.f32.mrb[0].mxu0
  %448 = vmatprep.mubr.f32.mxu0 %v354
  %449 = vmatmul.mubr.f32.gmra.mrb[0].mxu0 %v334
  %v450 = vpop.f32.mrb[0].mxu0
  %v451 = vadd.f32 0.0, %v450
  %v452 = vpop.f32.mrb[0].mxu0
  %453 = vmatprep.mubr.f32.mxu0 %v357
  %454 = vmatmul.mubr.f32.gmra.mrb[0].mxu0 %v336
  %v455 = vpop.f32.mrb[0].mxu0
  %v456 = vadd.f32 0.0, %v455
  %v457 = vpop.f32.mrb[0].mxu0
  %458 = vdwg.mxu0
  %v459 = vld [vmem:[%s3] sm:$0xff]
  %v460 = vld [vmem:[%s3 + $0x8] sm:$0xff]
  %v461 = vld [vmem:[%s3 + $0x10] sm:$0xff]
  %v462 = vld [vmem:[%s3 + $0x18] sm:$0xff]
  %v463 = vld [vmem:[%s3 + $0x20] sm:$0xff]
  %v464 = vld [vmem:[%s3 + $0x28] sm:$0xff]
  %v465 = vld [vmem:[%s3 + $0x30] sm:$0xff]
  %v466 = vld [vmem:[%s3 + $0x38] sm:$0xff]
  %v467 = vld [vmem:[%s3 + $0x40] sm:$0xff]
  %v468 = vld [vmem:[%s3 + $0x48] sm:$0xff]
  %v469 = vld [vmem:[%s3 + $0x50] sm:$0xff]
  %v470 = vld [vmem:[%s3 + $0x58] sm:$0xff]
  %v471 = vld [vmem:[%s3 + $0x60] sm:$0xff]
  %v472 = vld [vmem:[%s3 + $0x68] sm:$0xff]
  %v474 = vsel %vm56, %v460, 0
  %v477 = vsel %vm56, %v462, 0
  %v480 = vsel %vm56, %v464, 0
  %v483 = vsel %vm56, %v466, 0
  %v486 = vsel %vm56, %v468, 0
  %v489 = vsel %vm56, %v470, 0
  %v492 = vsel %vm56, %v472, 0
  %494 = vmatprep.subr.mxu0 0.0
  %495 = vmatpush1.msra.mxu0 %v23
  %496 = vmatprep.subr.mxu0 0.0
  %497 = vmatpush1.msra.mxu0 %v24
  %498 = vmatprep.subr.mxu0 0.0
  %499 = vmatpush1.msra.mxu0 %v25
  %500 = vmatprep.subr.mxu0 0.0
  %501 = vmatpush1.msra.mxu0 %v26
  %502 = vmatprep.subr.mxu0 0.0
  %503 = vmatpush1.msra.mxu0 %v27
  %504 = vmatprep.subr.mxu0 0.0
  %505 = vmatpush1.msra.mxu0 %v28
  %506 = vmatprep.subr.mxu0 0.0
  %507 = vmatpush1.msra.mxu0 %v29
  %508 = vmatprep.subr.mxu0 0.0
  %509 = vmatpush1.msra.mxu0 %v30
  %510 = vmatprep.subr.mxu0 0.0
  %511 = vmatpush1.msra.mxu0 %v31
  %512 = vmatprep.subr.mxu0 0.0
  %513 = vmatpush1.msra.mxu0 %v32
  %514 = vmatprep.subr.mxu0 0.0
  %515 = vmatpush1.msra.mxu0 %v33
  %516 = vmatprep.subr.mxu0 0.0
  %517 = vmatpush1.msra.mxu0 %v34
  %518 = vmatprep.subr.mxu0 0.0
  %519 = vmatpush1.msra.mxu0 %v35
  %520 = vmatprep.subr.mxu0 0.0
  %521 = vmatpush1.msra.mxu0 %v36
  %522 = vmatprep.subr.mxu0 0.0
  %523 = vmatpush1.msra.mxu0 %v37
  %524 = vmatprep.subr.mxu0 0.0
  %525 = vmatpush1.msra.mxu0 %v38
  %526 = vmatprep.subr.mxu0 0.0
  %527 = vmatpush1.msra.mxu0 %v39
  %528 = vmatprep.subr.mxu0 0.0
  %529 = vmatpush1.msra.mxu0 %v40
  %530 = vmatprep.subr.mxu0 0.0
  %531 = vmatpush1.msra.mxu0 %v80
  %532 = vmatprep.subr.mxu0 0.0
  %533 = vmatpush1.msra.mxu0 0.0
  %534 = vmatprep.subr.mxu0 0.0
  %535 = vmatpush1.msra.mxu0 0.0
  %536 = vmatprep.subr.mxu0 0.0
  %537 = vmatpush1.msra.mxu0 0.0
  %538 = vmatprep.subr.mxu0 0.0
  %539 = vmatpush1.msra.mxu0 0.0
  %540 = vmatprep.subr.mxu0 0.0
  %541 = vmatpush1.msra.mxu0 0.0
  %542 = vmatprep.subr.mxu0 0.0
  %543 = vmatpush1.msra.mxu0 0.0
  %544 = vmatprep.subr.mxu0 0.0
  %545 = vmatpush1.msra.mxu0 0.0
  %546 = vmatprep.subr.mxu0 0.0
  %547 = vmatpush1.msra.mxu0 0.0
  %548 = vmatprep.subr.mxu0 0.0
  %549 = vmatpush1.msra.mxu0 0.0
  %550 = vmatprep.subr.mxu0 0.0
  %551 = vmatpush1.msra.mxu0 0.0
  %552 = vmatprep.subr.mxu0 0.0
  %553 = vmatpush1.msra.mxu0 0.0
  %554 = vmatprep.subr.mxu0 0.0
  %555 = vmatpush1.msra.mxu0 0.0
  %556 = vmatprep.subr.mxu0 0.0
  %557 = vmatpush1.msra.mxu0 0.0
  %558 = vmatprep.mubr.f32.mxu0 %v474
  %559 = vmatmul.mubr.f32.gmra.mrb[0].mxu0 %v459
  %v560 = vpop.f32.mrb[0].mxu0
  %v561 = vadd.f32 0.0, %v560
  %v562 = vpop.f32.mrb[0].mxu0
  %563 = vmatprep.mubr.f32.mxu0 %v477
  %564 = vmatmul.mubr.f32.gmra.mrb[0].mxu0 %v461
  %v565 = vpop.f32.mrb[0].mxu0
  %v566 = vadd.f32 0.0, %v565
  %v567 = vpop.f32.mrb[0].mxu0
  %568 = vmatprep.mubr.f32.mxu0 %v480
  %569 = vmatmul.mubr.f32.gmra.mrb[0].mxu0 %v463
  %v570 = vpop.f32.mrb[0].mxu0
  %v571 = vadd.f32 0.0, %v570
  %v572 = vpop.f32.mrb[0].mxu0
  %573 = vmatprep.mubr.f32.mxu0 %v483
  %574 = vmatmul.mubr.f32.gmra.mrb[0].mxu0 %v465
  %v575 = vpop.f32.mrb[0].mxu0
  %v576 = vadd.f32 0.0, %v575
  %v577 = vpop.f32.mrb[0].mxu0
  %578 = vmatprep.mubr.f32.mxu0 %v486
  %579 = vmatmul.mubr.f32.gmra.mrb[0].mxu0 %v467
  %v580 = vpop.f32.mrb[0].mxu0
  %v581 = vadd.f32 0.0, %v580
  %v582 = vpop.f32.mrb[0].mxu0
  %583 = vmatprep.mubr.f32.mxu0 %v489
  %584 = vmatmul.mubr.f32.gmra.mrb[0].mxu0 %v469
  %v585 = vpop.f32.mrb[0].mxu0
  %v586 = vadd.f32 0.0, %v585
  %v587 = vpop.f32.mrb[0].mxu0
  %588 = vmatprep.mubr.f32.mxu0 %v492
  %589 = vmatmul.mubr.f32.gmra.mrb[0].mxu0 %v471
  %v590 = vpop.f32.mrb[0].mxu0
  %v591 = vadd.f32 0.0, %v590
  %v592 = vpop.f32.mrb[0].mxu0
  %593 = vdwg.mxu0
  %v594 = vmax.f32 %v426, %v561
  %v595 = vmax.f32 %v431, %v566
  %v596 = vmax.f32 %v436, %v571
  %v597 = vmax.f32 %v441, %v576
  %v598 = vmax.f32 %v446, %v581
  %v599 = vmax.f32 %v451, %v586
  %v600 = vmax.f32 %v456, %v591
  %v601 = vmax.f32 %v317, %v594
  %v602 = vmax.f32 %v318, %v595
  %v603 = vmax.f32 %v319, %v596
  %v604 = vmax.f32 %v320, %v597
  %v605 = vmax.f32 %v321, %v598
  %v606 = vmax.f32 %v322, %v599
  %v607 = vmax.f32 %v323, %v600
  %v608 = vld [vmem:[%s5] sm:$0x1]
  %v610 = vlaneseq
  %v611 = vshrl.u32 %v610, 7
  %v612 = vsub.s32 0, %v611
  %v613 = vrot.slane %v608, %v612
  %v615 = vadd.f32 %v601, %v613
  %v616 = vadd.f32 %v602, %v613
  %v617 = vadd.f32 %v603, %v613
  %v618 = vadd.f32 %v604, %v613
  %v619 = vadd.f32 %v605, %v613
  %v620 = vadd.f32 %v606, %v613
  %v621 = vadd.f32 %v607, %v613
  %v622 = vmax.f32 %v615, 0.0
  %v623 = vmax.f32 %v616, 0.0
  %v624 = vmax.f32 %v617, 0.0
  %v625 = vmax.f32 %v618, 0.0
  %v626 = vmax.f32 %v619, 0.0
  %v627 = vmax.f32 %v620, 0.0
  %v628 = vmax.f32 %v621, 0.0
  %629 = vst [vmem:[%s6] sm:$0xff] %v622
  %630 = vst [vmem:[%s6 + $0x8] sm:$0xff] %v623
  %631 = vst [vmem:[%s6 + $0x10] sm:$0xff] %v624
  %632 = vst [vmem:[%s6 + $0x18] sm:$0xff] %v625
  %633 = vst [vmem:[%s6 + $0x20] sm:$0xff] %v626
  %634 = vst [vmem:[%s6 + $0x28] sm:$0xff] %v627
  %635 = vst [vmem:[%s6 + $0x30] sm:$0xff] %v628
  // Predicated region
  $region26: #{net_forward.4} parent=0 // pred_check
    _
  $region27: #{net_forward.4} parent=0 // pred_check_branch
    %637 = sbr.rel (0) target = $region29
  $region28: #{net_forward.4} parent=0 // pred_region
    _
  $region29: #{net_forward.4} parent=0 // pred_fallthru
    _
  // Predicated region
  $region30: #{net_forward.4} parent=0 // pred_check
    _
  $region31: #{net_forward.4} parent=0 // pred_check_branch
    %639 = sbr.rel (0) target = $region33
  $region32: #{net_forward.4} parent=0 // pred_region
    _
  $region33: #{net_forward.4} parent=0 // pred_fallthru
    _

// kernel: net_forward.5
$region0: #{net_forward.5}
  #allocation0 [shape = 'u32[]', space=smem, size = 0x4, offset = 0x4, fixed_abs, tag = 'smem constant byte address 0x4 - core index']
  #allocation1 [shape = 'u32[144,128]{1,0:T(1,128)}', space=vmem, size = 0x12000, scoped, tag = 'internal scratch']
  %s0 = inlined_call_operand.vmem [shape: f32[8,400], index: 0, kind: input, shape index: {}]
  %s1 = inlined_call_operand.vmem [shape: f32[400,128], index: 1, kind: input, shape index: {}]
  %s2 = inlined_call_operand.vmem [shape: f32[1,128], index: 2, kind: input, shape index: {}]
  %s3 = inlined_call_operand.vmem [shape: f32[128,128], index: 3, kind: input, shape index: {}]
  %s4 = inlined_call_operand.vmem [shape: f32[1,128], index: 4, kind: input, shape index: {}]
  %s5 = inlined_call_operand.vmem [shape: f32[128,128], index: 5, kind: input, shape index: {}]
  %s6 = inlined_call_operand.vmem [shape: f32[1,128], index: 6, kind: input, shape index: {}]
  %s7 = inlined_call_operand.vmem [shape: f32[8,128], index: 7, kind: output, shape index: {}]
  %s8 = sld [smem:[#allocation0]]
  $region38: #{net_forward.5} parent=0
    _
  %s10 = ssub.s32 1, %s8
  %s11 = scalar_select 0, %s10, %s8
  // Predicated region
  $region2: #{net_forward.5} parent=0 // pred_check
    _
  $region3: #{net_forward.5} parent=0 // pred_check_branch
    %13 = sbr.rel (0) target = $region5
  $region4: #{net_forward.5} parent=0 // pred_region
    _
  $region5: #{net_forward.5} parent=0 // pred_fallthru
    _
  // Predicated region
  $region6: #{net_forward.5} parent=0 // pred_check
    _
  $region7: #{net_forward.5} parent=0 // pred_check_branch
    %15 = sbr.rel (0) target = $region9
  $region8: #{net_forward.5} parent=0 // pred_region
    _
  $region9: #{net_forward.5} parent=0 // pred_fallthru
    _
  // Predicated region
  $region10: #{net_forward.5} parent=0 // pred_check
    _
  $region11: #{net_forward.5} parent=0 // pred_check_branch
    %17 = sbr.rel (0) target = $region13
  $region12: #{net_forward.5} parent=0 // pred_region
    _
  $region13: #{net_forward.5} parent=0 // pred_fallthru
    _
  // Predicated region
  $region14: #{net_forward.5} parent=0 // pred_check
    _
  $region15: #{net_forward.5} parent=0 // pred_check_branch
    %19 = sbr.rel (0) target = $region17
  $region16: #{net_forward.5} parent=0 // pred_region
    _
  $region17: #{net_forward.5} parent=0 // pred_fallthru
    _
  // Predicated region
  $region18: #{net_forward.5} parent=0 // pred_check
    _
  $region19: #{net_forward.5} parent=0 // pred_check_branch
    %21 = sbr.rel (0) target = $region21
  $region20: #{net_forward.5} parent=0 // pred_region
    _
  $region21: #{net_forward.5} parent=0 // pred_fallthru
    _
  // Predicated region
  $region22: #{net_forward.5} parent=0 // pred_check
    _
  $region23: #{net_forward.5} parent=0 // pred_check_branch
    %23 = sbr.rel (0) target = $region25
  $region24: #{net_forward.5} parent=0 // pred_region
    _
  $region25: #{net_forward.5} parent=0 // pred_fallthru
    _
  // Predicated region
  $region26: #{net_forward.5} parent=0 // pred_check
    _
  $region27: #{net_forward.5} parent=0 // pred_check_branch
    %25 = sbr.rel (0) target = $region29
  $region28: #{net_forward.5} parent=0 // pred_region
    _
  $region29: #{net_forward.5} parent=0 // pred_fallthru
    _
  %v26 = vld [vmem:[%s0] sm:$0xff]
  %v27 = vld [vmem:[%s0 + $0x8] sm:$0xff]
  %v28 = vld [vmem:[%s0 + $0x10] sm:$0xff]
  %v29 = vld [vmem:[%s0 + $0x18] sm:$0xff]
  %v30 = vld [vmem:[%s1] sm:$0xff]
  %v31 = vld [vmem:[%s1 + $0x8] sm:$0xff]
  %v32 = vld [vmem:[%s1 + $0x10] sm:$0xff]
  %v33 = vld [vmem:[%s1 + $0x18] sm:$0xff]
  %v34 = vld [vmem:[%s1 + $0x20] sm:$0xff]
  %v35 = vld [vmem:[%s1 + $0x28] sm:$0xff]
  %v36 = vld [vmem:[%s1 + $0x30] sm:$0xff]
  %v37 = vld [vmem:[%s1 + $0x38] sm:$0xff]
  %v38 = vld [vmem:[%s1 + $0x40] sm:$0xff]
  %v39 = vld [vmem:[%s1 + $0x48] sm:$0xff]
  %v40 = vld [vmem:[%s1 + $0x50] sm:$0xff]
  %v41 = vld [vmem:[%s1 + $0x58] sm:$0xff]
  %v42 = vld [vmem:[%s1 + $0x60] sm:$0xff]
  %v43 = vld [vmem:[%s1 + $0x68] sm:$0xff]
  %v44 = vld [vmem:[%s1 + $0x70] sm:$0xff]
  %v45 = vld [vmem:[%s1 + $0x78] sm:$0xff]
  %v46 = vld [vmem:[%s1 + $0x80] sm:$0xff]
  %v47 = vld [vmem:[%s1 + $0x88] sm:$0xff]
  %v48 = vld [vmem:[%s1 + $0x90] sm:$0xff]
  %v49 = vld [vmem:[%s1 + $0x98] sm:$0xff]
  %v50 = vld [vmem:[%s1 + $0xa0] sm:$0xff]
  %v51 = vld [vmem:[%s1 + $0xa8] sm:$0xff]
  %v52 = vld [vmem:[%s1 + $0xb0] sm:$0xff]
  %v53 = vld [vmem:[%s1 + $0xb8] sm:$0xff]
  %v54 = vld [vmem:[%s1 + $0xc0] sm:$0xff]
  %v55 = vld [vmem:[%s1 + $0xc8] sm:$0xff]
  %v56 = vld [vmem:[%s1 + $0xd0] sm:$0xff]
  %v57 = vld [vmem:[%s1 + $0xd8] sm:$0xff]
  %v58 = vld [vmem:[%s1 + $0xe0] sm:$0xff]
  %v59 = vld [vmem:[%s1 + $0xe8] sm:$0xff]
  %v60 = vld [vmem:[%s1 + $0xf0] sm:$0xff]
  %v61 = vld [vmem:[%s1 + $0xf8] sm:$0xff]
  %v62 = vld [vmem:[%s1 + $0x100] sm:$0xff]
  %v63 = vld [vmem:[%s1 + $0x108] sm:$0xff]
  %v64 = vld [vmem:[%s1 + $0x110] sm:$0xff]
  %v65 = vld [vmem:[%s1 + $0x118] sm:$0xff]
  %v66 = vld [vmem:[%s1 + $0x120] sm:$0xff]
  %v67 = vld [vmem:[%s1 + $0x128] sm:$0xff]
  %v68 = vld [vmem:[%s1 + $0x130] sm:$0xff]
  %v69 = vld [vmem:[%s1 + $0x138] sm:$0xff]
  %v70 = vld [vmem:[%s1 + $0x140] sm:$0xff]
  %v71 = vld [vmem:[%s1 + $0x148] sm:$0xff]
  %v72 = vld [vmem:[%s1 + $0x150] sm:$0xff]
  %v73 = vld [vmem:[%s1 + $0x158] sm:$0xff]
  %v74 = vld [vmem:[%s1 + $0x160] sm:$0xff]
  %v75 = vld [vmem:[%s1 + $0x168] sm:$0xff]
  %v76 = vld [vmem:[%s1 + $0x170] sm:$0xff]
  %v77 = vld [vmem:[%s1 + $0x178] sm:$0xff]
  %v78 = vld [vmem:[%s1 + $0x180] sm:$0xff]
  %v79 = vld [vmem:[%s1 + $0x188] sm:$0xff]
  %v80 = vld [vmem:[%s2] sm:$0x1]
  %v82 = vlaneseq
  %v83 = vshrl.u32 %v82, 7
  %v84 = vsub.s32 0, %v83
  %v85 = vrot.slane %v80, %v84
  %vm87 = vcmask 130048
  %v89 = vsel %vm87, %v29, 0
  %91 = vmatprep.subr.mxu0 0.0
  %92 = vmatpush1.msra.mxu0 %v30
  %93 = vmatprep.subr.mxu0 0.0
  %94 = vmatpush1.msra.mxu0 %v31
  %95 = vmatprep.subr.mxu0 0.0
  %96 = vmatpush1.msra.mxu0 %v32
  %97 = vmatprep.subr.mxu0 0.0
  %98 = vmatpush1.msra.mxu0 %v33
  %99 = vmatprep.subr.mxu0 0.0
  %100 = vmatpush1.msra.mxu0 %v34
  %101 = vmatprep.subr.mxu0 0.0
  %102 = vmatpush1.msra.mxu0 %v35
  %103 = vmatprep.subr.mxu0 0.0
  %104 = vmatpush1.msra.mxu0 %v36
  %105 = vmatprep.subr.mxu0 0.0
  %106 = vmatpush1.msra.mxu0 %v37
  %107 = vmatprep.subr.mxu0 0.0
  %108 = vmatpush1.msra.mxu0 %v38
  %109 = vmatprep.subr.mxu0 0.0
  %110 = vmatpush1.msra.mxu0 %v39
  %111 = vmatprep.subr.mxu0 0.0
  %112 = vmatpush1.msra.mxu0 %v40
  %113 = vmatprep.subr.mxu0 0.0
  %114 = vmatpush1.msra.mxu0 %v41
  %115 = vmatprep.subr.mxu0 0.0
  %116 = vmatpush1.msra.mxu0 %v42
  %117 = vmatprep.subr.mxu0 0.0
  %118 = vmatpush1.msra.mxu0 %v43
  %119 = vmatprep.subr.mxu0 0.0
  %120 = vmatpush1.msra.mxu0 %v44
  %121 = vmatprep.subr.mxu0 0.0
  %122 = vmatpush1.msra.mxu0 %v45
  %123 = vmatprep.subr.mxu0 0.0
  %124 = vmatpush1.msra.mxu0 %v46
  %125 = vmatprep.subr.mxu0 0.0
  %126 = vmatpush1.msra.mxu0 %v47
  %127 = vmatprep.subr.mxu0 0.0
  %128 = vmatpush1.msra.mxu0 %v48
  %129 = vmatprep.subr.mxu0 0.0
  %130 = vmatpush1.msra.mxu0 %v49
  %131 = vmatprep.subr.mxu0 0.0
  %132 = vmatpush1.msra.mxu0 %v50
  %133 = vmatprep.subr.mxu0 0.0
  %134 = vmatpush1.msra.mxu0 %v51
  %135 = vmatprep.subr.mxu0 0.0
  %136 = vmatpush1.msra.mxu0 %v52
  %137 = vmatprep.subr.mxu0 0.0
  %138 = vmatpush1.msra.mxu0 %v53
  %139 = vmatprep.subr.mxu0 0.0
  %140 = vmatpush1.msra.mxu0 %v54
  %141 = vmatprep.subr.mxu0 0.0
  %142 = vmatpush1.msra.mxu0 %v55
  %143 = vmatprep.subr.mxu0 0.0
  %144 = vmatpush1.msra.mxu0 %v56
  %145 = vmatprep.subr.mxu0 0.0
  %146 = vmatpush1.msra.mxu0 %v57
  %147 = vmatprep.subr.mxu0 0.0
  %148 = vmatpush1.msra.mxu0 %v58
  %149 = vmatprep.subr.mxu0 0.0
  %150 = vmatpush1.msra.mxu0 %v59
  %151 = vmatprep.subr.mxu0 0.0
  %152 = vmatpush1.msra.mxu0 %v60
  %153 = vmatprep.subr.mxu0 0.0
  %154 = vmatpush1.msra.mxu0 %v61
  %155 = vmatprep.mubr.f32.mxu0 %v27
  %156 = vmatmul.mubr.f32.gmra.mrb[0].mxu0 %v26
  %v157 = vpop.f32.mrb[0].mxu0
  %v158 = vadd.f32 %v85, %v157
  %v159 = vpop.f32.mrb[0].mxu0
  %160 = vdwg.mxu0
  %161 = vmatprep.subr.mxu0 0.0
  %162 = vmatpush1.msra.mxu0 %v62
  %163 = vmatprep.subr.mxu0 0.0
  %164 = vmatpush1.msra.mxu0 %v63
  %165 = vmatprep.subr.mxu0 0.0
  %166 = vmatpush1.msra.mxu0 %v64
  %167 = vmatprep.subr.mxu0 0.0
  %168 = vmatpush1.msra.mxu0 %v65
  %169 = vmatprep.subr.mxu0 0.0
  %170 = vmatpush1.msra.mxu0 %v66
  %171 = vmatprep.subr.mxu0 0.0
  %172 = vmatpush1.msra.mxu0 %v67
  %173 = vmatprep.subr.mxu0 0.0
  %174 = vmatpush1.msra.mxu0 %v68
  %175 = vmatprep.subr.mxu0 0.0
  %176 = vmatpush1.msra.mxu0 %v69
  %177 = vmatprep.subr.mxu0 0.0
  %178 = vmatpush1.msra.mxu0 %v70
  %179 = vmatprep.subr.mxu0 0.0
  %180 = vmatpush1.msra.mxu0 %v71
  %181 = vmatprep.subr.mxu0 0.0
  %182 = vmatpush1.msra.mxu0 %v72
  %183 = vmatprep.subr.mxu0 0.0
  %184 = vmatpush1.msra.mxu0 %v73
  %185 = vmatprep.subr.mxu0 0.0
  %186 = vmatpush1.msra.mxu0 %v74
  %187 = vmatprep.subr.mxu0 0.0
  %188 = vmatpush1.msra.mxu0 %v75
  %189 = vmatprep.subr.mxu0 0.0
  %190 = vmatpush1.msra.mxu0 %v76
  %191 = vmatprep.subr.mxu0 0.0
  %192 = vmatpush1.msra.mxu0 %v77
  %193 = vmatprep.subr.mxu0 0.0
  %194 = vmatpush1.msra.mxu0 %v78
  %195 = vmatprep.subr.mxu0 0.0
  %196 = vmatpush1.msra.mxu0 %v79
  %197 = vmatprep.subr.mxu0 0.0
  %198 = vmatpush1.msra.mxu0 0.0
  %199 = vmatprep.subr.mxu0 0.0
  %200 = vmatpush1.msra.mxu0 0.0
  %201 = vmatprep.subr.mxu0 0.0
  %202 = vmatpush1.msra.mxu0 0.0
  %203 = vmatprep.subr.mxu0 0.0
  %204 = vmatpush1.msra.mxu0 0.0
  %205 = vmatprep.subr.mxu0 0.0
  %206 = vmatpush1.msra.mxu0 0.0
  %207 = vmatprep.subr.mxu0 0.0
  %208 = vmatpush1.msra.mxu0 0.0
  %209 = vmatprep.subr.mxu0 0.0
  %210 = vmatpush1.msra.mxu0 0.0
  %211 = vmatprep.subr.mxu0 0.0
  %212 = vmatpush1.msra.mxu0 0.0
  %213 = vmatprep.subr.mxu0 0.0
  %214 = vmatpush1.msra.mxu0 0.0
  %215 = vmatprep.subr.mxu0 0.0
  %216 = vmatpush1.msra.mxu0 0.0
  %217 = vmatprep.subr.mxu0 0.0
  %218 = vmatpush1.msra.mxu0 0.0
  %219 = vmatprep.subr.mxu0 0.0
  %220 = vmatpush1.msra.mxu0 0.0
  %221 = vmatprep.subr.mxu0 0.0
  %222 = vmatpush1.msra.mxu0 0.0
  %223 = vmatprep.subr.mxu0 0.0
  %224 = vmatpush1.msra.mxu0 0.0
  %225 = vmatprep.mubr.f32.mxu0 %v89
  %226 = vmatmul.mubr.f32.gmra.mrb[0].mxu0 %v28
  %v227 = vpop.f32.mrb[0].mxu0
  %v228 = vadd.f32 %v158, %v227
  %v229 = vpop.f32.mrb[0].mxu0
  %230 = vdwg.mxu0
  %v231 = vmax.f32 %v228, 0.0
  %v232 = vld [vmem:[%s3] sm:$0xff]
  %v233 = vld [vmem:[%s3 + $0x8] sm:$0xff]
  %v234 = vld [vmem:[%s3 + $0x10] sm:$0xff]
  %v235 = vld [vmem:[%s3 + $0x18] sm:$0xff]
  %v236 = vld [vmem:[%s3 + $0x20] sm:$0xff]
  %v237 = vld [vmem:[%s3 + $0x28] sm:$0xff]
  %v238 = vld [vmem:[%s3 + $0x30] sm:$0xff]
  %v239 = vld [vmem:[%s3 + $0x38] sm:$0xff]
  %v240 = vld [vmem:[%s3 + $0x40] sm:$0xff]
  %v241 = vld [vmem:[%s3 + $0x48] sm:$0xff]
  %v242 = vld [vmem:[%s3 + $0x50] sm:$0xff]
  %v243 = vld [vmem:[%s3 + $0x58] sm:$0xff]
  %v244 = vld [vmem:[%s3 + $0x60] sm:$0xff]
  %v245 = vld [vmem:[%s3 + $0x68] sm:$0xff]
  %v246 = vld [vmem:[%s3 + $0x70] sm:$0xff]
  %v247 = vld [vmem:[%s3 + $0x78] sm:$0xff]
  %v248 = vld [vmem:[%s4] sm:$0x1]
  %v250 = vlaneseq
  %v251 = vshrl.u32 %v250, 7
  %v252 = vsub.s32 0, %v251
  %v253 = vrot.slane %v248, %v252
  %255 = vmatprep.subr.mxu0 0.0
  %256 = vmatpush1.msra.mxu0 %v232
  %257 = vmatprep.subr.mxu0 0.0
  %258 = vmatpush1.msra.mxu0 %v233
  %259 = vmatprep.subr.mxu0 0.0
  %260 = vmatpush1.msra.mxu0 %v234
  %261 = vmatprep.subr.mxu0 0.0
  %262 = vmatpush1.msra.mxu0 %v235
  %263 = vmatprep.subr.mxu0 0.0
  %264 = vmatpush1.msra.mxu0 %v236
  %265 = vmatprep.subr.mxu0 0.0
  %266 = vmatpush1.msra.mxu0 %v237
  %267 = vmatprep.subr.mxu0 0.0
  %268 = vmatpush1.msra.mxu0 %v238
  %269 = vmatprep.subr.mxu0 0.0
  %270 = vmatpush1.msra.mxu0 %v239
  %271 = vmatprep.subr.mxu0 0.0
  %272 = vmatpush1.msra.mxu0 %v240
  %273 = vmatprep.subr.mxu0 0.0
  %274 = vmatpush1.msra.mxu0 %v241
  %275 = vmatprep.subr.mxu0 0.0
  %276 = vmatpush1.msra.mxu0 %v242
  %277 = vmatprep.subr.mxu0 0.0
  %278 = vmatpush1.msra.mxu0 %v243
  %279 = vmatprep.subr.mxu0 0.0
  %280 = vmatpush1.msra.mxu0 %v244
  %281 = vmatprep.subr.mxu0 0.0
  %282 = vmatpush1.msra.mxu0 %v245
  %283 = vmatprep.subr.mxu0 0.0
  %284 = vmatpush1.msra.mxu0 %v246
  %285 = vmatprep.subr.mxu0 0.0
  %286 = vmatpush1.msra.mxu0 %v247
  %287 = vmatprep.subr.mxu0 0.0
  %288 = vmatpush1.msra.mxu0 0.0
  %289 = vmatprep.subr.mxu0 0.0
  %290 = vmatpush1.msra.mxu0 0.0
  %291 = vmatprep.subr.mxu0 0.0
  %292 = vmatpush1.msra.mxu0 0.0
  %293 = vmatprep.subr.mxu0 0.0
  %294 = vmatpush1.msra.mxu0 0.0
  %295 = vmatprep.subr.mxu0 0.0
  %296 = vmatpush1.msra.mxu0 0.0
  %297 = vmatprep.subr.mxu0 0.0
  %298 = vmatpush1.msra.mxu0 0.0
  %299 = vmatprep.subr.mxu0 0.0
  %300 = vmatpush1.msra.mxu0 0.0
  %301 = vmatprep.subr.mxu0 0.0
  %302 = vmatpush1.msra.mxu0 0.0
  %303 = vmatprep.subr.mxu0 0.0
  %304 = vmatpush1.msra.mxu0 0.0
  %305 = vmatprep.subr.mxu0 0.0
  %306 = vmatpush1.msra.mxu0 0.0
  %307 = vmatprep.subr.mxu0 0.0
  %308 = vmatpush1.msra.mxu0 0.0
  %309 = vmatprep.subr.mxu0 0.0
  %310 = vmatpush1.msra.mxu0 0.0
  %311 = vmatprep.subr.mxu0 0.0
  %312 = vmatpush1.msra.mxu0 0.0
  %313 = vmatprep.subr.mxu0 0.0
  %314 = vmatpush1.msra.mxu0 0.0
  %315 = vmatprep.subr.mxu0 0.0
  %316 = vmatpush1.msra.mxu0 0.0
  %317 = vmatprep.subr.mxu0 0.0
  %318 = vmatpush1.msra.mxu0 0.0
  %319 = vmatprep.mubr.f32.mxu0 0.0
  %320 = vmatmul.mubr.f32.gmra.mrb[0].mxu0 %v231
  %v321 = vpop.f32.mrb[0].mxu0
  %v322 = vadd.f32 %v253, %v321
  %v323 = vpop.f32.mrb[0].mxu0
  %324 = vdwg.mxu0
  %v325 = vmax.f32 %v322, 0.0
  %v326 = vld [vmem:[%s5] sm:$0xff]
  %v327 = vld [vmem:[%s5 + $0x8] sm:$0xff]
  %v328 = vld [vmem:[%s5 + $0x10] sm:$0xff]
  %v329 = vld [vmem:[%s5 + $0x18] sm:$0xff]
  %v330 = vld [vmem:[%s5 + $0x20] sm:$0xff]
  %v331 = vld [vmem:[%s5 + $0x28] sm:$0xff]
  %v332 = vld [vmem:[%s5 + $0x30] sm:$0xff]
  %v333 = vld [vmem:[%s5 + $0x38] sm:$0xff]
  %v334 = vld [vmem:[%s5 + $0x40] sm:$0xff]
  %v335 = vld [vmem:[%s5 + $0x48] sm:$0xff]
  %v336 = vld [vmem:[%s5 + $0x50] sm:$0xff]
  %v337 = vld [vmem:[%s5 + $0x58] sm:$0xff]
  %v338 = vld [vmem:[%s5 + $0x60] sm:$0xff]
  %v339 = vld [vmem:[%s5 + $0x68] sm:$0xff]
  %v340 = vld [vmem:[%s5 + $0x70] sm:$0xff]
  %v341 = vld [vmem:[%s5 + $0x78] sm:$0xff]
  %v342 = vld [vmem:[%s6] sm:$0x1]
  %v344 = vlaneseq
  %v345 = vshrl.u32 %v344, 7
  %v346 = vsub.s32 0, %v345
  %v347 = vrot.slane %v342, %v346
  %349 = vmatprep.subr.mxu0 0.0
  %350 = vmatpush1.msra.mxu0 %v326
  %351 = vmatprep.subr.mxu0 0.0
  %352 = vmatpush1.msra.mxu0 %v327
  %353 = vmatprep.subr.mxu0 0.0
  %354 = vmatpush1.msra.mxu0 %v328
  %355 = vmatprep.subr.mxu0 0.0
  %356 = vmatpush1.msra.mxu0 %v329
  %357 = vmatprep.subr.mxu0 0.0
  %358 = vmatpush1.msra.mxu0 %v330
  %359 = vmatprep.subr.mxu0 0.0
  %360 = vmatpush1.msra.mxu0 %v331
  %361 = vmatprep.subr.mxu0 0.0
  %362 = vmatpush1.msra.mxu0 %v332
  %363 = vmatprep.subr.mxu0 0.0
  %364 = vmatpush1.msra.mxu0 %v333
  %365 = vmatprep.subr.mxu0 0.0
  %366 = vmatpush1.msra.mxu0 %v334
  %367 = vmatprep.subr.mxu0 0.0
  %368 = vmatpush1.msra.mxu0 %v335
  %369 = vmatprep.subr.mxu0 0.0
  %370 = vmatpush1.msra.mxu0 %v336
  %371 = vmatprep.subr.mxu0 0.0
  %372 = vmatpush1.msra.mxu0 %v337
  %373 = vmatprep.subr.mxu0 0.0
  %374 = vmatpush1.msra.mxu0 %v338
  %375 = vmatprep.subr.mxu0 0.0
  %376 = vmatpush1.msra.mxu0 %v339
  %377 = vmatprep.subr.mxu0 0.0
  %378 = vmatpush1.msra.mxu0 %v340
  %379 = vmatprep.subr.mxu0 0.0
  %380 = vmatpush1.msra.mxu0 %v341
  %381 = vmatprep.subr.mxu0 0.0
  %382 = vmatpush1.msra.mxu0 0.0
  %383 = vmatprep.subr.mxu0 0.0
  %384 = vmatpush1.msra.mxu0 0.0
  %385 = vmatprep.subr.mxu0 0.0
  %386 = vmatpush1.msra.mxu0 0.0
  %387 = vmatprep.subr.mxu0 0.0
  %388 = vmatpush1.msra.mxu0 0.0
  %389 = vmatprep.subr.mxu0 0.0
  %390 = vmatpush1.msra.mxu0 0.0
  %391 = vmatprep.subr.mxu0 0.0
  %392 = vmatpush1.msra.mxu0 0.0
  %393 = vmatprep.subr.mxu0 0.0
  %394 = vmatpush1.msra.mxu0 0.0
  %395 = vmatprep.subr.mxu0 0.0
  %396 = vmatpush1.msra.mxu0 0.0
  %397 = vmatprep.subr.mxu0 0.0
  %398 = vmatpush1.msra.mxu0 0.0
  %399 = vmatprep.subr.mxu0 0.0
  %400 = vmatpush1.msra.mxu0 0.0
  %401 = vmatprep.subr.mxu0 0.0
  %402 = vmatpush1.msra.mxu0 0.0
  %403 = vmatprep.subr.mxu0 0.0
  %404 = vmatpush1.msra.mxu0 0.0
  %405 = vmatprep.subr.mxu0 0.0
  %406 = vmatpush1.msra.mxu0 0.0
  %407 = vmatprep.subr.mxu0 0.0
  %408 = vmatpush1.msra.mxu0 0.0
  %409 = vmatprep.subr.mxu0 0.0
  %410 = vmatpush1.msra.mxu0 0.0
  %411 = vmatprep.subr.mxu0 0.0
  %412 = vmatpush1.msra.mxu0 0.0
  %413 = vmatprep.mubr.f32.mxu0 0.0
  %414 = vmatmul.mubr.f32.gmra.mrb[0].mxu0 %v325
  %v415 = vpop.f32.mrb[0].mxu0
  %v416 = vadd.f32 %v347, %v415
  %v417 = vpop.f32.mrb[0].mxu0
  %418 = vdwg.mxu0
  %419 = vst [vmem:[%s7] sm:$0xff] %v416
  // Predicated region
  $region30: #{net_forward.5} parent=0 // pred_check
    _
  $region31: #{net_forward.5} parent=0 // pred_check_branch
    %421 = sbr.rel (0) target = $region33
  $region32: #{net_forward.5} parent=0 // pred_region
    _
  $region33: #{net_forward.5} parent=0 // pred_fallthru
    _
  // Predicated region
  $region34: #{net_forward.5} parent=0 // pred_check
    _
  $region35: #{net_forward.5} parent=0 // pred_check_branch
    %423 = sbr.rel (0) target = $region37
  $region36: #{net_forward.5} parent=0 // pred_region
    _
  $region37: #{net_forward.5} parent=0 // pred_fallthru
    _

</llo_original>
